<compile_context>
chip_gen: v7x
topology: tpu7x:2x2x1
jax: 0.10.0
libtpu: 0.0.40
codegen_flags: <defaults>
</compile_context>

<pallas_src>
import functools

import numpy as np
import jax
import jax.numpy as jnp
from jax.experimental import pallas as pl
from jax.experimental.pallas import tpu as pltpu


_F32 = 4
_MIN_GRID_BLOCKS = 4    # >= 2 grid steps per TensorCore on v7x (2 TCs/chip);
                        # also guarantees DMA/compute overlap on v5e/v6e.


# ----------------------------------------------------------------------------
# Generation-aware VMEM budgeting
# ----------------------------------------------------------------------------
@functools.lru_cache(maxsize=1)
def _tpu_vmem_capacity_bytes():
    """Per-core VMEM capacity: v5e/v6e 128 MiB, v7x 64 MiB."""
    try:
        cap = int(getattr(pltpu.get_tpu_info(), "vmem_capacity_bytes", 0) or 0)
        if cap > 0:
            return cap
    except Exception:
        pass
    try:
        kind = jax.devices()[0].device_kind.lower()
        if ("v5" in kind) or ("v6" in kind):
            return 128 << 20
    except Exception:
        pass
    return 64 << 20          # conservative fallback (v7x per-TC VMEM)


def _vmem_estimate_bytes(tn, Hc, Wc, esize, const_bufs):
    blk = tn * Hc * Wc
    # packed DFT matrices (3 planes each) + transfer fn, times buffer count
    const = const_bufs * esize * (6 * Hc * Hc + 6 * Wc * Wc + 2 * Hc * Wc)
    x_in = 2 * esize * 2 * blk       # input slab (compute dtype), double-buffered
    y_out = 2 * _F32 * 2 * blk       # f32 output/working slab, double-buffered
    live = 6 * _F32 * blk            # t1/t2/t3 + Gauss data-sums in the big matmuls
    return const + x_in + y_out + live


def _choose_tn(n_planes, Hc, Wc, esize, budget, const_bufs):
    """Planes per grid step: as large as the VMEM budget allows, but keeping
    at least _MIN_GRID_BLOCKS grid steps whenever the plane count allows it."""
    if n_planes >= _MIN_GRID_BLOCKS:
        cap = max(1, n_planes // _MIN_GRID_BLOCKS)
    else:
        cap = n_planes
    tn = cap
    while tn > 1 and _vmem_estimate_bytes(tn, Hc, Wc, esize, const_bufs) > budget:
        tn -= 1
    return tn


# ----------------------------------------------------------------------------
# Pallas kernel: 2D DFT -> complex multiply by transfer fn -> 2D inverse DFT
# ----------------------------------------------------------------------------
def _prop_kernel(x_ref, fh_ref, fw_ref, tf_ref, ifh_ref, ifw_ref, y_ref,
                 *, precision=None):
    """x_ref : (2, TN*Hc, Wc) compute-dtype field planes (real stack, imag stack).
    y_ref : (2, TN*Hc, Wc) f32 output; doubles as the in-kernel working slab.
    fh_ref/ifh_ref: (3, Hc, Hc), fw_ref/ifw_ref: (3, Wc, Wc) packed DFT matrices
    [real, imag, real+imag] (Gauss-trick sum precomputed on the host).
    tf_ref: (2, Hc, Wc) transfer function [real, imag]."""
    Hc = fh_ref.shape[1]
    blk = x_ref.shape[1]
    tn = blk // Hc
    cd = fh_ref.dtype                     # MXU operand dtype (bf16 by default)

    def dot(a, b):
        if precision is None:
            return jnp.dot(a, b, preferred_element_type=jnp.float32)
        return jnp.dot(a, b, preferred_element_type=jnp.float32,
                       precision=precision)

    def cmm_dm(ar, ai, mr, mi, ms):
        # (data @ matrix) complex matmul, Gauss 3-mult (matrix sum precomputed).
        arc, aic = ar.astype(cd), ai.astype(cd)
        t1 = dot(arc, mr)
        t2 = dot(aic, mi)
        t3 = dot(arc + aic, ms)
        return t1 - t2, t3 - t1 - t2

    def cmm_md(mr, mi, ms, br, bi):
        # (matrix @ data) complex matmul, Gauss 3-mult.
        brc, bic = br.astype(cd), bi.astype(cd)
        t1 = dot(mr, brc)
        t2 = dot(mi, bic)
        t3 = dot(ms, brc + bic)
        return t1 - t2, t3 - t1 - t2

    # constant loads hoisted once per grid step (single vld each)
    fwr, fwi, fws = fw_ref[0], fw_ref[1], fw_ref[2]
    fhr, fhi, fhs = fh_ref[0], fh_ref[1], fh_ref[2]
    ihr, ihi, ihs = ifh_ref[0], ifh_ref[1], ifh_ref[2]
    iwr, iwi, iws = ifw_ref[0], ifw_ref[1], ifw_ref[2]
    tfr = tf_ref[0].astype(jnp.float32)
    tfi = tf_ref[1].astype(jnp.float32)

    # Forward DFT along W for all TN planes: one big MXU matmul.  Results land
    # directly in the f32 output VMEM buffer (working slab) -- no scratch.
    wr, wi = cmm_dm(x_ref[0], x_ref[1], fwr, fwi, fws)
    y_ref[0] = wr
    y_ref[1] = wi

    # Per plane: forward DFT along H -> transfer-fn multiply -> inverse DFT
    # along H, updating the working slab in place.
    # TODO(synk): for Hc < ~128 these (Hc,Hc)@(Hc,Wc) matmuls underfill the
    # 256x256 MXU on v6e/v7x; a batched H-pass (transpose so M = TN*Wc) would
    # fill it at the cost of two per-plane transposes.
    def plane_body(n, carry):
        row = pl.multiple_of(n * Hc, Hc)
        sl = pl.ds(row, Hc)
        br, bi = cmm_md(fhr, fhi, fhs, y_ref[0, sl, :], y_ref[1, sl, :])
        cr = br * tfr - bi * tfi
        ci = br * tfi + bi * tfr
        dr, di = cmm_md(ihr, ihi, ihs, cr, ci)
        y_ref[0, sl, :] = dr
        y_ref[1, sl, :] = di
        return carry

    # fori_loop (not a static Python unroll) bounds live ranges once TN grows.
    jax.lax.fori_loop(0, tn, plane_body, 0, unroll=(tn <= 4))

    # Inverse DFT along W for all TN planes: one big MXU matmul.
    er, ei = cmm_dm(y_ref[0], y_ref[1], iwr, iwi, iws)
    y_ref[0] = er
    y_ref[1] = ei


# ----------------------------------------------------------------------------
# pallas_call wrapper
# ----------------------------------------------------------------------------
def _run_pallas(x, f_h, f_w, tf, if_h, if_w, tn, precision, single_buffer_consts):
    """x: (2, Np*Hc, Wc) packed planes (compute dtype). Returns f32 same shape."""
    _, nhc, Wc = x.shape
    Hc = f_h.shape[1]
    blk = tn * Hc
    n_blocks = nhc // blk
    esize = x.dtype.itemsize

    if single_buffer_consts:
        # Constant operands are never re-fetched (constant index_map), so one
        # pipeline buffer is enough -- halves their VMEM footprint.
        def const_spec(shape):
            return pl.BlockSpec(shape, lambda g: (0, 0, 0),
                                pipeline_mode=pl.Buffered(1))
        const_bufs = 1
    else:
        def const_spec(shape):
            return pl.BlockSpec(shape, lambda g: (0, 0, 0))
        const_bufs = 2

    data_spec = pl.BlockSpec((2, blk, Wc), lambda g: (0, g, 0))

    cap = _tpu_vmem_capacity_bytes()
    est = _vmem_estimate_bytes(tn, Hc, Wc, esize, const_bufs)
    vmem_limit = int(min(max(int(est * 1.2), 32 << 20), int(0.9 * cap)))

    return pl.pallas_call(
        functools.partial(_prop_kernel, precision=precision),
        out_shape=jax.ShapeDtypeStruct((2, nhc, Wc), jnp.float32),
        grid_spec=pltpu.PrefetchScalarGridSpec(
            num_scalar_prefetch=0,
            grid=(n_blocks,),
            in_specs=[data_spec,
                      const_spec((3, Hc, Hc)),   # forward DFT along H
                      const_spec((3, Wc, Wc)),   # forward DFT along W
                      const_spec((2, Hc, Wc)),   # transfer function
                      const_spec((3, Hc, Hc)),   # inverse DFT along H
                      const_spec((3, Wc, Wc))],  # inverse DFT along W
            out_specs=pl.BlockSpec((2, blk, Wc), lambda g: (0, g, 0))),
        compiler_params=pltpu.CompilerParams(
            dimension_semantics=("parallel",),   # shard plane blocks across TCs
            vmem_limit_bytes=vmem_limit),
    )(x, f_h, f_w, tf, if_h, if_w)


# ----------------------------------------------------------------------------
# Glue: pad/crop, packing, DFT matrices, transfer function
# ----------------------------------------------------------------------------
def _round_up(x, m):
    return ((x + m - 1) // m) * m


def _pad_smaller_dims(x, target_hw, padval=0.0):
    H, W = x.shape[-2:]
    Ht, Wt = target_hw
    ph, pw = max(Ht - H, 0), max(Wt - W, 0)
    pads = [(0, 0)] * (x.ndim - 2) + [(ph // 2, ph - ph // 2),
                                      (pw // 2, pw - pw // 2)]
    return jnp.pad(x, pads, constant_values=padval)


def _crop_larger_dims(x, target_hw):
    H, W = x.shape[-2:]
    Ht, Wt = target_hw
    ch, cw = max(H - Ht, 0), max(W - Wt, 0)
    return x[..., ch // 2:ch // 2 + min(Ht, H), cw // 2:cw // 2 + min(Wt, W)]


def _pack_planes(xr, xi, tn, compute_dtype):
    """Stack real/imag plane stacks into the (2, Np*Hc, Wc) kernel layout,
    zero-padding the plane count up to a multiple of tn (ragged N support)."""
    n, Hc, Wc = xr.shape
    n_pad = (-n) % tn
    if n_pad:
        pads = [(0, n_pad), (0, 0), (0, 0)]
        xr = jnp.pad(xr, pads)
        xi = jnp.pad(xi, pads)
    n_padded = n + n_pad
    x = jnp.stack([xr, xi], axis=0).reshape(2, n_padded * Hc, Wc)
    return x.astype(compute_dtype), n_padded


def _dft_matrices_packed(n, dtype):
    """Unshifted DFT / inverse DFT matrices packed as [real, imag, real+imag]
    (Gauss-trick operand sum precomputed on the host)."""
    k = np.arange(n)
    F = np.exp(-2j * np.pi * np.outer(k, k) / n)     # forward DFT (symmetric)
    IF = np.conj(F) / n                               # inverse DFT, 1/n folded in

    def pack(M):
        stk = np.stack([M.real, M.imag, M.real + M.imag]).astype(np.float32)
        return jnp.asarray(stk, dtype=dtype)

    return pack(F), pack(IF)


def _rel_l2(a, b):
    return float(jnp.linalg.norm((a - b).ravel()) /
                 (jnp.linalg.norm(b.ravel()) + 1e-12))


class NearFieldTransferFnPropagation:
    """JAX/Pallas port of NearFieldTransferFnPropagationBase (forward/backward),
    concretized with the angular-spectrum (near-field) transfer function."""

    def __init__(self, propagation_distance, slm_resolution, slm_pixel_pitch,
                 image_resolution=None, wavelength=5.32e-07,
                 propagation_parameters=None):
        self.slm_resolution = np.array(slm_resolution)
        self.slm_pixel_pitch = np.array(slm_pixel_pitch)
        self.propagation_distance = float(propagation_distance)
        self.wavelength = float(wavelength)
        self.image_resolution = (self.slm_resolution if image_resolution is None
                                 else np.array(image_resolution))
        self.image_pixel_pitch = self.slm_pixel_pitch
        self.slm_size = self.slm_pixel_pitch * self.slm_resolution
        self.image_size = self.image_pixel_pitch * self.image_resolution
        params = dict(propagation_parameters or {})
        self.padding_type = params.pop('padding_type', 'zero')
        self.normalize_output = params.pop('normalize_output', False)
        # MXU operand dtype: bf16 halves constant/slab VMEM and DMA bytes with
        # no extra error vs DEFAULT-precision f32 matmuls (the MXU rounds
        # operands to bf16 anyway); accumulation stays f32.  'float32' switches
        # to f32 operands + Precision.HIGHEST for bit-accurate DFTs.
        compute_dtype = str(params.pop('compute_dtype', 'bfloat16')).lower()
        if compute_dtype in ('float32', 'f32', 'fp32'):
            self.compute_dtype = jnp.float32
            self.matmul_precision = jax.lax.Precision.HIGHEST
        else:
            self.compute_dtype = jnp.bfloat16
            self.matmul_precision = None
        # >=2x zero-pad for linear (non-circular) convolution, rounded up to
        # (8, 128) multiples for vreg alignment and lane-dense stores.
        conv = 2 * np.maximum(self.slm_resolution, self.image_resolution)
        self.conv_resolution = np.array([_round_up(int(conv[0]), 8),
                                         _round_up(int(conv[1]), 128)])
        self._compute_transfer_fn()
        self._compute_dft_matrices()

    # -- precompute constants --------------------------------------------
    def _compute_transfer_fn(self):
        # TODO(synk): compute_transfer_fn is abstract in the torch base; this
        # concretizes it as the angular-spectrum transfer function on the
        # unshifted (fftfreq-ordered) grid, matching the unshifted DFTs below.
        Hc, Wc = int(self.conv_resolution[0]), int(self.conv_resolution[1])
        fy = np.fft.fftfreq(Hc, d=self.slm_pixel_pitch[0])
        fx = np.fft.fftfreq(Wc, d=self.slm_pixel_pitch[1])
        FY, FX = np.meshgrid(fy, fx, indexing='ij')
        fz2 = (1.0 / self.wavelength) ** 2 - FX ** 2 - FY ** 2
        prop = fz2 > 0
        fz = np.sqrt(np.maximum(fz2, 0.0))
        phase = 2.0 * np.pi * self.propagation_distance * fz
        Hf = np.where(prop, np.exp(1j * phase), 0.0)
        Hb = np.where(prop, np.exp(-1j * phase), 0.0)

        def pack(Hm):
            stk = np.stack([Hm.real, Hm.imag]).astype(np.float32)
            return jnp.asarray(stk, dtype=self.compute_dtype)

        self.forward_transfer_fn = pack(Hf)
        self.backward_transfer_fn = pack(Hb)

    def _compute_dft_matrices(self):
        Hc, Wc = int(self.conv_resolution[0]), int(self.conv_resolution[1])
        self.f_h, self.if_h = _dft_matrices_packed(Hc, self.compute_dtype)
        self.f_w, self.if_w = _dft_matrices_packed(Wc, self.compute_dtype)

    # -- helpers -----------------------------------------------------------
    @staticmethod
    def _magnitude_sum(field):
        # field: (..., H, W, 2) -> mean of sqrt(re^2 + im^2)
        return jnp.mean(jnp.sqrt(jnp.sum(field ** 2, axis=-1)))

    def _pad_value(self, input_field):
        if self.padding_type == 'median':
            # TODO(synk): torch base takes torch.median (lower middle element)
            # over the whole batch; jnp.median averages the two middles.
            return jnp.median(jnp.sqrt(jnp.sum(input_field ** 2, axis=-1)))
        return 0.0

    # -- propagation -------------------------------------------------------
    def _propagate(self, input_field, transfer_fn, out_res):
        B, C, H, W, _ = input_field.shape
        Hc, Wc = int(self.conv_resolution[0]), int(self.conv_resolution[1])
        Ho, Wo = int(out_res[0]), int(out_res[1])
        N = B * C

        if self.normalize_output:
            input_mag = self._magnitude_sum(input_field)

        padval = self._pad_value(input_field)
        xr = _pad_smaller_dims(input_field[..., 0].reshape(N, H, W), (Hc, Wc), padval)
        xi = _pad_smaller_dims(input_field[..., 1].reshape(N, H, W), (Hc, Wc), padval)

        budget = int(0.85 * _tpu_vmem_capacity_bytes())
        esize = np.dtype(self.compute_dtype).itemsize

        def run(const_bufs, single_buffer):
            tn = _choose_tn(N, Hc, Wc, esize, budget, const_bufs)
            x, n_padded = _pack_planes(xr, xi, tn, self.compute_dtype)
            y = _run_pallas(x, self.f_h, self.f_w, transfer_fn,
                            self.if_h, self.if_w, tn,
                            self.matmul_precision, single_buffer)
            return y.reshape(2, n_padded, Hc, Wc)[:, :N]

        try:
            y = run(1, True)          # single-buffered constants (pl.Buffered(1))
        except Exception:
            # pipeline_mode=pl.Buffered(1) not supported on this jax/libtpu:
            # fall back to default double-buffered constant operands.
            y = run(2, False)

        yr = _crop_larger_dims(y[0], (Ho, Wo)).reshape(B, C, Ho, Wo)
        yi = _crop_larger_dims(y[1], (Ho, Wo)).reshape(B, C, Ho, Wo)
        out = jnp.stack([yr, yi], axis=-1)

        if self.normalize_output:
            out = out * (input_mag / self._magnitude_sum(out))
        return out

    def forward(self, input_field):
        return self._propagate(input_field, self.forward_transfer_fn,
                               self.image_resolution)

    def backward(self, input_field):
        return self._propagate(input_field, self.backward_transfer_fn,
                               self.slm_resolution)

    # pure-JAX reference (jnp.fft) for validation
    def forward_ref(self, input_field):
        Hc, Wc = int(self.conv_resolution[0]), int(self.conv_resolution[1])
        Hi, Wi = int(self.image_resolution[0]), int(self.image_resolution[1])
        if self.normalize_output:
            input_mag = self._magnitude_sum(input_field)
        padval = self._pad_value(input_field)
        xr = _pad_smaller_dims(input_field[..., 0], (Hc, Wc), padval)
        xi = _pad_smaller_dims(input_field[..., 1], (Hc, Wc), padval)
        x = xr + 1j * xi
        tf = (self.forward_transfer_fn[0].astype(jnp.float32) +
              1j * self.forward_transfer_fn[1].astype(jnp.float32))
        y = jnp.fft.ifft2(jnp.fft.fft2(x) * tf)
        y = _crop_larger_dims(y, (Hi, Wi))
        out = jnp.stack([jnp.real(y), jnp.imag(y)], axis=-1).astype(jnp.float32)
        if self.normalize_output:
            out = out * (input_mag / self._magnitude_sum(out))
        return out


# ----------------------------------------------------------------------------
if __name__ == "__main__":
    key = jax.random.PRNGKey(0)
    B, C, H, W = 2, 4, 16, 16
    input_field = jax.random.normal(key, (B, C, H, W, 2), dtype=jnp.float32)

    prop = NearFieldTransferFnPropagation(
        propagation_distance=0.05,
        slm_resolution=(H, W),
        slm_pixel_pitch=(6.4e-6, 6.4e-6),
        wavelength=5.32e-07,
        propagation_parameters={'padding_type': 'zero',
                                'normalize_output': False},
    )

    out = jax.block_until_ready(prop.forward(input_field))
    assert out.shape == (B, C, H, W, 2)
    assert bool(jnp.all(jnp.isfinite(out)))

    # validate against a jnp.fft reference; expected discrepancy is bf16-MXU
    # roundoff (~2% relative L2 through 4 DFT matmul stages + Gauss trick).
    ref = jax.block_until_ready(prop.forward_ref(input_field))
    rel = _rel_l2(out, ref)
    assert rel < 0.08, f"relative L2 error too large: {rel}"

    # exercise the backward (conjugate transfer fn) path
    back = jax.block_until_ready(prop.backward(input_field))
    assert back.shape == (B, C, H, W, 2)
    assert bool(jnp.all(jnp.isfinite(back)))

    # exercise the normalize_output path
    prop.normalize_output = True
    out_n = jax.block_until_ready(prop.forward(input_field))
    ref_n = jax.block_until_ready(prop.forward_ref(input_field))
    rel_n = _rel_l2(out_n, ref_n)
    assert rel_n < 0.08, f"normalized relative L2 error too large: {rel_n}"

    print("KERNEL_OK")
</pallas_src>

<mosaic_0001>
module attributes {stable_mosaic.version = 11 : i64} {
  func.func @_prop_kernel(%arg0: i32, %arg1: memref<2x64x128xbf16, #tpu.memory_space<vmem>>, %arg2: memref<3x32x32xbf16, #tpu.memory_space<vmem>>, %arg3: memref<3x128x128xbf16, #tpu.memory_space<vmem>>, %arg4: memref<2x32x128xbf16, #tpu.memory_space<vmem>>, %arg5: memref<3x32x32xbf16, #tpu.memory_space<vmem>>, %arg6: memref<3x128x128xbf16, #tpu.memory_space<vmem>>, %arg7: memref<2x64x128xf32, #tpu.memory_space<vmem>>) attributes {dimension_semantics = [#tpu.dimension_semantics<parallel>], iteration_bounds = array<i64: 4>, scalar_prefetch = 0 : i64, scratch_operands = 0 : i64, tpu.core_type = #tpu.core_type<tc>, window_params = [{transform_indices = @transform_0, window_bounds = array<i64: 2, 64, 128>}, {pipeline_mode = #tpu.pipeline_mode<synchronous>, transform_indices = @transform_1, window_bounds = array<i64: 3, 32, 32>}, {pipeline_mode = #tpu.pipeline_mode<synchronous>, transform_indices = @transform_2, window_bounds = array<i64: 3, 128, 128>}, {pipeline_mode = #tpu.pipeline_mode<synchronous>, transform_indices = @transform_3, window_bounds = array<i64: 2, 32, 128>}, {pipeline_mode = #tpu.pipeline_mode<synchronous>, transform_indices = @transform_4, window_bounds = array<i64: 3, 32, 32>}, {pipeline_mode = #tpu.pipeline_mode<synchronous>, transform_indices = @transform_5, window_bounds = array<i64: 3, 128, 128>}, {transform_indices = @transform_6, window_bounds = array<i64: 2, 64, 128>}]} {
    %c0 = arith.constant 0 : index
    %c0_0 = arith.constant 0 : index
    %c0_1 = arith.constant 0 : index
    %0 = vector.load %arg3[%c0, %c0_0, %c0_1] : memref<3x128x128xbf16, #tpu.memory_space<vmem>>, vector<1x128x128xbf16>
    %1 = vector.shape_cast %0 : vector<1x128x128xbf16> to vector<128x128xbf16>
    %c1 = arith.constant 1 : index
    %c0_2 = arith.constant 0 : index
    %c0_3 = arith.constant 0 : index
    %2 = vector.load %arg3[%c1, %c0_2, %c0_3] : memref<3x128x128xbf16, #tpu.memory_space<vmem>>, vector<1x128x128xbf16>
    %3 = vector.shape_cast %2 : vector<1x128x128xbf16> to vector<128x128xbf16>
    %c2 = arith.constant 2 : index
    %c0_4 = arith.constant 0 : index
    %c0_5 = arith.constant 0 : index
    %4 = vector.load %arg3[%c2, %c0_4, %c0_5] : memref<3x128x128xbf16, #tpu.memory_space<vmem>>, vector<1x128x128xbf16>
    %5 = vector.shape_cast %4 : vector<1x128x128xbf16> to vector<128x128xbf16>
    %c0_6 = arith.constant 0 : index
    %c0_7 = arith.constant 0 : index
    %c0_8 = arith.constant 0 : index
    %6 = vector.load %arg2[%c0_6, %c0_7, %c0_8] : memref<3x32x32xbf16, #tpu.memory_space<vmem>>, vector<1x32x32xbf16>
    %7 = vector.shape_cast %6 : vector<1x32x32xbf16> to vector<32x32xbf16>
    %c1_9 = arith.constant 1 : index
    %c0_10 = arith.constant 0 : index
    %c0_11 = arith.constant 0 : index
    %8 = vector.load %arg2[%c1_9, %c0_10, %c0_11] : memref<3x32x32xbf16, #tpu.memory_space<vmem>>, vector<1x32x32xbf16>
    %9 = vector.shape_cast %8 : vector<1x32x32xbf16> to vector<32x32xbf16>
    %c2_12 = arith.constant 2 : index
    %c0_13 = arith.constant 0 : index
    %c0_14 = arith.constant 0 : index
    %10 = vector.load %arg2[%c2_12, %c0_13, %c0_14] : memref<3x32x32xbf16, #tpu.memory_space<vmem>>, vector<1x32x32xbf16>
    %11 = vector.shape_cast %10 : vector<1x32x32xbf16> to vector<32x32xbf16>
    %c0_15 = arith.constant 0 : index
    %c0_16 = arith.constant 0 : index
    %c0_17 = arith.constant 0 : index
    %12 = vector.load %arg5[%c0_15, %c0_16, %c0_17] : memref<3x32x32xbf16, #tpu.memory_space<vmem>>, vector<1x32x32xbf16>
    %13 = vector.shape_cast %12 : vector<1x32x32xbf16> to vector<32x32xbf16>
    %c1_18 = arith.constant 1 : index
    %c0_19 = arith.constant 0 : index
    %c0_20 = arith.constant 0 : index
    %14 = vector.load %arg5[%c1_18, %c0_19, %c0_20] : memref<3x32x32xbf16, #tpu.memory_space<vmem>>, vector<1x32x32xbf16>
    %15 = vector.shape_cast %14 : vector<1x32x32xbf16> to vector<32x32xbf16>
    %c2_21 = arith.constant 2 : index
    %c0_22 = arith.constant 0 : index
    %c0_23 = arith.constant 0 : index
    %16 = vector.load %arg5[%c2_21, %c0_22, %c0_23] : memref<3x32x32xbf16, #tpu.memory_space<vmem>>, vector<1x32x32xbf16>
    %17 = vector.shape_cast %16 : vector<1x32x32xbf16> to vector<32x32xbf16>
    %c0_24 = arith.constant 0 : index
    %c0_25 = arith.constant 0 : index
    %c0_26 = arith.constant 0 : index
    %18 = vector.load %arg6[%c0_24, %c0_25, %c0_26] : memref<3x128x128xbf16, #tpu.memory_space<vmem>>, vector<1x128x128xbf16>
    %19 = vector.shape_cast %18 : vector<1x128x128xbf16> to vector<128x128xbf16>
    %c1_27 = arith.constant 1 : index
    %c0_28 = arith.constant 0 : index
    %c0_29 = arith.constant 0 : index
    %20 = vector.load %arg6[%c1_27, %c0_28, %c0_29] : memref<3x128x128xbf16, #tpu.memory_space<vmem>>, vector<1x128x128xbf16>
    %21 = vector.shape_cast %20 : vector<1x128x128xbf16> to vector<128x128xbf16>
    %c2_30 = arith.constant 2 : index
    %c0_31 = arith.constant 0 : index
    %c0_32 = arith.constant 0 : index
    %22 = vector.load %arg6[%c2_30, %c0_31, %c0_32] : memref<3x128x128xbf16, #tpu.memory_space<vmem>>, vector<1x128x128xbf16>
    %23 = vector.shape_cast %22 : vector<1x128x128xbf16> to vector<128x128xbf16>
    %c0_33 = arith.constant 0 : index
    %c0_34 = arith.constant 0 : index
    %c0_35 = arith.constant 0 : index
    %24 = vector.load %arg4[%c0_33, %c0_34, %c0_35] : memref<2x32x128xbf16, #tpu.memory_space<vmem>>, vector<1x32x128xbf16>
    %25 = vector.shape_cast %24 : vector<1x32x128xbf16> to vector<32x128xbf16>
    %26 = arith.extf %25 : vector<32x128xbf16> to vector<32x128xf32>
    %c1_36 = arith.constant 1 : index
    %c0_37 = arith.constant 0 : index
    %c0_38 = arith.constant 0 : index
    %27 = vector.load %arg4[%c1_36, %c0_37, %c0_38] : memref<2x32x128xbf16, #tpu.memory_space<vmem>>, vector<1x32x128xbf16>
    %28 = vector.shape_cast %27 : vector<1x32x128xbf16> to vector<32x128xbf16>
    %29 = arith.extf %28 : vector<32x128xbf16> to vector<32x128xf32>
    %c0_39 = arith.constant 0 : index
    %c0_40 = arith.constant 0 : index
    %c0_41 = arith.constant 0 : index
    %30 = vector.load %arg1[%c0_39, %c0_40, %c0_41] : memref<2x64x128xbf16, #tpu.memory_space<vmem>>, vector<1x64x128xbf16>
    %31 = vector.shape_cast %30 : vector<1x64x128xbf16> to vector<64x128xbf16>
    %c1_42 = arith.constant 1 : index
    %c0_43 = arith.constant 0 : index
    %c0_44 = arith.constant 0 : index
    %32 = vector.load %arg1[%c1_42, %c0_43, %c0_44] : memref<2x64x128xbf16, #tpu.memory_space<vmem>>, vector<1x64x128xbf16>
    %33 = vector.shape_cast %32 : vector<1x64x128xbf16> to vector<64x128xbf16>
    %cst = arith.constant dense<0.000000e+00> : vector<64x128xf32>
    %34 = tpu.matmul %31, %1, %cst {dimension_numbers = #tpu.dot_dimension_numbers<[1], [0], [0], [1], [0, 0, 1, 1], [], []>} : vector<64x128xbf16>, vector<128x128xbf16>, vector<64x128xf32> -> vector<64x128xf32>
    %cst_45 = arith.constant dense<0.000000e+00> : vector<64x128xf32>
    %35 = tpu.matmul %33, %3, %cst_45 {dimension_numbers = #tpu.dot_dimension_numbers<[1], [0], [0], [1], [0, 0, 1, 1], [], []>} : vector<64x128xbf16>, vector<128x128xbf16>, vector<64x128xf32> -> vector<64x128xf32>
    %36 = arith.addf %31, %33 : vector<64x128xbf16>
    %cst_46 = arith.constant dense<0.000000e+00> : vector<64x128xf32>
    %37 = tpu.matmul %36, %5, %cst_46 {dimension_numbers = #tpu.dot_dimension_numbers<[1], [0], [0], [1], [0, 0, 1, 1], [], []>} : vector<64x128xbf16>, vector<128x128xbf16>, vector<64x128xf32> -> vector<64x128xf32>
    %38 = arith.subf %34, %35 : vector<64x128xf32>
    %39 = arith.subf %37, %34 : vector<64x128xf32>
    %40 = arith.subf %39, %35 : vector<64x128xf32>
    %c0_47 = arith.constant 0 : index
    %c0_48 = arith.constant 0 : index
    %c0_49 = arith.constant 0 : index
    %41 = vector.load %arg7[%c0_47, %c0_48, %c0_49] : memref<2x64x128xf32, #tpu.memory_space<vmem>>, vector<1x64x128xf32>
    %42 = vector.shape_cast %41 : vector<1x64x128xf32> to vector<64x128xf32>
    %43 = vector.shape_cast %38 : vector<64x128xf32> to vector<1x64x128xf32>
    tpu.vector_store %arg7[%c0_47, %c0_48, %c0_49], %43 {strides = array<i32>} : memref<2x64x128xf32, #tpu.memory_space<vmem>>, vector<1x64x128xf32>,
    %c1_50 = arith.constant 1 : index
    %c0_51 = arith.constant 0 : index
    %c0_52 = arith.constant 0 : index
    %44 = vector.load %arg7[%c1_50, %c0_51, %c0_52] : memref<2x64x128xf32, #tpu.memory_space<vmem>>, vector<1x64x128xf32>
    %45 = vector.shape_cast %44 : vector<1x64x128xf32> to vector<64x128xf32>
    %46 = vector.shape_cast %40 : vector<64x128xf32> to vector<1x64x128xf32>
    tpu.vector_store %arg7[%c1_50, %c0_51, %c0_52], %46 {strides = array<i32>} : memref<2x64x128xf32, #tpu.memory_space<vmem>>, vector<1x64x128xf32>,
    %c0_i32 = arith.constant 0 : i32
    %c32_i32 = arith.constant 32 : i32
    %47 = arith.muli %c0_i32, %c32_i32 : i32
    %48 = tpu.assume_multiple %47, 32 : i32
    %c0_53 = arith.constant 0 : index
    %49 = arith.index_cast %48 : i32 to index
    %c0_54 = arith.constant 0 : index
    %50 = vector.load %arg7[%c0_53, %49, %c0_54] : memref<2x64x128xf32, #tpu.memory_space<vmem>>, vector<1x32x128xf32>
    %51 = vector.shape_cast %50 : vector<1x32x128xf32> to vector<32x128xf32>
    %c1_55 = arith.constant 1 : index
    %52 = arith.index_cast %48 : i32 to index
    %c0_56 = arith.constant 0 : index
    %53 = vector.load %arg7[%c1_55, %52, %c0_56] : memref<2x64x128xf32, #tpu.memory_space<vmem>>, vector<1x32x128xf32>
    %54 = vector.shape_cast %53 : vector<1x32x128xf32> to vector<32x128xf32>
    %55 = arith.truncf %51 : vector<32x128xf32> to vector<32x128xbf16>
    %56 = arith.truncf %54 : vector<32x128xf32> to vector<32x128xbf16>
    %cst_57 = arith.constant dense<0.000000e+00> : vector<32x128xf32>
    %57 = tpu.matmul %7, %55, %cst_57 {dimension_numbers = #tpu.dot_dimension_numbers<[1], [0], [0], [1], [0, 0, 1, 1], [], []>} : vector<32x32xbf16>, vector<32x128xbf16>, vector<32x128xf32> -> vector<32x128xf32>
    %cst_58 = arith.constant dense<0.000000e+00> : vector<32x128xf32>
    %58 = tpu.matmul %9, %56, %cst_58 {dimension_numbers = #tpu.dot_dimension_numbers<[1], [0], [0], [1], [0, 0, 1, 1], [], []>} : vector<32x32xbf16>, vector<32x128xbf16>, vector<32x128xf32> -> vector<32x128xf32>
    %59 = arith.addf %55, %56 : vector<32x128xbf16>
    %cst_59 = arith.constant dense<0.000000e+00> : vector<32x128xf32>
    %60 = tpu.matmul %11, %59, %cst_59 {dimension_numbers = #tpu.dot_dimension_numbers<[1], [0], [0], [1], [0, 0, 1, 1], [], []>} : vector<32x32xbf16>, vector<32x128xbf16>, vector<32x128xf32> -> vector<32x128xf32>
    %61 = arith.subf %57, %58 : vector<32x128xf32>
    %62 = arith.subf %60, %57 : vector<32x128xf32>
    %63 = arith.subf %62, %58 : vector<32x128xf32>
    %64 = arith.mulf %61, %26 : vector<32x128xf32>
    %65 = arith.mulf %63, %29 : vector<32x128xf32>
    %66 = arith.subf %64, %65 : vector<32x128xf32>
    %67 = arith.mulf %61, %29 : vector<32x128xf32>
    %68 = arith.mulf %63, %26 : vector<32x128xf32>
    %69 = arith.addf %67, %68 : vector<32x128xf32>
    %70 = arith.truncf %66 : vector<32x128xf32> to vector<32x128xbf16>
    %71 = arith.truncf %69 : vector<32x128xf32> to vector<32x128xbf16>
    %cst_60 = arith.constant dense<0.000000e+00> : vector<32x128xf32>
    %72 = tpu.matmul %13, %70, %cst_60 {dimension_numbers = #tpu.dot_dimension_numbers<[1], [0], [0], [1], [0, 0, 1, 1], [], []>} : vector<32x32xbf16>, vector<32x128xbf16>, vector<32x128xf32> -> vector<32x128xf32>
    %cst_61 = arith.constant dense<0.000000e+00> : vector<32x128xf32>
    %73 = tpu.matmul %15, %71, %cst_61 {dimension_numbers = #tpu.dot_dimension_numbers<[1], [0], [0], [1], [0, 0, 1, 1], [], []>} : vector<32x32xbf16>, vector<32x128xbf16>, vector<32x128xf32> -> vector<32x128xf32>
    %74 = arith.addf %70, %71 : vector<32x128xbf16>
    %cst_62 = arith.constant dense<0.000000e+00> : vector<32x128xf32>
    %75 = tpu.matmul %17, %74, %cst_62 {dimension_numbers = #tpu.dot_dimension_numbers<[1], [0], [0], [1], [0, 0, 1, 1], [], []>} : vector<32x32xbf16>, vector<32x128xbf16>, vector<32x128xf32> -> vector<32x128xf32>
    %76 = arith.subf %72, %73 : vector<32x128xf32>
    %77 = arith.subf %75, %72 : vector<32x128xf32>
    %78 = arith.subf %77, %73 : vector<32x128xf32>
    %c0_63 = arith.constant 0 : index
    %79 = arith.index_cast %48 : i32 to index
    %c0_64 = arith.constant 0 : index
    %80 = vector.load %arg7[%c0_63, %79, %c0_64] : memref<2x64x128xf32, #tpu.memory_space<vmem>>, vector<1x32x128xf32>
    %81 = vector.shape_cast %80 : vector<1x32x128xf32> to vector<32x128xf32>
    %82 = vector.shape_cast %76 : vector<32x128xf32> to vector<1x32x128xf32>
    tpu.vector_store %arg7[%c0_63, %79, %c0_64], %82 {strides = array<i32>} : memref<2x64x128xf32, #tpu.memory_space<vmem>>, vector<1x32x128xf32>,
    %c1_65 = arith.constant 1 : index
    %83 = arith.index_cast %48 : i32 to index
    %c0_66 = arith.constant 0 : index
    %84 = vector.load %arg7[%c1_65, %83, %c0_66] : memref<2x64x128xf32, #tpu.memory_space<vmem>>, vector<1x32x128xf32>
    %85 = vector.shape_cast %84 : vector<1x32x128xf32> to vector<32x128xf32>
    %86 = vector.shape_cast %78 : vector<32x128xf32> to vector<1x32x128xf32>
    tpu.vector_store %arg7[%c1_65, %83, %c0_66], %86 {strides = array<i32>} : memref<2x64x128xf32, #tpu.memory_space<vmem>>, vector<1x32x128xf32>,
    %c1_i32 = arith.constant 1 : i32
    %c32_i32_67 = arith.constant 32 : i32
    %87 = arith.muli %c1_i32, %c32_i32_67 : i32
    %88 = tpu.assume_multiple %87, 32 : i32
    %c0_68 = arith.constant 0 : index
    %89 = arith.index_cast %88 : i32 to index
    %c0_69 = arith.constant 0 : index
    %90 = vector.load %arg7[%c0_68, %89, %c0_69] : memref<2x64x128xf32, #tpu.memory_space<vmem>>, vector<1x32x128xf32>
    %91 = vector.shape_cast %90 : vector<1x32x128xf32> to vector<32x128xf32>
    %c1_70 = arith.constant 1 : index
    %92 = arith.index_cast %88 : i32 to index
    %c0_71 = arith.constant 0 : index
    %93 = vector.load %arg7[%c1_70, %92, %c0_71] : memref<2x64x128xf32, #tpu.memory_space<vmem>>, vector<1x32x128xf32>
    %94 = vector.shape_cast %93 : vector<1x32x128xf32> to vector<32x128xf32>
    %95 = arith.truncf %91 : vector<32x128xf32> to vector<32x128xbf16>
    %96 = arith.truncf %94 : vector<32x128xf32> to vector<32x128xbf16>
    %cst_72 = arith.constant dense<0.000000e+00> : vector<32x128xf32>
    %97 = tpu.matmul %7, %95, %cst_72 {dimension_numbers = #tpu.dot_dimension_numbers<[1], [0], [0], [1], [0, 0, 1, 1], [], []>} : vector<32x32xbf16>, vector<32x128xbf16>, vector<32x128xf32> -> vector<32x128xf32>
    %cst_73 = arith.constant dense<0.000000e+00> : vector<32x128xf32>
    %98 = tpu.matmul %9, %96, %cst_73 {dimension_numbers = #tpu.dot_dimension_numbers<[1], [0], [0], [1], [0, 0, 1, 1], [], []>} : vector<32x32xbf16>, vector<32x128xbf16>, vector<32x128xf32> -> vector<32x128xf32>
    %99 = arith.addf %95, %96 : vector<32x128xbf16>
    %cst_74 = arith.constant dense<0.000000e+00> : vector<32x128xf32>
    %100 = tpu.matmul %11, %99, %cst_74 {dimension_numbers = #tpu.dot_dimension_numbers<[1], [0], [0], [1], [0, 0, 1, 1], [], []>} : vector<32x32xbf16>, vector<32x128xbf16>, vector<32x128xf32> -> vector<32x128xf32>
    %101 = arith.subf %97, %98 : vector<32x128xf32>
    %102 = arith.subf %100, %97 : vector<32x128xf32>
    %103 = arith.subf %102, %98 : vector<32x128xf32>
    %104 = arith.mulf %101, %26 : vector<32x128xf32>
    %105 = arith.mulf %103, %29 : vector<32x128xf32>
    %106 = arith.subf %104, %105 : vector<32x128xf32>
    %107 = arith.mulf %101, %29 : vector<32x128xf32>
    %108 = arith.mulf %103, %26 : vector<32x128xf32>
    %109 = arith.addf %107, %108 : vector<32x128xf32>
    %110 = arith.truncf %106 : vector<32x128xf32> to vector<32x128xbf16>
    %111 = arith.truncf %109 : vector<32x128xf32> to vector<32x128xbf16>
    %cst_75 = arith.constant dense<0.000000e+00> : vector<32x128xf32>
    %112 = tpu.matmul %13, %110, %cst_75 {dimension_numbers = #tpu.dot_dimension_numbers<[1], [0], [0], [1], [0, 0, 1, 1], [], []>} : vector<32x32xbf16>, vector<32x128xbf16>, vector<32x128xf32> -> vector<32x128xf32>
    %cst_76 = arith.constant dense<0.000000e+00> : vector<32x128xf32>
    %113 = tpu.matmul %15, %111, %cst_76 {dimension_numbers = #tpu.dot_dimension_numbers<[1], [0], [0], [1], [0, 0, 1, 1], [], []>} : vector<32x32xbf16>, vector<32x128xbf16>, vector<32x128xf32> -> vector<32x128xf32>
    %114 = arith.addf %110, %111 : vector<32x128xbf16>
    %cst_77 = arith.constant dense<0.000000e+00> : vector<32x128xf32>
    %115 = tpu.matmul %17, %114, %cst_77 {dimension_numbers = #tpu.dot_dimension_numbers<[1], [0], [0], [1], [0, 0, 1, 1], [], []>} : vector<32x32xbf16>, vector<32x128xbf16>, vector<32x128xf32> -> vector<32x128xf32>
    %116 = arith.subf %112, %113 : vector<32x128xf32>
    %117 = arith.subf %115, %112 : vector<32x128xf32>
    %118 = arith.subf %117, %113 : vector<32x128xf32>
    %c0_78 = arith.constant 0 : index
    %119 = arith.index_cast %88 : i32 to index
    %c0_79 = arith.constant 0 : index
    %120 = vector.load %arg7[%c0_78, %119, %c0_79] : memref<2x64x128xf32, #tpu.memory_space<vmem>>, vector<1x32x128xf32>
    %121 = vector.shape_cast %120 : vector<1x32x128xf32> to vector<32x128xf32>
    %122 = vector.shape_cast %116 : vector<32x128xf32> to vector<1x32x128xf32>
    tpu.vector_store %arg7[%c0_78, %119, %c0_79], %122 {strides = array<i32>} : memref<2x64x128xf32, #tpu.memory_space<vmem>>, vector<1x32x128xf32>,
    %c1_80 = arith.constant 1 : index
    %123 = arith.index_cast %88 : i32 to index
    %c0_81 = arith.constant 0 : index
    %124 = vector.load %arg7[%c1_80, %123, %c0_81] : memref<2x64x128xf32, #tpu.memory_space<vmem>>, vector<1x32x128xf32>
    %125 = vector.shape_cast %124 : vector<1x32x128xf32> to vector<32x128xf32>
    %126 = vector.shape_cast %118 : vector<32x128xf32> to vector<1x32x128xf32>
    tpu.vector_store %arg7[%c1_80, %123, %c0_81], %126 {strides = array<i32>} : memref<2x64x128xf32, #tpu.memory_space<vmem>>, vector<1x32x128xf32>,
    %c2_i32 = arith.constant 2 : i32
    %c0_82 = arith.constant 0 : index
    %c0_83 = arith.constant 0 : index
    %c0_84 = arith.constant 0 : index
    %127 = vector.load %arg7[%c0_82, %c0_83, %c0_84] : memref<2x64x128xf32, #tpu.memory_space<vmem>>, vector<1x64x128xf32>
    %128 = vector.shape_cast %127 : vector<1x64x128xf32> to vector<64x128xf32>
    %c1_85 = arith.constant 1 : index
    %c0_86 = arith.constant 0 : index
    %c0_87 = arith.constant 0 : index
    %129 = vector.load %arg7[%c1_85, %c0_86, %c0_87] : memref<2x64x128xf32, #tpu.memory_space<vmem>>, vector<1x64x128xf32>
    %130 = vector.shape_cast %129 : vector<1x64x128xf32> to vector<64x128xf32>
    %131 = arith.truncf %128 : vector<64x128xf32> to vector<64x128xbf16>
    %132 = arith.truncf %130 : vector<64x128xf32> to vector<64x128xbf16>
    %cst_88 = arith.constant dense<0.000000e+00> : vector<64x128xf32>
    %133 = tpu.matmul %131, %19, %cst_88 {dimension_numbers = #tpu.dot_dimension_numbers<[1], [0], [0], [1], [0, 0, 1, 1], [], []>} : vector<64x128xbf16>, vector<128x128xbf16>, vector<64x128xf32> -> vector<64x128xf32>
    %cst_89 = arith.constant dense<0.000000e+00> : vector<64x128xf32>
    %134 = tpu.matmul %132, %21, %cst_89 {dimension_numbers = #tpu.dot_dimension_numbers<[1], [0], [0], [1], [0, 0, 1, 1], [], []>} : vector<64x128xbf16>, vector<128x128xbf16>, vector<64x128xf32> -> vector<64x128xf32>
    %135 = arith.addf %131, %132 : vector<64x128xbf16>
    %cst_90 = arith.constant dense<0.000000e+00> : vector<64x128xf32>
    %136 = tpu.matmul %135, %23, %cst_90 {dimension_numbers = #tpu.dot_dimension_numbers<[1], [0], [0], [1], [0, 0, 1, 1], [], []>} : vector<64x128xbf16>, vector<128x128xbf16>, vector<64x128xf32> -> vector<64x128xf32>
    %137 = arith.subf %133, %134 : vector<64x128xf32>
    %138 = arith.subf %136, %133 : vector<64x128xf32>
    %139 = arith.subf %138, %134 : vector<64x128xf32>
    %c0_91 = arith.constant 0 : index
    %c0_92 = arith.constant 0 : index
    %c0_93 = arith.constant 0 : index
    %140 = vector.load %arg7[%c0_91, %c0_92, %c0_93] : memref<2x64x128xf32, #tpu.memory_space<vmem>>, vector<1x64x128xf32>
    %141 = vector.shape_cast %140 : vector<1x64x128xf32> to vector<64x128xf32>
    %142 = vector.shape_cast %137 : vector<64x128xf32> to vector<1x64x128xf32>
    tpu.vector_store %arg7[%c0_91, %c0_92, %c0_93], %142 {strides = array<i32>} : memref<2x64x128xf32, #tpu.memory_space<vmem>>, vector<1x64x128xf32>,
    %c1_94 = arith.constant 1 : index
    %c0_95 = arith.constant 0 : index
    %c0_96 = arith.constant 0 : index
    %143 = vector.load %arg7[%c1_94, %c0_95, %c0_96] : memref<2x64x128xf32, #tpu.memory_space<vmem>>, vector<1x64x128xf32>
    %144 = vector.shape_cast %143 : vector<1x64x128xf32> to vector<64x128xf32>
    %145 = vector.shape_cast %139 : vector<64x128xf32> to vector<1x64x128xf32>
    tpu.vector_store %arg7[%c1_94, %c0_95, %c0_96], %145 {strides = array<i32>} : memref<2x64x128xf32, #tpu.memory_space<vmem>>, vector<1x64x128xf32>,
    return
  }
  func.func @transform_0(%arg0: i32) -> (i32, i32, i32) {
    %c0_i32 = arith.constant 0 : i32
    %c0_i32_0 = arith.constant 0 : i32
    %c0_i32_1 = arith.constant 0 : i32
    return %c0_i32, %arg0, %c0_i32_0 : i32, i32, i32
  }
  func.func @transform_1(%arg0: i32) -> (i32, i32, i32) {
    %c0_i32 = arith.constant 0 : i32
    %c0_i32_0 = arith.constant 0 : i32
    %c0_i32_1 = arith.constant 0 : i32
    %c0_i32_2 = arith.constant 0 : i32
    return %c0_i32, %c0_i32_0, %c0_i32_1 : i32, i32, i32
  }
  func.func @transform_2(%arg0: i32) -> (i32, i32, i32) {
    %c0_i32 = arith.constant 0 : i32
    %c0_i32_0 = arith.constant 0 : i32
    %c0_i32_1 = arith.constant 0 : i32
    %c0_i32_2 = arith.constant 0 : i32
    return %c0_i32, %c0_i32_0, %c0_i32_1 : i32, i32, i32
  }
  func.func @transform_3(%arg0: i32) -> (i32, i32, i32) {
    %c0_i32 = arith.constant 0 : i32
    %c0_i32_0 = arith.constant 0 : i32
    %c0_i32_1 = arith.constant 0 : i32
    %c0_i32_2 = arith.constant 0 : i32
    return %c0_i32, %c0_i32_0, %c0_i32_1 : i32, i32, i32
  }
  func.func @transform_4(%arg0: i32) -> (i32, i32, i32) {
    %c0_i32 = arith.constant 0 : i32
    %c0_i32_0 = arith.constant 0 : i32
    %c0_i32_1 = arith.constant 0 : i32
    %c0_i32_2 = arith.constant 0 : i32
    return %c0_i32, %c0_i32_0, %c0_i32_1 : i32, i32, i32
  }
  func.func @transform_5(%arg0: i32) -> (i32, i32, i32) {
    %c0_i32 = arith.constant 0 : i32
    %c0_i32_0 = arith.constant 0 : i32
    %c0_i32_1 = arith.constant 0 : i32
    %c0_i32_2 = arith.constant 0 : i32
    return %c0_i32, %c0_i32_0, %c0_i32_1 : i32, i32, i32
  }
  func.func @transform_6(%arg0: i32) -> (i32, i32, i32) {
    %c0_i32 = arith.constant 0 : i32
    %c0_i32_0 = arith.constant 0 : i32
    %c0_i32_1 = arith.constant 0 : i32
    return %c0_i32, %arg0, %c0_i32_0 : i32, i32, i32
  }
}

module attributes {stable_mosaic.version = 11 : i64} {
  func.func @_prop_kernel(%arg0: i32, %arg1: memref<2x64x128xbf16, #tpu.memory_space<vmem>>, %arg2: memref<3x32x32xbf16, #tpu.memory_space<vmem>>, %arg3: memref<3x128x128xbf16, #tpu.memory_space<vmem>>, %arg4: memref<2x32x128xbf16, #tpu.memory_space<vmem>>, %arg5: memref<3x32x32xbf16, #tpu.memory_space<vmem>>, %arg6: memref<3x128x128xbf16, #tpu.memory_space<vmem>>, %arg7: memref<2x64x128xf32, #tpu.memory_space<vmem>>) attributes {dimension_semantics = [#tpu.dimension_semantics<parallel>], iteration_bounds = array<i64: 4>, scalar_prefetch = 0 : i64, scratch_operands = 0 : i64, tpu.core_type = #tpu.core_type<tc>, window_params = [{transform_indices = @transform_0, window_bounds = array<i64: 2, 64, 128>}, {pipeline_mode = #tpu.pipeline_mode<synchronous>, transform_indices = @transform_1, window_bounds = array<i64: 3, 32, 32>}, {pipeline_mode = #tpu.pipeline_mode<synchronous>, transform_indices = @transform_2, window_bounds = array<i64: 3, 128, 128>}, {pipeline_mode = #tpu.pipeline_mode<synchronous>, transform_indices = @transform_3, window_bounds = array<i64: 2, 32, 128>}, {pipeline_mode = #tpu.pipeline_mode<synchronous>, transform_indices = @transform_4, window_bounds = array<i64: 3, 32, 32>}, {pipeline_mode = #tpu.pipeline_mode<synchronous>, transform_indices = @transform_5, window_bounds = array<i64: 3, 128, 128>}, {transform_indices = @transform_6, window_bounds = array<i64: 2, 64, 128>}]} {
    %c0 = arith.constant 0 : index
    %c0_0 = arith.constant 0 : index
    %c0_1 = arith.constant 0 : index
    %0 = vector.load %arg3[%c0, %c0_0, %c0_1] : memref<3x128x128xbf16, #tpu.memory_space<vmem>>, vector<1x128x128xbf16>
    %1 = vector.shape_cast %0 : vector<1x128x128xbf16> to vector<128x128xbf16>
    %c1 = arith.constant 1 : index
    %c0_2 = arith.constant 0 : index
    %c0_3 = arith.constant 0 : index
    %2 = vector.load %arg3[%c1, %c0_2, %c0_3] : memref<3x128x128xbf16, #tpu.memory_space<vmem>>, vector<1x128x128xbf16>
    %3 = vector.shape_cast %2 : vector<1x128x128xbf16> to vector<128x128xbf16>
    %c2 = arith.constant 2 : index
    %c0_4 = arith.constant 0 : index
    %c0_5 = arith.constant 0 : index
    %4 = vector.load %arg3[%c2, %c0_4, %c0_5] : memref<3x128x128xbf16, #tpu.memory_space<vmem>>, vector<1x128x128xbf16>
    %5 = vector.shape_cast %4 : vector<1x128x128xbf16> to vector<128x128xbf16>
    %c0_6 = arith.constant 0 : index
    %c0_7 = arith.constant 0 : index
    %c0_8 = arith.constant 0 : index
    %6 = vector.load %arg2[%c0_6, %c0_7, %c0_8] : memref<3x32x32xbf16, #tpu.memory_space<vmem>>, vector<1x32x32xbf16>
    %7 = vector.shape_cast %6 : vector<1x32x32xbf16> to vector<32x32xbf16>
    %c1_9 = arith.constant 1 : index
    %c0_10 = arith.constant 0 : index
    %c0_11 = arith.constant 0 : index
    %8 = vector.load %arg2[%c1_9, %c0_10, %c0_11] : memref<3x32x32xbf16, #tpu.memory_space<vmem>>, vector<1x32x32xbf16>
    %9 = vector.shape_cast %8 : vector<1x32x32xbf16> to vector<32x32xbf16>
    %c2_12 = arith.constant 2 : index
    %c0_13 = arith.constant 0 : index
    %c0_14 = arith.constant 0 : index
    %10 = vector.load %arg2[%c2_12, %c0_13, %c0_14] : memref<3x32x32xbf16, #tpu.memory_space<vmem>>, vector<1x32x32xbf16>
    %11 = vector.shape_cast %10 : vector<1x32x32xbf16> to vector<32x32xbf16>
    %c0_15 = arith.constant 0 : index
    %c0_16 = arith.constant 0 : index
    %c0_17 = arith.constant 0 : index
    %12 = vector.load %arg5[%c0_15, %c0_16, %c0_17] : memref<3x32x32xbf16, #tpu.memory_space<vmem>>, vector<1x32x32xbf16>
    %13 = vector.shape_cast %12 : vector<1x32x32xbf16> to vector<32x32xbf16>
    %c1_18 = arith.constant 1 : index
    %c0_19 = arith.constant 0 : index
    %c0_20 = arith.constant 0 : index
    %14 = vector.load %arg5[%c1_18, %c0_19, %c0_20] : memref<3x32x32xbf16, #tpu.memory_space<vmem>>, vector<1x32x32xbf16>
    %15 = vector.shape_cast %14 : vector<1x32x32xbf16> to vector<32x32xbf16>
    %c2_21 = arith.constant 2 : index
    %c0_22 = arith.constant 0 : index
    %c0_23 = arith.constant 0 : index
    %16 = vector.load %arg5[%c2_21, %c0_22, %c0_23] : memref<3x32x32xbf16, #tpu.memory_space<vmem>>, vector<1x32x32xbf16>
    %17 = vector.shape_cast %16 : vector<1x32x32xbf16> to vector<32x32xbf16>
    %c0_24 = arith.constant 0 : index
    %c0_25 = arith.constant 0 : index
    %c0_26 = arith.constant 0 : index
    %18 = vector.load %arg6[%c0_24, %c0_25, %c0_26] : memref<3x128x128xbf16, #tpu.memory_space<vmem>>, vector<1x128x128xbf16>
    %19 = vector.shape_cast %18 : vector<1x128x128xbf16> to vector<128x128xbf16>
    %c1_27 = arith.constant 1 : index
    %c0_28 = arith.constant 0 : index
    %c0_29 = arith.constant 0 : index
    %20 = vector.load %arg6[%c1_27, %c0_28, %c0_29] : memref<3x128x128xbf16, #tpu.memory_space<vmem>>, vector<1x128x128xbf16>
    %21 = vector.shape_cast %20 : vector<1x128x128xbf16> to vector<128x128xbf16>
    %c2_30 = arith.constant 2 : index
    %c0_31 = arith.constant 0 : index
    %c0_32 = arith.constant 0 : index
    %22 = vector.load %arg6[%c2_30, %c0_31, %c0_32] : memref<3x128x128xbf16, #tpu.memory_space<vmem>>, vector<1x128x128xbf16>
    %23 = vector.shape_cast %22 : vector<1x128x128xbf16> to vector<128x128xbf16>
    %c0_33 = arith.constant 0 : index
    %c0_34 = arith.constant 0 : index
    %c0_35 = arith.constant 0 : index
    %24 = vector.load %arg4[%c0_33, %c0_34, %c0_35] : memref<2x32x128xbf16, #tpu.memory_space<vmem>>, vector<1x32x128xbf16>
    %25 = vector.shape_cast %24 : vector<1x32x128xbf16> to vector<32x128xbf16>
    %26 = arith.extf %25 : vector<32x128xbf16> to vector<32x128xf32>
    %c1_36 = arith.constant 1 : index
    %c0_37 = arith.constant 0 : index
    %c0_38 = arith.constant 0 : index
    %27 = vector.load %arg4[%c1_36, %c0_37, %c0_38] : memref<2x32x128xbf16, #tpu.memory_space<vmem>>, vector<1x32x128xbf16>
    %28 = vector.shape_cast %27 : vector<1x32x128xbf16> to vector<32x128xbf16>
    %29 = arith.extf %28 : vector<32x128xbf16> to vector<32x128xf32>
    %c0_39 = arith.constant 0 : index
    %c0_40 = arith.constant 0 : index
    %c0_41 = arith.constant 0 : index
    %30 = vector.load %arg1[%c0_39, %c0_40, %c0_41] : memref<2x64x128xbf16, #tpu.memory_space<vmem>>, vector<1x64x128xbf16>
    %31 = vector.shape_cast %30 : vector<1x64x128xbf16> to vector<64x128xbf16>
    %c1_42 = arith.constant 1 : index
    %c0_43 = arith.constant 0 : index
    %c0_44 = arith.constant 0 : index
    %32 = vector.load %arg1[%c1_42, %c0_43, %c0_44] : memref<2x64x128xbf16, #tpu.memory_space<vmem>>, vector<1x64x128xbf16>
    %33 = vector.shape_cast %32 : vector<1x64x128xbf16> to vector<64x128xbf16>
    %cst = arith.constant dense<0.000000e+00> : vector<64x128xf32>
    %34 = tpu.matmul %31, %1, %cst {dimension_numbers = #tpu.dot_dimension_numbers<[1], [0], [0], [1], [0, 0, 1, 1], [], []>} : vector<64x128xbf16>, vector<128x128xbf16>, vector<64x128xf32> -> vector<64x128xf32>
    %cst_45 = arith.constant dense<0.000000e+00> : vector<64x128xf32>
    %35 = tpu.matmul %33, %3, %cst_45 {dimension_numbers = #tpu.dot_dimension_numbers<[1], [0], [0], [1], [0, 0, 1, 1], [], []>} : vector<64x128xbf16>, vector<128x128xbf16>, vector<64x128xf32> -> vector<64x128xf32>
    %36 = arith.addf %31, %33 : vector<64x128xbf16>
    %cst_46 = arith.constant dense<0.000000e+00> : vector<64x128xf32>
    %37 = tpu.matmul %36, %5, %cst_46 {dimension_numbers = #tpu.dot_dimension_numbers<[1], [0], [0], [1], [0, 0, 1, 1], [], []>} : vector<64x128xbf16>, vector<128x128xbf16>, vector<64x128xf32> -> vector<64x128xf32>
    %38 = arith.subf %34, %35 : vector<64x128xf32>
    %39 = arith.subf %37, %34 : vector<64x128xf32>
    %40 = arith.subf %39, %35 : vector<64x128xf32>
    %c0_47 = arith.constant 0 : index
    %c0_48 = arith.constant 0 : index
    %c0_49 = arith.constant 0 : index
    %41 = vector.load %arg7[%c0_47, %c0_48, %c0_49] : memref<2x64x128xf32, #tpu.memory_space<vmem>>, vector<1x64x128xf32>
    %42 = vector.shape_cast %41 : vector<1x64x128xf32> to vector<64x128xf32>
    %43 = vector.shape_cast %38 : vector<64x128xf32> to vector<1x64x128xf32>
    tpu.vector_store %arg7[%c0_47, %c0_48, %c0_49], %43 {strides = array<i32>} : memref<2x64x128xf32, #tpu.memory_space<vmem>>, vector<1x64x128xf32>,
    %c1_50 = arith.constant 1 : index
    %c0_51 = arith.constant 0 : index
    %c0_52 = arith.constant 0 : index
    %44 = vector.load %arg7[%c1_50, %c0_51, %c0_52] : memref<2x64x128xf32, #tpu.memory_space<vmem>>, vector<1x64x128xf32>
    %45 = vector.shape_cast %44 : vector<1x64x128xf32> to vector<64x128xf32>
    %46 = vector.shape_cast %40 : vector<64x128xf32> to vector<1x64x128xf32>
    tpu.vector_store %arg7[%c1_50, %c0_51, %c0_52], %46 {strides = array<i32>} : memref<2x64x128xf32, #tpu.memory_space<vmem>>, vector<1x64x128xf32>,
    %c0_i32 = arith.constant 0 : i32
    %c32_i32 = arith.constant 32 : i32
    %47 = arith.muli %c0_i32, %c32_i32 : i32
    %48 = tpu.assume_multiple %47, 32 : i32
    %c0_53 = arith.constant 0 : index
    %49 = arith.index_cast %48 : i32 to index
    %c0_54 = arith.constant 0 : index
    %50 = vector.load %arg7[%c0_53, %49, %c0_54] : memref<2x64x128xf32, #tpu.memory_space<vmem>>, vector<1x32x128xf32>
    %51 = vector.shape_cast %50 : vector<1x32x128xf32> to vector<32x128xf32>
    %c1_55 = arith.constant 1 : index
    %52 = arith.index_cast %48 : i32 to index
    %c0_56 = arith.constant 0 : index
    %53 = vector.load %arg7[%c1_55, %52, %c0_56] : memref<2x64x128xf32, #tpu.memory_space<vmem>>, vector<1x32x128xf32>
    %54 = vector.shape_cast %53 : vector<1x32x128xf32> to vector<32x128xf32>
    %55 = arith.truncf %51 : vector<32x128xf32> to vector<32x128xbf16>
    %56 = arith.truncf %54 : vector<32x128xf32> to vector<32x128xbf16>
    %cst_57 = arith.constant dense<0.000000e+00> : vector<32x128xf32>
    %57 = tpu.matmul %7, %55, %cst_57 {dimension_numbers = #tpu.dot_dimension_numbers<[1], [0], [0], [1], [0, 0, 1, 1], [], []>} : vector<32x32xbf16>, vector<32x128xbf16>, vector<32x128xf32> -> vector<32x128xf32>
    %cst_58 = arith.constant dense<0.000000e+00> : vector<32x128xf32>
    %58 = tpu.matmul %9, %56, %cst_58 {dimension_numbers = #tpu.dot_dimension_numbers<[1], [0], [0], [1], [0, 0, 1, 1], [], []>} : vector<32x32xbf16>, vector<32x128xbf16>, vector<32x128xf32> -> vector<32x128xf32>
    %59 = arith.addf %55, %56 : vector<32x128xbf16>
    %cst_59 = arith.constant dense<0.000000e+00> : vector<32x128xf32>
    %60 = tpu.matmul %11, %59, %cst_59 {dimension_numbers = #tpu.dot_dimension_numbers<[1], [0], [0], [1], [0, 0, 1, 1], [], []>} : vector<32x32xbf16>, vector<32x128xbf16>, vector<32x128xf32> -> vector<32x128xf32>
    %61 = arith.subf %57, %58 : vector<32x128xf32>
    %62 = arith.subf %60, %57 : vector<32x128xf32>
    %63 = arith.subf %62, %58 : vector<32x128xf32>
    %64 = arith.mulf %61, %26 : vector<32x128xf32>
    %65 = arith.mulf %63, %29 : vector<32x128xf32>
    %66 = arith.subf %64, %65 : vector<32x128xf32>
    %67 = arith.mulf %61, %29 : vector<32x128xf32>
    %68 = arith.mulf %63, %26 : vector<32x128xf32>
    %69 = arith.addf %67, %68 : vector<32x128xf32>
    %70 = arith.truncf %66 : vector<32x128xf32> to vector<32x128xbf16>
    %71 = arith.truncf %69 : vector<32x128xf32> to vector<32x128xbf16>
    %cst_60 = arith.constant dense<0.000000e+00> : vector<32x128xf32>
    %72 = tpu.matmul %13, %70, %cst_60 {dimension_numbers = #tpu.dot_dimension_numbers<[1], [0], [0], [1], [0, 0, 1, 1], [], []>} : vector<32x32xbf16>, vector<32x128xbf16>, vector<32x128xf32> -> vector<32x128xf32>
    %cst_61 = arith.constant dense<0.000000e+00> : vector<32x128xf32>
    %73 = tpu.matmul %15, %71, %cst_61 {dimension_numbers = #tpu.dot_dimension_numbers<[1], [0], [0], [1], [0, 0, 1, 1], [], []>} : vector<32x32xbf16>, vector<32x128xbf16>, vector<32x128xf32> -> vector<32x128xf32>
    %74 = arith.addf %70, %71 : vector<32x128xbf16>
    %cst_62 = arith.constant dense<0.000000e+00> : vector<32x128xf32>
    %75 = tpu.matmul %17, %74, %cst_62 {dimension_numbers = #tpu.dot_dimension_numbers<[1], [0], [0], [1], [0, 0, 1, 1], [], []>} : vector<32x32xbf16>, vector<32x128xbf16>, vector<32x128xf32> -> vector<32x128xf32>
    %76 = arith.subf %72, %73 : vector<32x128xf32>
    %77 = arith.subf %75, %72 : vector<32x128xf32>
    %78 = arith.subf %77, %73 : vector<32x128xf32>
    %c0_63 = arith.constant 0 : index
    %79 = arith.index_cast %48 : i32 to index
    %c0_64 = arith.constant 0 : index
    %80 = vector.load %arg7[%c0_63, %79, %c0_64] : memref<2x64x128xf32, #tpu.memory_space<vmem>>, vector<1x32x128xf32>
    %81 = vector.shape_cast %80 : vector<1x32x128xf32> to vector<32x128xf32>
    %82 = vector.shape_cast %76 : vector<32x128xf32> to vector<1x32x128xf32>
    tpu.vector_store %arg7[%c0_63, %79, %c0_64], %82 {strides = array<i32>} : memref<2x64x128xf32, #tpu.memory_space<vmem>>, vector<1x32x128xf32>,
    %c1_65 = arith.constant 1 : index
    %83 = arith.index_cast %48 : i32 to index
    %c0_66 = arith.constant 0 : index
    %84 = vector.load %arg7[%c1_65, %83, %c0_66] : memref<2x64x128xf32, #tpu.memory_space<vmem>>, vector<1x32x128xf32>
    %85 = vector.shape_cast %84 : vector<1x32x128xf32> to vector<32x128xf32>
    %86 = vector.shape_cast %78 : vector<32x128xf32> to vector<1x32x128xf32>
    tpu.vector_store %arg7[%c1_65, %83, %c0_66], %86 {strides = array<i32>} : memref<2x64x128xf32, #tpu.memory_space<vmem>>, vector<1x32x128xf32>,
    %c1_i32 = arith.constant 1 : i32
    %c32_i32_67 = arith.constant 32 : i32
    %87 = arith.muli %c1_i32, %c32_i32_67 : i32
    %88 = tpu.assume_multiple %87, 32 : i32
    %c0_68 = arith.constant 0 : index
    %89 = arith.index_cast %88 : i32 to index
    %c0_69 = arith.constant 0 : index
    %90 = vector.load %arg7[%c0_68, %89, %c0_69] : memref<2x64x128xf32, #tpu.memory_space<vmem>>, vector<1x32x128xf32>
    %91 = vector.shape_cast %90 : vector<1x32x128xf32> to vector<32x128xf32>
    %c1_70 = arith.constant 1 : index
    %92 = arith.index_cast %88 : i32 to index
    %c0_71 = arith.constant 0 : index
    %93 = vector.load %arg7[%c1_70, %92, %c0_71] : memref<2x64x128xf32, #tpu.memory_space<vmem>>, vector<1x32x128xf32>
    %94 = vector.shape_cast %93 : vector<1x32x128xf32> to vector<32x128xf32>
    %95 = arith.truncf %91 : vector<32x128xf32> to vector<32x128xbf16>
    %96 = arith.truncf %94 : vector<32x128xf32> to vector<32x128xbf16>
    %cst_72 = arith.constant dense<0.000000e+00> : vector<32x128xf32>
    %97 = tpu.matmul %7, %95, %cst_72 {dimension_numbers = #tpu.dot_dimension_numbers<[1], [0], [0], [1], [0, 0, 1, 1], [], []>} : vector<32x32xbf16>, vector<32x128xbf16>, vector<32x128xf32> -> vector<32x128xf32>
    %cst_73 = arith.constant dense<0.000000e+00> : vector<32x128xf32>
    %98 = tpu.matmul %9, %96, %cst_73 {dimension_numbers = #tpu.dot_dimension_numbers<[1], [0], [0], [1], [0, 0, 1, 1], [], []>} : vector<32x32xbf16>, vector<32x128xbf16>, vector<32x128xf32> -> vector<32x128xf32>
    %99 = arith.addf %95, %96 : vector<32x128xbf16>
    %cst_74 = arith.constant dense<0.000000e+00> : vector<32x128xf32>
    %100 = tpu.matmul %11, %99, %cst_74 {dimension_numbers = #tpu.dot_dimension_numbers<[1], [0], [0], [1], [0, 0, 1, 1], [], []>} : vector<32x32xbf16>, vector<32x128xbf16>, vector<32x128xf32> -> vector<32x128xf32>
    %101 = arith.subf %97, %98 : vector<32x128xf32>
    %102 = arith.subf %100, %97 : vector<32x128xf32>
    %103 = arith.subf %102, %98 : vector<32x128xf32>
    %104 = arith.mulf %101, %26 : vector<32x128xf32>
    %105 = arith.mulf %103, %29 : vector<32x128xf32>
    %106 = arith.subf %104, %105 : vector<32x128xf32>
    %107 = arith.mulf %101, %29 : vector<32x128xf32>
    %108 = arith.mulf %103, %26 : vector<32x128xf32>
    %109 = arith.addf %107, %108 : vector<32x128xf32>
    %110 = arith.truncf %106 : vector<32x128xf32> to vector<32x128xbf16>
    %111 = arith.truncf %109 : vector<32x128xf32> to vector<32x128xbf16>
    %cst_75 = arith.constant dense<0.000000e+00> : vector<32x128xf32>
    %112 = tpu.matmul %13, %110, %cst_75 {dimension_numbers = #tpu.dot_dimension_numbers<[1], [0], [0], [1], [0, 0, 1, 1], [], []>} : vector<32x32xbf16>, vector<32x128xbf16>, vector<32x128xf32> -> vector<32x128xf32>
    %cst_76 = arith.constant dense<0.000000e+00> : vector<32x128xf32>
    %113 = tpu.matmul %15, %111, %cst_76 {dimension_numbers = #tpu.dot_dimension_numbers<[1], [0], [0], [1], [0, 0, 1, 1], [], []>} : vector<32x32xbf16>, vector<32x128xbf16>, vector<32x128xf32> -> vector<32x128xf32>
    %114 = arith.addf %110, %111 : vector<32x128xbf16>
    %cst_77 = arith.constant dense<0.000000e+00> : vector<32x128xf32>
    %115 = tpu.matmul %17, %114, %cst_77 {dimension_numbers = #tpu.dot_dimension_numbers<[1], [0], [0], [1], [0, 0, 1, 1], [], []>} : vector<32x32xbf16>, vector<32x128xbf16>, vector<32x128xf32> -> vector<32x128xf32>
    %116 = arith.subf %112, %113 : vector<32x128xf32>
    %117 = arith.subf %115, %112 : vector<32x128xf32>
    %118 = arith.subf %117, %113 : vector<32x128xf32>
    %c0_78 = arith.constant 0 : index
    %119 = arith.index_cast %88 : i32 to index
    %c0_79 = arith.constant 0 : index
    %120 = vector.load %arg7[%c0_78, %119, %c0_79] : memref<2x64x128xf32, #tpu.memory_space<vmem>>, vector<1x32x128xf32>
    %121 = vector.shape_cast %120 : vector<1x32x128xf32> to vector<32x128xf32>
    %122 = vector.shape_cast %116 : vector<32x128xf32> to vector<1x32x128xf32>
    tpu.vector_store %arg7[%c0_78, %119, %c0_79], %122 {strides = array<i32>} : memref<2x64x128xf32, #tpu.memory_space<vmem>>, vector<1x32x128xf32>,
    %c1_80 = arith.constant 1 : index
    %123 = arith.index_cast %88 : i32 to index
    %c0_81 = arith.constant 0 : index
    %124 = vector.load %arg7[%c1_80, %123, %c0_81] : memref<2x64x128xf32, #tpu.memory_space<vmem>>, vector<1x32x128xf32>
    %125 = vector.shape_cast %124 : vector<1x32x128xf32> to vector<32x128xf32>
    %126 = vector.shape_cast %118 : vector<32x128xf32> to vector<1x32x128xf32>
    tpu.vector_store %arg7[%c1_80, %123, %c0_81], %126 {strides = array<i32>} : memref<2x64x128xf32, #tpu.memory_space<vmem>>, vector<1x32x128xf32>,
    %c2_i32 = arith.constant 2 : i32
    %c0_82 = arith.constant 0 : index
    %c0_83 = arith.constant 0 : index
    %c0_84 = arith.constant 0 : index
    %127 = vector.load %arg7[%c0_82, %c0_83, %c0_84] : memref<2x64x128xf32, #tpu.memory_space<vmem>>, vector<1x64x128xf32>
    %128 = vector.shape_cast %127 : vector<1x64x128xf32> to vector<64x128xf32>
    %c1_85 = arith.constant 1 : index
    %c0_86 = arith.constant 0 : index
    %c0_87 = arith.constant 0 : index
    %129 = vector.load %arg7[%c1_85, %c0_86, %c0_87] : memref<2x64x128xf32, #tpu.memory_space<vmem>>, vector<1x64x128xf32>
    %130 = vector.shape_cast %129 : vector<1x64x128xf32> to vector<64x128xf32>
    %131 = arith.truncf %128 : vector<64x128xf32> to vector<64x128xbf16>
    %132 = arith.truncf %130 : vector<64x128xf32> to vector<64x128xbf16>
    %cst_88 = arith.constant dense<0.000000e+00> : vector<64x128xf32>
    %133 = tpu.matmul %131, %19, %cst_88 {dimension_numbers = #tpu.dot_dimension_numbers<[1], [0], [0], [1], [0, 0, 1, 1], [], []>} : vector<64x128xbf16>, vector<128x128xbf16>, vector<64x128xf32> -> vector<64x128xf32>
    %cst_89 = arith.constant dense<0.000000e+00> : vector<64x128xf32>
    %134 = tpu.matmul %132, %21, %cst_89 {dimension_numbers = #tpu.dot_dimension_numbers<[1], [0], [0], [1], [0, 0, 1, 1], [], []>} : vector<64x128xbf16>, vector<128x128xbf16>, vector<64x128xf32> -> vector<64x128xf32>
    %135 = arith.addf %131, %132 : vector<64x128xbf16>
    %cst_90 = arith.constant dense<0.000000e+00> : vector<64x128xf32>
    %136 = tpu.matmul %135, %23, %cst_90 {dimension_numbers = #tpu.dot_dimension_numbers<[1], [0], [0], [1], [0, 0, 1, 1], [], []>} : vector<64x128xbf16>, vector<128x128xbf16>, vector<64x128xf32> -> vector<64x128xf32>
    %137 = arith.subf %133, %134 : vector<64x128xf32>
    %138 = arith.subf %136, %133 : vector<64x128xf32>
    %139 = arith.subf %138, %134 : vector<64x128xf32>
    %c0_91 = arith.constant 0 : index
    %c0_92 = arith.constant 0 : index
    %c0_93 = arith.constant 0 : index
    %140 = vector.load %arg7[%c0_91, %c0_92, %c0_93] : memref<2x64x128xf32, #tpu.memory_space<vmem>>, vector<1x64x128xf32>
    %141 = vector.shape_cast %140 : vector<1x64x128xf32> to vector<64x128xf32>
    %142 = vector.shape_cast %137 : vector<64x128xf32> to vector<1x64x128xf32>
    tpu.vector_store %arg7[%c0_91, %c0_92, %c0_93], %142 {strides = array<i32>} : memref<2x64x128xf32, #tpu.memory_space<vmem>>, vector<1x64x128xf32>,
    %c1_94 = arith.constant 1 : index
    %c0_95 = arith.constant 0 : index
    %c0_96 = arith.constant 0 : index
    %143 = vector.load %arg7[%c1_94, %c0_95, %c0_96] : memref<2x64x128xf32, #tpu.memory_space<vmem>>, vector<1x64x128xf32>
    %144 = vector.shape_cast %143 : vector<1x64x128xf32> to vector<64x128xf32>
    %145 = vector.shape_cast %139 : vector<64x128xf32> to vector<1x64x128xf32>
    tpu.vector_store %arg7[%c1_94, %c0_95, %c0_96], %145 {strides = array<i32>} : memref<2x64x128xf32, #tpu.memory_space<vmem>>, vector<1x64x128xf32>,
    return
  }
  func.func @transform_0(%arg0: i32) -> (i32, i32, i32) {
    %c0_i32 = arith.constant 0 : i32
    %c0_i32_0 = arith.constant 0 : i32
    %c0_i32_1 = arith.constant 0 : i32
    return %c0_i32, %arg0, %c0_i32_0 : i32, i32, i32
  }
  func.func @transform_1(%arg0: i32) -> (i32, i32, i32) {
    %c0_i32 = arith.constant 0 : i32
    %c0_i32_0 = arith.constant 0 : i32
    %c0_i32_1 = arith.constant 0 : i32
    %c0_i32_2 = arith.constant 0 : i32
    return %c0_i32, %c0_i32_0, %c0_i32_1 : i32, i32, i32
  }
  func.func @transform_2(%arg0: i32) -> (i32, i32, i32) {
    %c0_i32 = arith.constant 0 : i32
    %c0_i32_0 = arith.constant 0 : i32
    %c0_i32_1 = arith.constant 0 : i32
    %c0_i32_2 = arith.constant 0 : i32
    return %c0_i32, %c0_i32_0, %c0_i32_1 : i32, i32, i32
  }
  func.func @transform_3(%arg0: i32) -> (i32, i32, i32) {
    %c0_i32 = arith.constant 0 : i32
    %c0_i32_0 = arith.constant 0 : i32
    %c0_i32_1 = arith.constant 0 : i32
    %c0_i32_2 = arith.constant 0 : i32
    return %c0_i32, %c0_i32_0, %c0_i32_1 : i32, i32, i32
  }
  func.func @transform_4(%arg0: i32) -> (i32, i32, i32) {
    %c0_i32 = arith.constant 0 : i32
    %c0_i32_0 = arith.constant 0 : i32
    %c0_i32_1 = arith.constant 0 : i32
    %c0_i32_2 = arith.constant 0 : i32
    return %c0_i32, %c0_i32_0, %c0_i32_1 : i32, i32, i32
  }
  func.func @transform_5(%arg0: i32) -> (i32, i32, i32) {
    %c0_i32 = arith.constant 0 : i32
    %c0_i32_0 = arith.constant 0 : i32
    %c0_i32_1 = arith.constant 0 : i32
    %c0_i32_2 = arith.constant 0 : i32
    return %c0_i32, %c0_i32_0, %c0_i32_1 : i32, i32, i32
  }
  func.func @transform_6(%arg0: i32) -> (i32, i32, i32) {
    %c0_i32 = arith.constant 0 : i32
    %c0_i32_0 = arith.constant 0 : i32
    %c0_i32_1 = arith.constant 0 : i32
    return %c0_i32, %arg0, %c0_i32_0 : i32, i32, i32
  }
}

</mosaic_0001>

<llo_original>
// kernel: tpu_custom_call.1
$region0: #{tpu_custom_call.1}
  #allocation0 [shape = 'u32[]', space=smem, size = 0x4, offset = 0x4, fixed_abs, tag = 'smem constant byte address 0x4 - core index']
  #allocation1 [shape = 'u32[144,128]{1,0:T(1,128)}', space=vmem, size = 0x12000, scoped, tag = 'internal scratch']
  #allocation14 [shape = 's32[]', space=sflag, size = 0x4, offset = 0, fixed_abs, tag = 'sflag constant byte address 0x0 - dummy sync flag']
  #allocation16 [shape = 's32[]', space=sflag, size = 0x4, offset = 0, fixed_abs, tag = 'sflag constant byte address 0x0 - dummy sync flag']
  %s0 = inlined_call_operand.hbm [shape: bf16[2,256,128], index: 0, kind: input, shape index: {}]
  %s1 = inlined_call_operand.hbm [shape: bf16[3,32,32], index: 1, kind: input, shape index: {}]
  %s2 = inlined_call_operand.hbm [shape: bf16[3,128,128], index: 2, kind: input, shape index: {}]
  %s3 = inlined_call_operand.hbm [shape: bf16[2,32,128], index: 3, kind: input, shape index: {}]
  %s4 = inlined_call_operand.hbm [shape: bf16[3,32,32], index: 4, kind: input, shape index: {}]
  %s5 = inlined_call_operand.hbm [shape: bf16[3,128,128], index: 5, kind: input, shape index: {}]
  %s6 = inlined_call_operand.hbm [shape: f32[2,256,128], index: 6, kind: output, shape index: {}]
  %s7 = sld [smem:[#allocation0]]
  $region81: #{tpu_custom_call.1} parent=0
    _
  %s9 = ssub.s32 1, %s7
  %s10 = scalar_select 0, %s9, %s7
  $region1: #{tpu_custom_call.1} parent=0
    #allocation2 [shape = 'u8[65536]{0}', space=vmem, size = 0x10000, scoped, tag = 'input window, operand 0']
    #allocation3 [shape = 's32[2]{0}', space=sflag, size = 0x8, scoped, tag = 'scoped memory for tpu_custom_call.1']
    #allocation4 [shape = 's32[2]{0}', space=sflag, size = 0x8, scoped, tag = 'scoped memory for tpu_custom_call.1']
    #allocation5 [shape = 'u8[24576]{0}', space=vmem, size = 0x6000, scoped, tag = 'input window, operand 1, single buffered']
    #allocation6 [shape = 's32[1]{0}', space=sflag, size = 0x4, scoped, tag = 'scoped memory for tpu_custom_call.1']
    #allocation7 [shape = 'u8[98304]{0}', space=vmem, size = 0x18000, scoped, tag = 'input window, operand 2, single buffered']
    #allocation8 [shape = 'u8[16384]{0}', space=vmem, size = 0x4000, scoped, tag = 'input window, operand 3, single buffered']
    #allocation9 [shape = 's32[1]{0}', space=sflag, size = 0x4, scoped, tag = 'scoped memory for tpu_custom_call.1']
    #allocation10 [shape = 'u8[24576]{0}', space=vmem, size = 0x6000, scoped, tag = 'input window, operand 4, single buffered']
    #allocation11 [shape = 'u8[98304]{0}', space=vmem, size = 0x18000, scoped, tag = 'input window, operand 5, single buffered']
    #allocation12 [shape = 's32[1]{0}', space=sflag, size = 0x4, scoped, tag = 'scoped memory for tpu_custom_call.1']
    #allocation13 [shape = 'u8[131072]{0}', space=vmem, size = 0x20000, scoped, tag = 'output window, operand 0']
    %11 = vsyncpa [#allocation3], 0
    %s12 = scalar_lea.sflag [#allocation3], 1
    %13 = vsyncpa %s12, 0
    %14 = vsyncpa [#allocation6], 0
    %15 = vsyncpa [#allocation9], 0
    %16 = vsyncpa [#allocation12], 0
    %17 = vsyncpa [#allocation4], 0
    %s18 = scalar_lea.sflag [#allocation4], 1
    %19 = vsyncpa %s18, 0
    loop: start=0, step=1, limit=6
    $region2: #{tpu_custom_call.1} parent=1 // loop_pre_header
      _
    $region3: #{tpu_custom_call.1} parent=1 // loop_header
      %s21 = sphi 0, %s25
      %p22 = scmp.ge.s32.totalorder %s21, 6
      %s31 = sphi 0, %s33
      %s34 = sphi 0, %s31
      %s35 = sphi 0, %s34
      %s51 = sphi 0, %s35
      %s55 = sphi 0, %s55
      %s57 = sphi 0, %s55
      %s58 = sphi 0, %s57
      %s72 = sphi 0, %s58
      %s76 = sphi 0, %s76
      %s78 = sphi 0, %s76
      %s79 = sphi 0, %s78
      %s93 = sphi 0, %s79
      %s97 = sphi 0, %s97
      %s99 = sphi 0, %s97
      %s100 = sphi 0, %s99
      %s114 = sphi 0, %s100
      %s118 = sphi 0, %s118
      %s120 = sphi 0, %s118
      %s121 = sphi 0, %s120
      %s135 = sphi 0, %s121
      %s139 = sphi 0, %s139
      %s141 = sphi 0, %s139
      %s142 = sphi 0, %s141
      %s156 = sphi 0, %s142
      %s162 = sphi 0, %s164
      %s165 = sphi 0, %s162
      %s166 = sphi 0, %s165
      %s182 = sphi 0, %s166
    $region4: #{tpu_custom_call.1} parent=1 // loop_header_branch
      %24 = sbr.rel (%p22) target = $region8
    $region5: #{tpu_custom_call.1} parent=1 // loop_body
      %s26 = ssub.s32 %s21, 1
      %s27 = ssub.s32 %s21, 2
      %s28 = sadd.s32 %s21, 1
      %s29 = ssub.s32 %s21, %s28
      %p30 = scmp.eq.s32.totalorder %s29, 0
      %s32 = sadd.s32 %s31, 1
      %s33 = scalar_select %p30, %s31, %s32
      %p36 = pneg %p30
      %p37 = scmp.eq.s32.totalorder %s21, 3
      %p38 = por %p36, %p37
      %p39 = scmp.ne.s32.totalorder %s31, %s34
      %p40 = scmp.eq.s32.totalorder %s21, 0
      %p41 = por %p39, %p40
      %p42 = scmp.ne.s32.totalorder %s31, %s34
      %p43 = scmp.eq.s32.totalorder %s26, 3
      %p44 = por %p42, %p43
      %p45 = scmp.ne.s32.totalorder %s34, %s35
      %p46 = scmp.eq.s32.totalorder %s26, 0
      %p47 = por %p45, %p46
      %p48 = scmp.ne.s32.totalorder %s34, %s35
      %p49 = scmp.eq.s32.totalorder %s27, 3
      %p50 = por %p48, %p49
      %p52 = scmp.ne.s32.totalorder %s35, %s51
      %p53 = scmp.eq.s32.totalorder %s27, 0
      %p54 = por %p52, %p53
      %s56 = sadd.s32 %s55, 1
      %p59 = scmp.eq.s32.totalorder %s21, 3
      %p60 = scmp.ne.s32.totalorder %s55, %s57
      %p61 = scmp.eq.s32.totalorder %s21, 0
      %p62 = por %p60, %p61
      %p63 = scmp.ne.s32.totalorder %s55, %s57
      %p64 = scmp.eq.s32.totalorder %s26, 3
      %p65 = por %p63, %p64
      %p66 = scmp.ne.s32.totalorder %s57, %s58
      %p67 = scmp.eq.s32.totalorder %s26, 0
      %p68 = por %p66, %p67
      %p69 = scmp.ne.s32.totalorder %s57, %s58
      %p70 = scmp.eq.s32.totalorder %s27, 3
      %p71 = por %p69, %p70
      %p73 = scmp.ne.s32.totalorder %s58, %s72
      %p74 = scmp.eq.s32.totalorder %s27, 0
      %p75 = por %p73, %p74
      %s77 = sadd.s32 %s76, 1
      %p80 = scmp.eq.s32.totalorder %s21, 3
      %p81 = scmp.ne.s32.totalorder %s76, %s78
      %p82 = scmp.eq.s32.totalorder %s21, 0
      %p83 = por %p81, %p82
      %p84 = scmp.ne.s32.totalorder %s76, %s78
      %p85 = scmp.eq.s32.totalorder %s26, 3
      %p86 = por %p84, %p85
      %p87 = scmp.ne.s32.totalorder %s78, %s79
      %p88 = scmp.eq.s32.totalorder %s26, 0
      %p89 = por %p87, %p88
      %p90 = scmp.ne.s32.totalorder %s78, %s79
      %p91 = scmp.eq.s32.totalorder %s27, 3
      %p92 = por %p90, %p91
      %p94 = scmp.ne.s32.totalorder %s79, %s93
      %p95 = scmp.eq.s32.totalorder %s27, 0
      %p96 = por %p94, %p95
      %s98 = sadd.s32 %s97, 1
      %p101 = scmp.eq.s32.totalorder %s21, 3
      %p102 = scmp.ne.s32.totalorder %s97, %s99
      %p103 = scmp.eq.s32.totalorder %s21, 0
      %p104 = por %p102, %p103
      %p105 = scmp.ne.s32.totalorder %s97, %s99
      %p106 = scmp.eq.s32.totalorder %s26, 3
      %p107 = por %p105, %p106
      %p108 = scmp.ne.s32.totalorder %s99, %s100
      %p109 = scmp.eq.s32.totalorder %s26, 0
      %p110 = por %p108, %p109
      %p111 = scmp.ne.s32.totalorder %s99, %s100
      %p112 = scmp.eq.s32.totalorder %s27, 3
      %p113 = por %p111, %p112
      %p115 = scmp.ne.s32.totalorder %s100, %s114
      %p116 = scmp.eq.s32.totalorder %s27, 0
      %p117 = por %p115, %p116
      %s119 = sadd.s32 %s118, 1
      %p122 = scmp.eq.s32.totalorder %s21, 3
      %p123 = scmp.ne.s32.totalorder %s118, %s120
      %p124 = scmp.eq.s32.totalorder %s21, 0
      %p125 = por %p123, %p124
      %p126 = scmp.ne.s32.totalorder %s118, %s120
      %p127 = scmp.eq.s32.totalorder %s26, 3
      %p128 = por %p126, %p127
      %p129 = scmp.ne.s32.totalorder %s120, %s121
      %p130 = scmp.eq.s32.totalorder %s26, 0
      %p131 = por %p129, %p130
      %p132 = scmp.ne.s32.totalorder %s120, %s121
      %p133 = scmp.eq.s32.totalorder %s27, 3
      %p134 = por %p132, %p133
      %p136 = scmp.ne.s32.totalorder %s121, %s135
      %p137 = scmp.eq.s32.totalorder %s27, 0
      %p138 = por %p136, %p137
      %s140 = sadd.s32 %s139, 1
      %p143 = scmp.eq.s32.totalorder %s21, 3
      %p144 = scmp.ne.s32.totalorder %s139, %s141
      %p145 = scmp.eq.s32.totalorder %s21, 0
      %p146 = por %p144, %p145
      %p147 = scmp.ne.s32.totalorder %s139, %s141
      %p148 = scmp.eq.s32.totalorder %s26, 3
      %p149 = por %p147, %p148
      %p150 = scmp.ne.s32.totalorder %s141, %s142
      %p151 = scmp.eq.s32.totalorder %s26, 0
      %p152 = por %p150, %p151
      %p153 = scmp.ne.s32.totalorder %s141, %s142
      %p154 = scmp.eq.s32.totalorder %s27, 3
      %p155 = por %p153, %p154
      %p157 = scmp.ne.s32.totalorder %s142, %s156
      %p158 = scmp.eq.s32.totalorder %s27, 0
      %p159 = por %p157, %p158
      %s160 = ssub.s32 %s21, %s28
      %p161 = scmp.eq.s32.totalorder %s160, 0
      %s163 = sadd.s32 %s162, 1
      %s164 = scalar_select %p161, %s162, %s163
      %p167 = pneg %p161
      %p168 = scmp.eq.s32.totalorder %s21, 3
      %p169 = por %p167, %p168
      %p170 = scmp.ne.s32.totalorder %s162, %s165
      %p171 = scmp.eq.s32.totalorder %s21, 0
      %p172 = por %p170, %p171
      %p173 = scmp.ne.s32.totalorder %s162, %s165
      %p174 = scmp.eq.s32.totalorder %s26, 3
      %p175 = por %p173, %p174
      %p176 = scmp.ne.s32.totalorder %s165, %s166
      %p177 = scmp.eq.s32.totalorder %s26, 0
      %p178 = por %p176, %p177
      %p179 = scmp.ne.s32.totalorder %s165, %s166
      %p180 = scmp.eq.s32.totalorder %s27, 3
      %p181 = por %p179, %p180
      %p183 = scmp.ne.s32.totalorder %s166, %s182
      %p184 = scmp.eq.s32.totalorder %s27, 0
      %p185 = por %p183, %p184
      %p186 = scmp.le.s32.totalorder 1, %s21
      %p187 = scmp.lt.s32.totalorder %s21, 5
      %p188 = pnand %p186, %p187
      %p189 = pneg %p188
      // Predicated region
      $region9: #{tpu_custom_call.1} parent=5 // pred_check
        _
      $region10: #{tpu_custom_call.1} parent=5 // pred_check_branch
        %191 = sbr.rel (%p188) target = $region12
      $region11: #{tpu_custom_call.1} parent=5 // pred_region
        %s192 = ssub.s32 %s21, 1
        // Predicated region
        $region13: #{tpu_custom_call.1} parent=11 // pred_check
          %p193 = pneg %p68
        $region14: #{tpu_custom_call.1} parent=11 // pred_check_branch
          %195 = sbr.rel (%p193) target = $region16
        $region15: #{tpu_custom_call.1} parent=11 // pred_region
          %s197 = ssub.s32 768, 768
          %198 = vsyncadd [#allocation6], %s197
          %s199 = sshll.u32 [#allocation5], 4
          %s200 = int_to_ptr.vmem [resolvable:$true] %s199
          %205 = dma.hbm_to_vmem [thread:$0]  %s1, 768, %s200, [#allocation6], 64, 64, 4
        $region16: #{tpu_custom_call.1} parent=11 // pred_fallthru
          _
        // Predicated region
        $region17: #{tpu_custom_call.1} parent=11 // pred_check
          %p206 = pneg %p89
        $region18: #{tpu_custom_call.1} parent=11 // pred_check_branch
          %208 = sbr.rel (%p206) target = $region20
        $region19: #{tpu_custom_call.1} parent=11 // pred_region
          %s210 = ssub.s32 3072, 3072
          %211 = vsyncadd [#allocation6], %s210
          %s212 = sshll.u32 [#allocation7], 4
          %s213 = int_to_ptr.vmem [resolvable:$true] %s212
          %218 = dma.hbm_to_vmem [thread:$0]  %s2, 3072, %s213, [#allocation6], 64, 64, 4
        $region20: #{tpu_custom_call.1} parent=11 // pred_fallthru
          _
        // Predicated region
        $region21: #{tpu_custom_call.1} parent=11 // pred_check
          %p219 = pneg %p110
        $region22: #{tpu_custom_call.1} parent=11 // pred_check_branch
          %221 = sbr.rel (%p219) target = $region24
        $region23: #{tpu_custom_call.1} parent=11 // pred_region
          %s223 = ssub.s32 512, 512
          %224 = vsyncadd [#allocation9], %s223
          %s225 = sshll.u32 [#allocation8], 4
          %s226 = int_to_ptr.vmem [resolvable:$true] %s225
          %231 = dma.hbm_to_vmem [thread:$0]  %s3, 512, %s226, [#allocation9], 64, 64, 4
        $region24: #{tpu_custom_call.1} parent=11 // pred_fallthru
          _
        // Predicated region
        $region25: #{tpu_custom_call.1} parent=11 // pred_check
          %p232 = pneg %p131
        $region26: #{tpu_custom_call.1} parent=11 // pred_check_branch
          %234 = sbr.rel (%p232) target = $region28
        $region27: #{tpu_custom_call.1} parent=11 // pred_region
          %s236 = ssub.s32 768, 768
          %237 = vsyncadd [#allocation9], %s236
          %s238 = sshll.u32 [#allocation10], 4
          %s239 = int_to_ptr.vmem [resolvable:$true] %s238
          %244 = dma.hbm_to_vmem [thread:$0]  %s4, 768, %s239, [#allocation9], 64, 64, 4
        $region28: #{tpu_custom_call.1} parent=11 // pred_fallthru
          _
        // Predicated region
        $region29: #{tpu_custom_call.1} parent=11 // pred_check
          %p245 = pneg %p152
        $region30: #{tpu_custom_call.1} parent=11 // pred_check_branch
          %247 = sbr.rel (%p245) target = $region32
        $region31: #{tpu_custom_call.1} parent=11 // pred_region
          %s249 = ssub.s32 3072, 3072
          %250 = vsyncadd [#allocation12], %s249
          %s251 = sshll.u32 [#allocation11], 4
          %s252 = int_to_ptr.vmem [resolvable:$true] %s251
          %257 = dma.hbm_to_vmem [thread:$0]  %s5, 3072, %s252, [#allocation12], 64, 64, 4
        $region32: #{tpu_custom_call.1} parent=11 // pred_fallthru
          _
      $region12: #{tpu_custom_call.1} parent=5 // pred_fallthru
        _
      %p258 = scmp.lt.s32.totalorder %s21, 4
      // Predicated region
      $region33: #{tpu_custom_call.1} parent=5 // pred_check
        %p259 = pneg %p258
      $region34: #{tpu_custom_call.1} parent=5 // pred_check_branch
        %261 = sbr.rel (%p259) target = $region36
      $region35: #{tpu_custom_call.1} parent=5 // pred_region
        // Predicated region
        $region37: #{tpu_custom_call.1} parent=35 // pred_check
          %p262 = pneg %p41
        $region38: #{tpu_custom_call.1} parent=35 // pred_check_branch
          %264 = sbr.rel (%p262) target = $region40
        $region39: #{tpu_custom_call.1} parent=35 // pred_region
          #allocation15 [shape = 'u32[6]{0}', space=smem, size = 0x18, scoped, tag = 'DMA stride descriptor']
          %s265 = sand.u32 %s31, 1
          %s266 = scalar_lea.sflag [#allocation3], %s265
          %s267 = sand.u32 %s31, 1
          %s268 = smul.addr %s267, 64
          %s269 = scalar_lea.vmem [#allocation2], %s268
          %s270 = smul.u32 8, %s21
          %s272 = ssub.s32 1024, 1024
          %273 = vsyncadd %s266, %s272
          %s274 = smul.addr %s270, 64
          %s275 = scalar_lea.hbm %s0, %s274
          %s277 = sshll.u32 1, 14
          %s278 = sxor.u32 4294967295, %s277
          %s280 = sld [smem:[#allocation0]]
          %s281 = sadd.s32 2, %s280
          %s283 = sshll.u32 7, 26
          %s284 = sxor.u32 4294967295, %s283
          %s285 = sand.u32 0, %s284
          %s286 = sshll.u32 %s281, 26
          %s287 = sor.u32 %s285, %s286
          %s288 = sshll.u32 %s269, 4
          %s289 = int_to_ptr.vmem [resolvable:$true] %s288
          %295 = sst [smem:[#allocation15]] 2048
          %s296 = scalar_lea.smem [#allocation15], 1
          %297 = sst [smem:[%s296]] 512
          %s298 = scalar_lea.smem [#allocation15], 2
          %299 = sst [smem:[%s298]] 8
          %s300 = scalar_lea.smem [#allocation15], 3
          %301 = sst [smem:[%s300]] 64
          %s302 = scalar_lea.smem [#allocation15], 4
          %303 = sst [smem:[%s302]] 64
          %s304 = scalar_lea.smem [#allocation15], 5
          %305 = sst [smem:[%s304]] 4
          %307 = dma.general %s275, 1024, %s289, %s266, [#allocation14], [#allocation15], %s287, 0
        $region40: #{tpu_custom_call.1} parent=35 // pred_fallthru
          _
      $region36: #{tpu_custom_call.1} parent=5 // pred_fallthru
        _
      %p308 = scmp.le.s32.totalorder 1, %s21
      %p309 = scmp.lt.s32.totalorder %s21, 5
      %p310 = pnand %p308, %p309
      %p311 = pneg %p310
      // Predicated region
      $region41: #{tpu_custom_call.1} parent=5 // pred_check
        _
      $region42: #{tpu_custom_call.1} parent=5 // pred_check_branch
        %313 = sbr.rel (%p310) target = $region44
      $region43: #{tpu_custom_call.1} parent=5 // pred_region
        %s314 = ssub.s32 %s21, 1
        %s315 = sand.u32 %s34, 1
        %s316 = scalar_lea.sflag [#allocation3], %s315
        %s317 = sand.u32 %s34, 1
        %s318 = smul.addr %s317, 64
        %s319 = scalar_lea.vmem [#allocation2], %s318
        // Predicated region
        $region45: #{tpu_custom_call.1} parent=43 // pred_check
          %p320 = pneg %p47
        $region46: #{tpu_custom_call.1} parent=43 // pred_check_branch
          %322 = sbr.rel (%p320) target = $region48
        $region47: #{tpu_custom_call.1} parent=43 // pred_region
          %323 = dma.done %s316, 1024
        $region48: #{tpu_custom_call.1} parent=43 // pred_fallthru
          _
        // Predicated region
        $region49: #{tpu_custom_call.1} parent=43 // pred_check
          %p324 = pneg %p68
        $region50: #{tpu_custom_call.1} parent=43 // pred_check_branch
          %326 = sbr.rel (%p324) target = $region52
        $region51: #{tpu_custom_call.1} parent=43 // pred_region
          %327 = dma.done [#allocation6], 768
        $region52: #{tpu_custom_call.1} parent=43 // pred_fallthru
          _
        // Predicated region
        $region53: #{tpu_custom_call.1} parent=43 // pred_check
          %p328 = pneg %p89
        $region54: #{tpu_custom_call.1} parent=43 // pred_check_branch
          %330 = sbr.rel (%p328) target = $region56
        $region55: #{tpu_custom_call.1} parent=43 // pred_region
          %331 = dma.done [#allocation6], 3072
        $region56: #{tpu_custom_call.1} parent=43 // pred_fallthru
          _
        // Predicated region
        $region57: #{tpu_custom_call.1} parent=43 // pred_check
          %p332 = pneg %p110
        $region58: #{tpu_custom_call.1} parent=43 // pred_check_branch
          %334 = sbr.rel (%p332) target = $region60
        $region59: #{tpu_custom_call.1} parent=43 // pred_region
          %335 = dma.done [#allocation9], 512
        $region60: #{tpu_custom_call.1} parent=43 // pred_fallthru
          _
        // Predicated region
        $region61: #{tpu_custom_call.1} parent=43 // pred_check
          %p336 = pneg %p131
        $region62: #{tpu_custom_call.1} parent=43 // pred_check_branch
          %338 = sbr.rel (%p336) target = $region64
        $region63: #{tpu_custom_call.1} parent=43 // pred_region
          %339 = dma.done [#allocation9], 768
        $region64: #{tpu_custom_call.1} parent=43 // pred_fallthru
          _
        // Predicated region
        $region65: #{tpu_custom_call.1} parent=43 // pred_check
          %p340 = pneg %p152
        $region66: #{tpu_custom_call.1} parent=43 // pred_check_branch
          %342 = sbr.rel (%p340) target = $region68
        $region67: #{tpu_custom_call.1} parent=43 // pred_region
          %343 = dma.done [#allocation12], 3072
        $region68: #{tpu_custom_call.1} parent=43 // pred_fallthru
          _
        %s344 = sand.u32 %s34, 1
        %s345 = scalar_lea.sflag [#allocation3], %s344
        %s346 = sand.u32 %s34, 1
        %s347 = smul.addr %s346, 64
        %s348 = scalar_lea.vmem [#allocation2], %s347
        %p349 = pneg %p47
        %p350 = pneg %p44
        %p351 = pneg %p68
        %p352 = pneg %p65
        %p353 = pneg %p89
        %p354 = pneg %p86
        %p355 = pneg %p110
        %p356 = pneg %p107
        %p357 = pneg %p131
        %p358 = pneg %p128
        %p359 = pneg %p152
        %p360 = pneg %p149
        %p361 = pneg %p178
        %p362 = pneg %p175
        %s363 = sand.u32 %s165, 1
        %s364 = scalar_lea.sflag [#allocation4], %s363
        %s365 = sand.u32 %s165, 1
        %s366 = smul.addr %s365, 128
        %s367 = scalar_lea.vmem [#allocation13], %s366
        %s368 = smul.u32 8, %s26
        %s369 = smul.u32 8, %s26
        %v371 = vld [vmem:[#allocation7] sm:$0xf]
        %v372 = vld [vmem:[#allocation7 + $0x4] sm:$0xf]
        %v373 = vld [vmem:[#allocation7 + $0x8] sm:$0xf]
        %v374 = vld [vmem:[#allocation7 + $0xc] sm:$0xf]
        %v375 = vld [vmem:[#allocation7 + $0x10] sm:$0xf]
        %v376 = vld [vmem:[#allocation7 + $0x14] sm:$0xf]
        %v377 = vld [vmem:[#allocation7 + $0x18] sm:$0xf]
        %v378 = vld [vmem:[#allocation7 + $0x1c] sm:$0xf]
        %v379 = vld [vmem:[#allocation7 + $0x20] sm:$0xf]
        %v380 = vld [vmem:[#allocation7 + $0x24] sm:$0xf]
        %v381 = vld [vmem:[#allocation7 + $0x28] sm:$0xf]
        %v382 = vld [vmem:[#allocation7 + $0x2c] sm:$0xf]
        %v383 = vld [vmem:[#allocation7 + $0x30] sm:$0xf]
        %v384 = vld [vmem:[#allocation7 + $0x34] sm:$0xf]
        %v385 = vld [vmem:[#allocation7 + $0x38] sm:$0xf]
        %v386 = vld [vmem:[#allocation7 + $0x3c] sm:$0xf]
        %s387 = scalar_lea.vmem [#allocation7], 64
        %v388 = vld [vmem:[%s387] sm:$0xf]
        %v389 = vld [vmem:[%s387 + $0x4] sm:$0xf]
        %v390 = vld [vmem:[%s387 + $0x8] sm:$0xf]
        %v391 = vld [vmem:[%s387 + $0xc] sm:$0xf]
        %v392 = vld [vmem:[%s387 + $0x10] sm:$0xf]
        %v393 = vld [vmem:[%s387 + $0x14] sm:$0xf]
        %v394 = vld [vmem:[%s387 + $0x18] sm:$0xf]
        %v395 = vld [vmem:[%s387 + $0x1c] sm:$0xf]
        %v396 = vld [vmem:[%s387 + $0x20] sm:$0xf]
        %v397 = vld [vmem:[%s387 + $0x24] sm:$0xf]
        %v398 = vld [vmem:[%s387 + $0x28] sm:$0xf]
        %v399 = vld [vmem:[%s387 + $0x2c] sm:$0xf]
        %v400 = vld [vmem:[%s387 + $0x30] sm:$0xf]
        %v401 = vld [vmem:[%s387 + $0x34] sm:$0xf]
        %v402 = vld [vmem:[%s387 + $0x38] sm:$0xf]
        %v403 = vld [vmem:[%s387 + $0x3c] sm:$0xf]
        %s404 = scalar_lea.vmem [#allocation7], 128
        %v405 = vld [vmem:[%s404] sm:$0xf]
        %v406 = vld [vmem:[%s404 + $0x4] sm:$0xf]
        %v407 = vld [vmem:[%s404 + $0x8] sm:$0xf]
        %v408 = vld [vmem:[%s404 + $0xc] sm:$0xf]
        %v409 = vld [vmem:[%s404 + $0x10] sm:$0xf]
        %v410 = vld [vmem:[%s404 + $0x14] sm:$0xf]
        %v411 = vld [vmem:[%s404 + $0x18] sm:$0xf]
        %v412 = vld [vmem:[%s404 + $0x1c] sm:$0xf]
        %v413 = vld [vmem:[%s404 + $0x20] sm:$0xf]
        %v414 = vld [vmem:[%s404 + $0x24] sm:$0xf]
        %v415 = vld [vmem:[%s404 + $0x28] sm:$0xf]
        %v416 = vld [vmem:[%s404 + $0x2c] sm:$0xf]
        %v417 = vld [vmem:[%s404 + $0x30] sm:$0xf]
        %v418 = vld [vmem:[%s404 + $0x34] sm:$0xf]
        %v419 = vld [vmem:[%s404 + $0x38] sm:$0xf]
        %v420 = vld [vmem:[%s404 + $0x3c] sm:$0xf]
        %v421 = vld [vmem:[#allocation5] sm:$0xf]
        %v422 = vld [vmem:[#allocation5 + $0x4] sm:$0xf]
        %v423 = vld [vmem:[#allocation5 + $0x8] sm:$0xf]
        %v424 = vld [vmem:[#allocation5 + $0xc] sm:$0xf]
        %s425 = scalar_lea.vmem [#allocation5], 16
        %v426 = vld [vmem:[%s425] sm:$0xf]
        %v427 = vld [vmem:[%s425 + $0x4] sm:$0xf]
        %v428 = vld [vmem:[%s425 + $0x8] sm:$0xf]
        %v429 = vld [vmem:[%s425 + $0xc] sm:$0xf]
        %s430 = scalar_lea.vmem [#allocation5], 32
        %v431 = vld [vmem:[%s430] sm:$0xf]
        %v432 = vld [vmem:[%s430 + $0x4] sm:$0xf]
        %v433 = vld [vmem:[%s430 + $0x8] sm:$0xf]
        %v434 = vld [vmem:[%s430 + $0xc] sm:$0xf]
        %v435 = vld [vmem:[#allocation10] sm:$0xf]
        %v436 = vld [vmem:[#allocation10 + $0x4] sm:$0xf]
        %v437 = vld [vmem:[#allocation10 + $0x8] sm:$0xf]
        %v438 = vld [vmem:[#allocation10 + $0xc] sm:$0xf]
        %s439 = scalar_lea.vmem [#allocation10], 16
        %v440 = vld [vmem:[%s439] sm:$0xf]
        %v441 = vld [vmem:[%s439 + $0x4] sm:$0xf]
        %v442 = vld [vmem:[%s439 + $0x8] sm:$0xf]
        %v443 = vld [vmem:[%s439 + $0xc] sm:$0xf]
        %s444 = scalar_lea.vmem [#allocation10], 32
        %v445 = vld [vmem:[%s444] sm:$0xf]
        %v446 = vld [vmem:[%s444 + $0x4] sm:$0xf]
        %v447 = vld [vmem:[%s444 + $0x8] sm:$0xf]
        %v448 = vld [vmem:[%s444 + $0xc] sm:$0xf]
        %v449 = vld [vmem:[#allocation11] sm:$0xf]
        %v450 = vld [vmem:[#allocation11 + $0x4] sm:$0xf]
        %v451 = vld [vmem:[#allocation11 + $0x8] sm:$0xf]
        %v452 = vld [vmem:[#allocation11 + $0xc] sm:$0xf]
        %v453 = vld [vmem:[#allocation11 + $0x10] sm:$0xf]
        %v454 = vld [vmem:[#allocation11 + $0x14] sm:$0xf]
        %v455 = vld [vmem:[#allocation11 + $0x18] sm:$0xf]
        %v456 = vld [vmem:[#allocation11 + $0x1c] sm:$0xf]
        %v457 = vld [vmem:[#allocation11 + $0x20] sm:$0xf]
        %v458 = vld [vmem:[#allocation11 + $0x24] sm:$0xf]
        %v459 = vld [vmem:[#allocation11 + $0x28] sm:$0xf]
        %v460 = vld [vmem:[#allocation11 + $0x2c] sm:$0xf]
        %v461 = vld [vmem:[#allocation11 + $0x30] sm:$0xf]
        %v462 = vld [vmem:[#allocation11 + $0x34] sm:$0xf]
        %v463 = vld [vmem:[#allocation11 + $0x38] sm:$0xf]
        %v464 = vld [vmem:[#allocation11 + $0x3c] sm:$0xf]
        %s465 = scalar_lea.vmem [#allocation11], 64
        %v466 = vld [vmem:[%s465] sm:$0xf]
        %v467 = vld [vmem:[%s465 + $0x4] sm:$0xf]
        %v468 = vld [vmem:[%s465 + $0x8] sm:$0xf]
        %v469 = vld [vmem:[%s465 + $0xc] sm:$0xf]
        %v470 = vld [vmem:[%s465 + $0x10] sm:$0xf]
        %v471 = vld [vmem:[%s465 + $0x14] sm:$0xf]
        %v472 = vld [vmem:[%s465 + $0x18] sm:$0xf]
        %v473 = vld [vmem:[%s465 + $0x1c] sm:$0xf]
        %v474 = vld [vmem:[%s465 + $0x20] sm:$0xf]
        %v475 = vld [vmem:[%s465 + $0x24] sm:$0xf]
        %v476 = vld [vmem:[%s465 + $0x28] sm:$0xf]
        %v477 = vld [vmem:[%s465 + $0x2c] sm:$0xf]
        %v478 = vld [vmem:[%s465 + $0x30] sm:$0xf]
        %v479 = vld [vmem:[%s465 + $0x34] sm:$0xf]
        %v480 = vld [vmem:[%s465 + $0x38] sm:$0xf]
        %v481 = vld [vmem:[%s465 + $0x3c] sm:$0xf]
        %s482 = scalar_lea.vmem [#allocation11], 128
        %v483 = vld [vmem:[%s482] sm:$0xf]
        %v484 = vld [vmem:[%s482 + $0x4] sm:$0xf]
        %v485 = vld [vmem:[%s482 + $0x8] sm:$0xf]
        %v486 = vld [vmem:[%s482 + $0xc] sm:$0xf]
        %v487 = vld [vmem:[%s482 + $0x10] sm:$0xf]
        %v488 = vld [vmem:[%s482 + $0x14] sm:$0xf]
        %v489 = vld [vmem:[%s482 + $0x18] sm:$0xf]
        %v490 = vld [vmem:[%s482 + $0x1c] sm:$0xf]
        %v491 = vld [vmem:[%s482 + $0x20] sm:$0xf]
        %v492 = vld [vmem:[%s482 + $0x24] sm:$0xf]
        %v493 = vld [vmem:[%s482 + $0x28] sm:$0xf]
        %v494 = vld [vmem:[%s482 + $0x2c] sm:$0xf]
        %v495 = vld [vmem:[%s482 + $0x30] sm:$0xf]
        %v496 = vld [vmem:[%s482 + $0x34] sm:$0xf]
        %v497 = vld [vmem:[%s482 + $0x38] sm:$0xf]
        %v498 = vld [vmem:[%s482 + $0x3c] sm:$0xf]
        %v499 = vld [vmem:[#allocation8] sm:$0xf]
        %v500 = vld [vmem:[#allocation8 + $0x4] sm:$0xf]
        %v501 = vld [vmem:[#allocation8 + $0x8] sm:$0xf]
        %v502 = vld [vmem:[#allocation8 + $0xc] sm:$0xf]
        %v503 = vunpack.c.l.bf16 %v499
        %v504 = vunpack.c.l.bf16 %v500
        %v505 = vunpack.c.l.bf16 %v501
        %v506 = vunpack.c.l.bf16 %v502
        %s507 = scalar_lea.vmem [#allocation8], 16
        %v508 = vld [vmem:[%s507] sm:$0xf]
        %v509 = vld [vmem:[%s507 + $0x4] sm:$0xf]
        %v510 = vld [vmem:[%s507 + $0x8] sm:$0xf]
        %v511 = vld [vmem:[%s507 + $0xc] sm:$0xf]
        %v512 = vunpack.c.l.bf16 %v508
        %v513 = vunpack.c.l.bf16 %v509
        %v514 = vunpack.c.l.bf16 %v510
        %v515 = vunpack.c.l.bf16 %v511
        %v516 = vld [vmem:[%s319] sm:$0xf]
        %v517 = vld [vmem:[%s319 + $0x4] sm:$0xf]
        %v518 = vld [vmem:[%s319 + $0x8] sm:$0xf]
        %v519 = vld [vmem:[%s319 + $0xc] sm:$0xf]
        %v520 = vld [vmem:[%s319 + $0x10] sm:$0xf]
        %v521 = vld [vmem:[%s319 + $0x14] sm:$0xf]
        %v522 = vld [vmem:[%s319 + $0x18] sm:$0xf]
        %v523 = vld [vmem:[%s319 + $0x1c] sm:$0xf]
        %s524 = scalar_lea.vmem %s319, 32 [#allocation2]
        %v525 = vld [vmem:[%s524] sm:$0xf]
        %v526 = vld [vmem:[%s524 + $0x4] sm:$0xf]
        %v527 = vld [vmem:[%s524 + $0x8] sm:$0xf]
        %v528 = vld [vmem:[%s524 + $0xc] sm:$0xf]
        %v529 = vld [vmem:[%s524 + $0x10] sm:$0xf]
        %v530 = vld [vmem:[%s524 + $0x14] sm:$0xf]
        %v531 = vld [vmem:[%s524 + $0x18] sm:$0xf]
        %v532 = vld [vmem:[%s524 + $0x1c] sm:$0xf]
        %v541 = vunpack.c.l.b16 %v516
        %v542 = vunpack.c.l.b16 %v517
        %v543 = vunpack.c.l.b16 %v518
        %v544 = vunpack.c.l.b16 %v519
        %v545 = vunpack.c.l.b16 %v520
        %v546 = vunpack.c.l.b16 %v521
        %v547 = vunpack.c.l.b16 %v522
        %v548 = vunpack.c.l.b16 %v523
        %v549 = vpack.c.b16 %v542, %v541
        %v550 = vpack.c.b16 %v544, %v543
        %v551 = vpack.c.b16 %v546, %v545
        %v552 = vpack.c.b16 %v548, %v547
        %v573 = vunpack.c.l.b16 %v371
        %v574 = vunpack.c.l.b16 %v372
        %v575 = vunpack.c.l.b16 %v373
        %v576 = vunpack.c.l.b16 %v374
        %v577 = vunpack.c.l.b16 %v375
        %v578 = vunpack.c.l.b16 %v376
        %v579 = vunpack.c.l.b16 %v377
        %v580 = vunpack.c.l.b16 %v378
        %v581 = vunpack.c.l.b16 %v379
        %v582 = vunpack.c.l.b16 %v380
        %v583 = vunpack.c.l.b16 %v381
        %v584 = vunpack.c.l.b16 %v382
        %v585 = vunpack.c.l.b16 %v383
        %v586 = vunpack.c.l.b16 %v384
        %v587 = vunpack.c.l.b16 %v385
        %v588 = vunpack.c.l.b16 %v386
        %v589 = vpack.c.b16 %v574, %v573
        %v590 = vpack.c.b16 %v576, %v575
        %v591 = vpack.c.b16 %v578, %v577
        %v592 = vpack.c.b16 %v580, %v579
        %v593 = vpack.c.b16 %v582, %v581
        %v594 = vpack.c.b16 %v584, %v583
        %v595 = vpack.c.b16 %v586, %v585
        %v596 = vpack.c.b16 %v588, %v587
        %605 = vmatprep.subr.bf16.mxu0 0
        %606 = vmatpush1.bf16.msra.mxu0 %v589
        %607 = vmatprep.subr.bf16.mxu0 0
        %608 = vmatpush1.bf16.msra.mxu0 %v590
        %609 = vmatprep.subr.bf16.mxu0 0
        %610 = vmatpush1.bf16.msra.mxu0 %v591
        %611 = vmatprep.subr.bf16.mxu0 0
        %612 = vmatpush1.bf16.msra.mxu0 %v592
        %613 = vmatprep.subr.bf16.mxu0 0
        %614 = vmatpush1.bf16.msra.mxu0 %v593
        %615 = vmatprep.subr.bf16.mxu0 0
        %616 = vmatpush1.bf16.msra.mxu0 %v594
        %617 = vmatprep.subr.bf16.mxu0 0
        %618 = vmatpush1.bf16.msra.mxu0 %v595
        %619 = vmatprep.subr.bf16.mxu0 0
        %620 = vmatpush1.bf16.msra.mxu0 %v596
        %621 = vmatprep.subr.bf16.mxu0 0
        %622 = vmatpush1.bf16.msra.mxu0 0
        %623 = vmatprep.subr.bf16.mxu0 0
        %624 = vmatpush1.bf16.msra.mxu0 0
        %625 = vmatprep.subr.bf16.mxu0 0
        %626 = vmatpush1.bf16.msra.mxu0 0
        %627 = vmatprep.subr.bf16.mxu0 0
        %628 = vmatpush1.bf16.msra.mxu0 0
        %629 = vmatprep.subr.bf16.mxu0 0
        %630 = vmatpush1.bf16.msra.mxu0 0
        %631 = vmatprep.subr.bf16.mxu0 0
        %632 = vmatpush1.bf16.msra.mxu0 0
        %633 = vmatprep.subr.bf16.mxu0 0
        %634 = vmatpush1.bf16.msra.mxu0 0
        %635 = vmatprep.subr.bf16.mxu0 0
        %636 = vmatpush1.bf16.msra.mxu0 0
        %637 = vmatprep.mubr.bf16.mxu0 0
        %638 = vmatmul.mubr.bf16.gmra.mrb[0].mxu0 %v549
        %v639 = vpop.f32.mrb[0].mxu0
        %v640 = vadd.f32 0.0, %v639
        %v641 = vpop.f32.mrb[0].mxu0
        %v642 = vpop.f32.mrb[0].mxu0
        %v643 = vadd.f32 0.0, %v642
        %v644 = vpop.f32.mrb[0].mxu0
        %645 = vmatprep.mubr.bf16.mxu0 0
        %646 = vmatmul.mubr.bf16.gmra.mrb[0].mxu0 %v550
        %v647 = vpop.f32.mrb[0].mxu0
        %v648 = vadd.f32 0.0, %v647
        %v649 = vpop.f32.mrb[0].mxu0
        %v650 = vpop.f32.mrb[0].mxu0
        %v651 = vadd.f32 0.0, %v650
        %v652 = vpop.f32.mrb[0].mxu0
        %653 = vmatprep.mubr.bf16.mxu0 0
        %654 = vmatmul.mubr.bf16.gmra.mrb[0].mxu0 %v551
        %v655 = vpop.f32.mrb[0].mxu0
        %v656 = vadd.f32 0.0, %v655
        %v657 = vpop.f32.mrb[0].mxu0
        %v658 = vpop.f32.mrb[0].mxu0
        %v659 = vadd.f32 0.0, %v658
        %v660 = vpop.f32.mrb[0].mxu0
        %661 = vmatprep.mubr.bf16.mxu0 0
        %662 = vmatmul.mubr.bf16.gmra.mrb[0].mxu0 %v552
        %v663 = vpop.f32.mrb[0].mxu0
        %v664 = vadd.f32 0.0, %v663
        %v665 = vpop.f32.mrb[0].mxu0
        %v666 = vpop.f32.mrb[0].mxu0
        %v667 = vadd.f32 0.0, %v666
        %v668 = vpop.f32.mrb[0].mxu0
        %669 = vdwg.mxu0
        %v678 = vunpack.c.l.b16 %v525
        %v679 = vunpack.c.l.b16 %v526
        %v680 = vunpack.c.l.b16 %v527
        %v681 = vunpack.c.l.b16 %v528
        %v682 = vunpack.c.l.b16 %v529
        %v683 = vunpack.c.l.b16 %v530
        %v684 = vunpack.c.l.b16 %v531
        %v685 = vunpack.c.l.b16 %v532
        %v686 = vpack.c.b16 %v679, %v678
        %v687 = vpack.c.b16 %v681, %v680
        %v688 = vpack.c.b16 %v683, %v682
        %v689 = vpack.c.b16 %v685, %v684
        %v710 = vunpack.c.l.b16 %v388
        %v711 = vunpack.c.l.b16 %v389
        %v712 = vunpack.c.l.b16 %v390
        %v713 = vunpack.c.l.b16 %v391
        %v714 = vunpack.c.l.b16 %v392
        %v715 = vunpack.c.l.b16 %v393
        %v716 = vunpack.c.l.b16 %v394
        %v717 = vunpack.c.l.b16 %v395
        %v718 = vunpack.c.l.b16 %v396
        %v719 = vunpack.c.l.b16 %v397
        %v720 = vunpack.c.l.b16 %v398
        %v721 = vunpack.c.l.b16 %v399
        %v722 = vunpack.c.l.b16 %v400
        %v723 = vunpack.c.l.b16 %v401
        %v724 = vunpack.c.l.b16 %v402
        %v725 = vunpack.c.l.b16 %v403
        %v726 = vpack.c.b16 %v711, %v710
        %v727 = vpack.c.b16 %v713, %v712
        %v728 = vpack.c.b16 %v715, %v714
        %v729 = vpack.c.b16 %v717, %v716
        %v730 = vpack.c.b16 %v719, %v718
        %v731 = vpack.c.b16 %v721, %v720
        %v732 = vpack.c.b16 %v723, %v722
        %v733 = vpack.c.b16 %v725, %v724
        %742 = vmatprep.subr.bf16.mxu0 0
        %743 = vmatpush1.bf16.msra.mxu0 %v726
        %744 = vmatprep.subr.bf16.mxu0 0
        %745 = vmatpush1.bf16.msra.mxu0 %v727
        %746 = vmatprep.subr.bf16.mxu0 0
        %747 = vmatpush1.bf16.msra.mxu0 %v728
        %748 = vmatprep.subr.bf16.mxu0 0
        %749 = vmatpush1.bf16.msra.mxu0 %v729
        %750 = vmatprep.subr.bf16.mxu0 0
        %751 = vmatpush1.bf16.msra.mxu0 %v730
        %752 = vmatprep.subr.bf16.mxu0 0
        %753 = vmatpush1.bf16.msra.mxu0 %v731
        %754 = vmatprep.subr.bf16.mxu0 0
        %755 = vmatpush1.bf16.msra.mxu0 %v732
        %756 = vmatprep.subr.bf16.mxu0 0
        %757 = vmatpush1.bf16.msra.mxu0 %v733
        %758 = vmatprep.subr.bf16.mxu0 0
        %759 = vmatpush1.bf16.msra.mxu0 0
        %760 = vmatprep.subr.bf16.mxu0 0
        %761 = vmatpush1.bf16.msra.mxu0 0
        %762 = vmatprep.subr.bf16.mxu0 0
        %763 = vmatpush1.bf16.msra.mxu0 0
        %764 = vmatprep.subr.bf16.mxu0 0
        %765 = vmatpush1.bf16.msra.mxu0 0
        %766 = vmatprep.subr.bf16.mxu0 0
        %767 = vmatpush1.bf16.msra.mxu0 0
        %768 = vmatprep.subr.bf16.mxu0 0
        %769 = vmatpush1.bf16.msra.mxu0 0
        %770 = vmatprep.subr.bf16.mxu0 0
        %771 = vmatpush1.bf16.msra.mxu0 0
        %772 = vmatprep.subr.bf16.mxu0 0
        %773 = vmatpush1.bf16.msra.mxu0 0
        %774 = vmatprep.mubr.bf16.mxu0 0
        %775 = vmatmul.mubr.bf16.gmra.mrb[0].mxu0 %v686
        %v776 = vpop.f32.mrb[0].mxu0
        %v777 = vadd.f32 0.0, %v776
        %v778 = vpop.f32.mrb[0].mxu0
        %v779 = vpop.f32.mrb[0].mxu0
        %v780 = vadd.f32 0.0, %v779
        %v781 = vpop.f32.mrb[0].mxu0
        %782 = vmatprep.mubr.bf16.mxu0 0
        %783 = vmatmul.mubr.bf16.gmra.mrb[0].mxu0 %v687
        %v784 = vpop.f32.mrb[0].mxu0
        %v785 = vadd.f32 0.0, %v784
        %v786 = vpop.f32.mrb[0].mxu0
        %v787 = vpop.f32.mrb[0].mxu0
        %v788 = vadd.f32 0.0, %v787
        %v789 = vpop.f32.mrb[0].mxu0
        %790 = vmatprep.mubr.bf16.mxu0 0
        %791 = vmatmul.mubr.bf16.gmra.mrb[0].mxu0 %v688
        %v792 = vpop.f32.mrb[0].mxu0
        %v793 = vadd.f32 0.0, %v792
        %v794 = vpop.f32.mrb[0].mxu0
        %v795 = vpop.f32.mrb[0].mxu0
        %v796 = vadd.f32 0.0, %v795
        %v797 = vpop.f32.mrb[0].mxu0
        %798 = vmatprep.mubr.bf16.mxu0 0
        %799 = vmatmul.mubr.bf16.gmra.mrb[0].mxu0 %v689
        %v800 = vpop.f32.mrb[0].mxu0
        %v801 = vadd.f32 0.0, %v800
        %v802 = vpop.f32.mrb[0].mxu0
        %v803 = vpop.f32.mrb[0].mxu0
        %v804 = vadd.f32 0.0, %v803
        %v805 = vpop.f32.mrb[0].mxu0
        %806 = vdwg.mxu0
        %v807 = vadd.bf16 %v516, %v525
        %v808 = vadd.bf16 %v517, %v526
        %v809 = vadd.bf16 %v518, %v527
        %v810 = vadd.bf16 %v519, %v528
        %v811 = vadd.bf16 %v520, %v529
        %v812 = vadd.bf16 %v521, %v530
        %v813 = vadd.bf16 %v522, %v531
        %v814 = vadd.bf16 %v523, %v532
        %v823 = vunpack.c.l.b16 %v807
        %v824 = vunpack.c.l.b16 %v808
        %v825 = vunpack.c.l.b16 %v809
        %v826 = vunpack.c.l.b16 %v810
        %v827 = vunpack.c.l.b16 %v811
        %v828 = vunpack.c.l.b16 %v812
        %v829 = vunpack.c.l.b16 %v813
        %v830 = vunpack.c.l.b16 %v814
        %v831 = vpack.c.b16 %v824, %v823
        %v832 = vpack.c.b16 %v826, %v825
        %v833 = vpack.c.b16 %v828, %v827
        %v834 = vpack.c.b16 %v830, %v829
        %v855 = vunpack.c.l.b16 %v405
        %v856 = vunpack.c.l.b16 %v406
        %v857 = vunpack.c.l.b16 %v407
        %v858 = vunpack.c.l.b16 %v408
        %v859 = vunpack.c.l.b16 %v409
        %v860 = vunpack.c.l.b16 %v410
        %v861 = vunpack.c.l.b16 %v411
        %v862 = vunpack.c.l.b16 %v412
        %v863 = vunpack.c.l.b16 %v413
        %v864 = vunpack.c.l.b16 %v414
        %v865 = vunpack.c.l.b16 %v415
        %v866 = vunpack.c.l.b16 %v416
        %v867 = vunpack.c.l.b16 %v417
        %v868 = vunpack.c.l.b16 %v418
        %v869 = vunpack.c.l.b16 %v419
        %v870 = vunpack.c.l.b16 %v420
        %v871 = vpack.c.b16 %v856, %v855
        %v872 = vpack.c.b16 %v858, %v857
        %v873 = vpack.c.b16 %v860, %v859
        %v874 = vpack.c.b16 %v862, %v861
        %v875 = vpack.c.b16 %v864, %v863
        %v876 = vpack.c.b16 %v866, %v865
        %v877 = vpack.c.b16 %v868, %v867
        %v878 = vpack.c.b16 %v870, %v869
        %887 = vmatprep.subr.bf16.mxu0 0
        %888 = vmatpush1.bf16.msra.mxu0 %v871
        %889 = vmatprep.subr.bf16.mxu0 0
        %890 = vmatpush1.bf16.msra.mxu0 %v872
        %891 = vmatprep.subr.bf16.mxu0 0
        %892 = vmatpush1.bf16.msra.mxu0 %v873
        %893 = vmatprep.subr.bf16.mxu0 0
        %894 = vmatpush1.bf16.msra.mxu0 %v874
        %895 = vmatprep.subr.bf16.mxu0 0
        %896 = vmatpush1.bf16.msra.mxu0 %v875
        %897 = vmatprep.subr.bf16.mxu0 0
        %898 = vmatpush1.bf16.msra.mxu0 %v876
        %899 = vmatprep.subr.bf16.mxu0 0
        %900 = vmatpush1.bf16.msra.mxu0 %v877
        %901 = vmatprep.subr.bf16.mxu0 0
        %902 = vmatpush1.bf16.msra.mxu0 %v878
        %903 = vmatprep.subr.bf16.mxu0 0
        %904 = vmatpush1.bf16.msra.mxu0 0
        %905 = vmatprep.subr.bf16.mxu0 0
        %906 = vmatpush1.bf16.msra.mxu0 0
        %907 = vmatprep.subr.bf16.mxu0 0
        %908 = vmatpush1.bf16.msra.mxu0 0
        %909 = vmatprep.subr.bf16.mxu0 0
        %910 = vmatpush1.bf16.msra.mxu0 0
        %911 = vmatprep.subr.bf16.mxu0 0
        %912 = vmatpush1.bf16.msra.mxu0 0
        %913 = vmatprep.subr.bf16.mxu0 0
        %914 = vmatpush1.bf16.msra.mxu0 0
        %915 = vmatprep.subr.bf16.mxu0 0
        %916 = vmatpush1.bf16.msra.mxu0 0
        %917 = vmatprep.subr.bf16.mxu0 0
        %918 = vmatpush1.bf16.msra.mxu0 0
        %919 = vmatprep.mubr.bf16.mxu0 0
        %920 = vmatmul.mubr.bf16.gmra.mrb[0].mxu0 %v831
        %v921 = vpop.f32.mrb[0].mxu0
        %v922 = vadd.f32 0.0, %v921
        %v923 = vpop.f32.mrb[0].mxu0
        %v924 = vpop.f32.mrb[0].mxu0
        %v925 = vadd.f32 0.0, %v924
        %v926 = vpop.f32.mrb[0].mxu0
        %927 = vmatprep.mubr.bf16.mxu0 0
        %928 = vmatmul.mubr.bf16.gmra.mrb[0].mxu0 %v832
        %v929 = vpop.f32.mrb[0].mxu0
        %v930 = vadd.f32 0.0, %v929
        %v931 = vpop.f32.mrb[0].mxu0
        %v932 = vpop.f32.mrb[0].mxu0
        %v933 = vadd.f32 0.0, %v932
        %v934 = vpop.f32.mrb[0].mxu0
        %935 = vmatprep.mubr.bf16.mxu0 0
        %936 = vmatmul.mubr.bf16.gmra.mrb[0].mxu0 %v833
        %v937 = vpop.f32.mrb[0].mxu0
        %v938 = vadd.f32 0.0, %v937
        %v939 = vpop.f32.mrb[0].mxu0
        %v940 = vpop.f32.mrb[0].mxu0
        %v941 = vadd.f32 0.0, %v940
        %v942 = vpop.f32.mrb[0].mxu0
        %943 = vmatprep.mubr.bf16.mxu0 0
        %944 = vmatmul.mubr.bf16.gmra.mrb[0].mxu0 %v834
        %v945 = vpop.f32.mrb[0].mxu0
        %v946 = vadd.f32 0.0, %v945
        %v947 = vpop.f32.mrb[0].mxu0
        %v948 = vpop.f32.mrb[0].mxu0
        %v949 = vadd.f32 0.0, %v948
        %v950 = vpop.f32.mrb[0].mxu0
        %951 = vdwg.mxu0
        %v952 = vsub.f32 %v640, %v777
        %v953 = vsub.f32 %v643, %v780
        %v954 = vsub.f32 %v648, %v785
        %v955 = vsub.f32 %v651, %v788
        %v956 = vsub.f32 %v656, %v793
        %v957 = vsub.f32 %v659, %v796
        %v958 = vsub.f32 %v664, %v801
        %v959 = vsub.f32 %v667, %v804
        %v960 = vsub.f32 %v922, %v640
        %v961 = vsub.f32 %v925, %v643
        %v962 = vsub.f32 %v930, %v648
        %v963 = vsub.f32 %v933, %v651
        %v964 = vsub.f32 %v938, %v656
        %v965 = vsub.f32 %v941, %v659
        %v966 = vsub.f32 %v946, %v664
        %v967 = vsub.f32 %v949, %v667
        %v968 = vsub.f32 %v960, %v777
        %v969 = vsub.f32 %v961, %v780
        %v970 = vsub.f32 %v962, %v785
        %v971 = vsub.f32 %v963, %v788
        %v972 = vsub.f32 %v964, %v793
        %v973 = vsub.f32 %v965, %v796
        %v974 = vsub.f32 %v966, %v801
        %v975 = vsub.f32 %v967, %v804
        %976 = vst [vmem:[%s367] sm:$0xff] %v952
        %977 = vst [vmem:[%s367 + $0x8] sm:$0xff] %v953
        %978 = vst [vmem:[%s367 + $0x10] sm:$0xff] %v954
        %979 = vst [vmem:[%s367 + $0x18] sm:$0xff] %v955
        %980 = vst [vmem:[%s367 + $0x20] sm:$0xff] %v956
        %981 = vst [vmem:[%s367 + $0x28] sm:$0xff] %v957
        %982 = vst [vmem:[%s367 + $0x30] sm:$0xff] %v958
        %983 = vst [vmem:[%s367 + $0x38] sm:$0xff] %v959
        %s984 = scalar_lea.vmem %s367, 64 [#allocation13]
        %985 = vst [vmem:[%s984] sm:$0xff] %v968
        %986 = vst [vmem:[%s984 + $0x8] sm:$0xff] %v969
        %987 = vst [vmem:[%s984 + $0x10] sm:$0xff] %v970
        %988 = vst [vmem:[%s984 + $0x18] sm:$0xff] %v971
        %989 = vst [vmem:[%s984 + $0x20] sm:$0xff] %v972
        %990 = vst [vmem:[%s984 + $0x28] sm:$0xff] %v973
        %991 = vst [vmem:[%s984 + $0x30] sm:$0xff] %v974
        %992 = vst [vmem:[%s984 + $0x38] sm:$0xff] %v975
        %v993 = vld [vmem:[%s367] sm:$0xff]
        %v994 = vld [vmem:[%s367 + $0x8] sm:$0xff]
        %v995 = vld [vmem:[%s367 + $0x10] sm:$0xff]
        %v996 = vld [vmem:[%s367 + $0x18] sm:$0xff]
        %s997 = sadd.s32 0, 64
        %s998 = scalar_lea.vmem %s367, %s997 [#allocation13]
        %v999 = vld [vmem:[%s998] sm:$0xff]
        %v1000 = vld [vmem:[%s998 + $0x8] sm:$0xff]
        %v1001 = vld [vmem:[%s998 + $0x10] sm:$0xff]
        %v1002 = vld [vmem:[%s998 + $0x18] sm:$0xff]
        %v1003 = vpack.c.bf16 %v994, %v993
        %v1004 = vpack.c.bf16 %v996, %v995
        %v1005 = vpack.c.bf16 %v1000, %v999
        %v1006 = vpack.c.bf16 %v1002, %v1001
        %v1011 = vunpack.c.l.b16 %v421
        %v1012 = vunpack.c.l.b16 %v422
        %v1013 = vunpack.c.l.b16 %v423
        %v1014 = vunpack.c.l.b16 %v424
        %v1015 = vpack.c.b16 %v1012, %v1011
        %v1016 = vpack.c.b16 %v1014, %v1013
        %vm1017 = vcmask 261120
        %v1019 = vsel %vm1017, %v1015, 0
        %v1022 = vsel %vm1017, %v1016, 0
        %1024 = vmatprep.subr.bf16.mxu0 0
        %1025 = vmatpush1.bf16.msra.mxu0 %v1003
        %1026 = vmatprep.subr.bf16.mxu0 0
        %1027 = vmatpush1.bf16.msra.mxu0 %v1004
        %1028 = vmatprep.subr.bf16.mxu0 0
        %1029 = vmatpush1.bf16.msra.mxu0 0
        %1030 = vmatprep.subr.bf16.mxu0 0
        %1031 = vmatpush1.bf16.msra.mxu0 0
        %1032 = vmatprep.subr.bf16.mxu0 0
        %1033 = vmatpush1.bf16.msra.mxu0 0
        %1034 = vmatprep.subr.bf16.mxu0 0
        %1035 = vmatpush1.bf16.msra.mxu0 0
        %1036 = vmatprep.subr.bf16.mxu0 0
        %1037 = vmatpush1.bf16.msra.mxu0 0
        %1038 = vmatprep.subr.bf16.mxu0 0
        %1039 = vmatpush1.bf16.msra.mxu0 0
        %1040 = vmatprep.subr.bf16.mxu0 0
        %1041 = vmatpush1.bf16.msra.mxu0 0
        %1042 = vmatprep.subr.bf16.mxu0 0
        %1043 = vmatpush1.bf16.msra.mxu0 0
        %1044 = vmatprep.subr.bf16.mxu0 0
        %1045 = vmatpush1.bf16.msra.mxu0 0
        %1046 = vmatprep.subr.bf16.mxu0 0
        %1047 = vmatpush1.bf16.msra.mxu0 0
        %1048 = vmatprep.subr.bf16.mxu0 0
        %1049 = vmatpush1.bf16.msra.mxu0 0
        %1050 = vmatprep.subr.bf16.mxu0 0
        %1051 = vmatpush1.bf16.msra.mxu0 0
        %1052 = vmatprep.subr.bf16.mxu0 0
        %1053 = vmatpush1.bf16.msra.mxu0 0
        %1054 = vmatprep.subr.bf16.mxu0 0
        %1055 = vmatpush1.bf16.msra.mxu0 0
        %1056 = vmatprep.mubr.bf16.mxu0 0
        %1057 = vmatmul.mubr.bf16.gmra.mrb[0].mxu0 %v1019
        %v1058 = vpop.f32.mrb[0].mxu0
        %v1059 = vadd.f32 0.0, %v1058
        %v1060 = vpop.f32.mrb[0].mxu0
        %v1061 = vpop.f32.mrb[0].mxu0
        %v1062 = vadd.f32 0.0, %v1061
        %v1063 = vpop.f32.mrb[0].mxu0
        %1064 = vmatprep.mubr.bf16.mxu0 0
        %1065 = vmatmul.mubr.bf16.gmra.mrb[0].mxu0 %v1022
        %v1066 = vpop.f32.mrb[0].mxu0
        %v1067 = vadd.f32 0.0, %v1066
        %v1068 = vpop.f32.mrb[0].mxu0
        %v1069 = vpop.f32.mrb[0].mxu0
        %v1070 = vadd.f32 0.0, %v1069
        %v1071 = vpop.f32.mrb[0].mxu0
        %1072 = vdwg.mxu0
        %v1077 = vunpack.c.l.b16 %v426
        %v1078 = vunpack.c.l.b16 %v427
        %v1079 = vunpack.c.l.b16 %v428
        %v1080 = vunpack.c.l.b16 %v429
        %v1081 = vpack.c.b16 %v1078, %v1077
        %v1082 = vpack.c.b16 %v1080, %v1079
        %v1084 = vsel %vm1017, %v1081, 0
        %v1087 = vsel %vm1017, %v1082, 0
        %1089 = vmatprep.subr.bf16.mxu0 0
        %1090 = vmatpush1.bf16.msra.mxu0 %v1005
        %1091 = vmatprep.subr.bf16.mxu0 0
        %1092 = vmatpush1.bf16.msra.mxu0 %v1006
        %1093 = vmatprep.subr.bf16.mxu0 0
        %1094 = vmatpush1.bf16.msra.mxu0 0
        %1095 = vmatprep.subr.bf16.mxu0 0
        %1096 = vmatpush1.bf16.msra.mxu0 0
        %1097 = vmatprep.subr.bf16.mxu0 0
        %1098 = vmatpush1.bf16.msra.mxu0 0
        %1099 = vmatprep.subr.bf16.mxu0 0
        %1100 = vmatpush1.bf16.msra.mxu0 0
        %1101 = vmatprep.subr.bf16.mxu0 0
        %1102 = vmatpush1.bf16.msra.mxu0 0
        %1103 = vmatprep.subr.bf16.mxu0 0
        %1104 = vmatpush1.bf16.msra.mxu0 0
        %1105 = vmatprep.subr.bf16.mxu0 0
        %1106 = vmatpush1.bf16.msra.mxu0 0
        %1107 = vmatprep.subr.bf16.mxu0 0
        %1108 = vmatpush1.bf16.msra.mxu0 0
        %1109 = vmatprep.subr.bf16.mxu0 0
        %1110 = vmatpush1.bf16.msra.mxu0 0
        %1111 = vmatprep.subr.bf16.mxu0 0
        %1112 = vmatpush1.bf16.msra.mxu0 0
        %1113 = vmatprep.subr.bf16.mxu0 0
        %1114 = vmatpush1.bf16.msra.mxu0 0
        %1115 = vmatprep.subr.bf16.mxu0 0
        %1116 = vmatpush1.bf16.msra.mxu0 0
        %1117 = vmatprep.subr.bf16.mxu0 0
        %1118 = vmatpush1.bf16.msra.mxu0 0
        %1119 = vmatprep.subr.bf16.mxu0 0
        %1120 = vmatpush1.bf16.msra.mxu0 0
        %1121 = vmatprep.mubr.bf16.mxu0 0
        %1122 = vmatmul.mubr.bf16.gmra.mrb[0].mxu0 %v1084
        %v1123 = vpop.f32.mrb[0].mxu0
        %v1124 = vadd.f32 0.0, %v1123
        %v1125 = vpop.f32.mrb[0].mxu0
        %v1126 = vpop.f32.mrb[0].mxu0
        %v1127 = vadd.f32 0.0, %v1126
        %v1128 = vpop.f32.mrb[0].mxu0
        %1129 = vmatprep.mubr.bf16.mxu0 0
        %1130 = vmatmul.mubr.bf16.gmra.mrb[0].mxu0 %v1087
        %v1131 = vpop.f32.mrb[0].mxu0
        %v1132 = vadd.f32 0.0, %v1131
        %v1133 = vpop.f32.mrb[0].mxu0
        %v1134 = vpop.f32.mrb[0].mxu0
        %v1135 = vadd.f32 0.0, %v1134
        %v1136 = vpop.f32.mrb[0].mxu0
        %1137 = vdwg.mxu0
        %v1138 = vadd.bf16 %v1003, %v1005
        %v1139 = vadd.bf16 %v1004, %v1006
        %v1144 = vunpack.c.l.b16 %v431
        %v1145 = vunpack.c.l.b16 %v432
        %v1146 = vunpack.c.l.b16 %v433
        %v1147 = vunpack.c.l.b16 %v434
        %v1148 = vpack.c.b16 %v1145, %v1144
        %v1149 = vpack.c.b16 %v1147, %v1146
        %v1151 = vsel %vm1017, %v1148, 0
        %v1154 = vsel %vm1017, %v1149, 0
        %1156 = vmatprep.subr.bf16.mxu0 0
        %1157 = vmatpush1.bf16.msra.mxu0 %v1138
        %1158 = vmatprep.subr.bf16.mxu0 0
        %1159 = vmatpush1.bf16.msra.mxu0 %v1139
        %1160 = vmatprep.subr.bf16.mxu0 0
        %1161 = vmatpush1.bf16.msra.mxu0 0
        %1162 = vmatprep.subr.bf16.mxu0 0
        %1163 = vmatpush1.bf16.msra.mxu0 0
        %1164 = vmatprep.subr.bf16.mxu0 0
        %1165 = vmatpush1.bf16.msra.mxu0 0
        %1166 = vmatprep.subr.bf16.mxu0 0
        %1167 = vmatpush1.bf16.msra.mxu0 0
        %1168 = vmatprep.subr.bf16.mxu0 0
        %1169 = vmatpush1.bf16.msra.mxu0 0
        %1170 = vmatprep.subr.bf16.mxu0 0
        %1171 = vmatpush1.bf16.msra.mxu0 0
        %1172 = vmatprep.subr.bf16.mxu0 0
        %1173 = vmatpush1.bf16.msra.mxu0 0
        %1174 = vmatprep.subr.bf16.mxu0 0
        %1175 = vmatpush1.bf16.msra.mxu0 0
        %1176 = vmatprep.subr.bf16.mxu0 0
        %1177 = vmatpush1.bf16.msra.mxu0 0
        %1178 = vmatprep.subr.bf16.mxu0 0
        %1179 = vmatpush1.bf16.msra.mxu0 0
        %1180 = vmatprep.subr.bf16.mxu0 0
        %1181 = vmatpush1.bf16.msra.mxu0 0
        %1182 = vmatprep.subr.bf16.mxu0 0
        %1183 = vmatpush1.bf16.msra.mxu0 0
        %1184 = vmatprep.subr.bf16.mxu0 0
        %1185 = vmatpush1.bf16.msra.mxu0 0
        %1186 = vmatprep.subr.bf16.mxu0 0
        %1187 = vmatpush1.bf16.msra.mxu0 0
        %1188 = vmatprep.mubr.bf16.mxu0 0
        %1189 = vmatmul.mubr.bf16.gmra.mrb[0].mxu0 %v1151
        %v1190 = vpop.f32.mrb[0].mxu0
        %v1191 = vadd.f32 0.0, %v1190
        %v1192 = vpop.f32.mrb[0].mxu0
        %v1193 = vpop.f32.mrb[0].mxu0
        %v1194 = vadd.f32 0.0, %v1193
        %v1195 = vpop.f32.mrb[0].mxu0
        %1196 = vmatprep.mubr.bf16.mxu0 0
        %1197 = vmatmul.mubr.bf16.gmra.mrb[0].mxu0 %v1154
        %v1198 = vpop.f32.mrb[0].mxu0
        %v1199 = vadd.f32 0.0, %v1198
        %v1200 = vpop.f32.mrb[0].mxu0
        %v1201 = vpop.f32.mrb[0].mxu0
        %v1202 = vadd.f32 0.0, %v1201
        %v1203 = vpop.f32.mrb[0].mxu0
        %1204 = vdwg.mxu0
        %v1205 = vsub.f32 %v1059, %v1124
        %v1206 = vsub.f32 %v1062, %v1127
        %v1207 = vsub.f32 %v1067, %v1132
        %v1208 = vsub.f32 %v1070, %v1135
        %v1209 = vsub.f32 %v1191, %v1059
        %v1210 = vsub.f32 %v1194, %v1062
        %v1211 = vsub.f32 %v1199, %v1067
        %v1212 = vsub.f32 %v1202, %v1070
        %v1213 = vsub.f32 %v1209, %v1124
        %v1214 = vsub.f32 %v1210, %v1127
        %v1215 = vsub.f32 %v1211, %v1132
        %v1216 = vsub.f32 %v1212, %v1135
        %v1217 = vmul.f32 %v1205, %v503
        %v1218 = vmul.f32 %v1206, %v504
        %v1219 = vmul.f32 %v1207, %v505
        %v1220 = vmul.f32 %v1208, %v506
        %v1221 = vmul.f32 %v1213, %v512
        %v1222 = vmul.f32 %v1214, %v513
        %v1223 = vmul.f32 %v1215, %v514
        %v1224 = vmul.f32 %v1216, %v515
        %v1225 = vsub.f32 %v1217, %v1221
        %v1226 = vsub.f32 %v1218, %v1222
        %v1227 = vsub.f32 %v1219, %v1223
        %v1228 = vsub.f32 %v1220, %v1224
        %v1229 = vmul.f32 %v1205, %v512
        %v1230 = vmul.f32 %v1206, %v513
        %v1231 = vmul.f32 %v1207, %v514
        %v1232 = vmul.f32 %v1208, %v515
        %v1233 = vmul.f32 %v1213, %v503
        %v1234 = vmul.f32 %v1214, %v504
        %v1235 = vmul.f32 %v1215, %v505
        %v1236 = vmul.f32 %v1216, %v506
        %v1237 = vadd.f32 %v1229, %v1233
        %v1238 = vadd.f32 %v1230, %v1234
        %v1239 = vadd.f32 %v1231, %v1235
        %v1240 = vadd.f32 %v1232, %v1236
        %v1241 = vpack.c.bf16 %v1226, %v1225
        %v1242 = vpack.c.bf16 %v1228, %v1227
        %v1243 = vpack.c.bf16 %v1238, %v1237
        %v1244 = vpack.c.bf16 %v1240, %v1239
        %v1249 = vunpack.c.l.b16 %v435
        %v1250 = vunpack.c.l.b16 %v436
        %v1251 = vunpack.c.l.b16 %v437
        %v1252 = vunpack.c.l.b16 %v438
        %v1253 = vpack.c.b16 %v1250, %v1249
        %v1254 = vpack.c.b16 %v1252, %v1251
        %v1256 = vsel %vm1017, %v1253, 0
        %v1259 = vsel %vm1017, %v1254, 0
        %1261 = vmatprep.subr.bf16.mxu0 0
        %1262 = vmatpush1.bf16.msra.mxu0 %v1241
        %1263 = vmatprep.subr.bf16.mxu0 0
        %1264 = vmatpush1.bf16.msra.mxu0 %v1242
        %1265 = vmatprep.subr.bf16.mxu0 0
        %1266 = vmatpush1.bf16.msra.mxu0 0
        %1267 = vmatprep.subr.bf16.mxu0 0
        %1268 = vmatpush1.bf16.msra.mxu0 0
        %1269 = vmatprep.subr.bf16.mxu0 0
        %1270 = vmatpush1.bf16.msra.mxu0 0
        %1271 = vmatprep.subr.bf16.mxu0 0
        %1272 = vmatpush1.bf16.msra.mxu0 0
        %1273 = vmatprep.subr.bf16.mxu0 0
        %1274 = vmatpush1.bf16.msra.mxu0 0
        %1275 = vmatprep.subr.bf16.mxu0 0
        %1276 = vmatpush1.bf16.msra.mxu0 0
        %1277 = vmatprep.subr.bf16.mxu0 0
        %1278 = vmatpush1.bf16.msra.mxu0 0
        %1279 = vmatprep.subr.bf16.mxu0 0
        %1280 = vmatpush1.bf16.msra.mxu0 0
        %1281 = vmatprep.subr.bf16.mxu0 0
        %1282 = vmatpush1.bf16.msra.mxu0 0
        %1283 = vmatprep.subr.bf16.mxu0 0
        %1284 = vmatpush1.bf16.msra.mxu0 0
        %1285 = vmatprep.subr.bf16.mxu0 0
        %1286 = vmatpush1.bf16.msra.mxu0 0
        %1287 = vmatprep.subr.bf16.mxu0 0
        %1288 = vmatpush1.bf16.msra.mxu0 0
        %1289 = vmatprep.subr.bf16.mxu0 0
        %1290 = vmatpush1.bf16.msra.mxu0 0
        %1291 = vmatprep.subr.bf16.mxu0 0
        %1292 = vmatpush1.bf16.msra.mxu0 0
        %1293 = vmatprep.mubr.bf16.mxu0 0
        %1294 = vmatmul.mubr.bf16.gmra.mrb[0].mxu0 %v1256
        %v1295 = vpop.f32.mrb[0].mxu0
        %v1296 = vadd.f32 0.0, %v1295
        %v1297 = vpop.f32.mrb[0].mxu0
        %v1298 = vpop.f32.mrb[0].mxu0
        %v1299 = vadd.f32 0.0, %v1298
        %v1300 = vpop.f32.mrb[0].mxu0
        %1301 = vmatprep.mubr.bf16.mxu0 0
        %1302 = vmatmul.mubr.bf16.gmra.mrb[0].mxu0 %v1259
        %v1303 = vpop.f32.mrb[0].mxu0
        %v1304 = vadd.f32 0.0, %v1303
        %v1305 = vpop.f32.mrb[0].mxu0
        %v1306 = vpop.f32.mrb[0].mxu0
        %v1307 = vadd.f32 0.0, %v1306
        %v1308 = vpop.f32.mrb[0].mxu0
        %1309 = vdwg.mxu0
        %v1314 = vunpack.c.l.b16 %v440
        %v1315 = vunpack.c.l.b16 %v441
        %v1316 = vunpack.c.l.b16 %v442
        %v1317 = vunpack.c.l.b16 %v443
        %v1318 = vpack.c.b16 %v1315, %v1314
        %v1319 = vpack.c.b16 %v1317, %v1316
        %v1321 = vsel %vm1017, %v1318, 0
        %v1324 = vsel %vm1017, %v1319, 0
        %1326 = vmatprep.subr.bf16.mxu0 0
        %1327 = vmatpush1.bf16.msra.mxu0 %v1243
        %1328 = vmatprep.subr.bf16.mxu0 0
        %1329 = vmatpush1.bf16.msra.mxu0 %v1244
        %1330 = vmatprep.subr.bf16.mxu0 0
        %1331 = vmatpush1.bf16.msra.mxu0 0
        %1332 = vmatprep.subr.bf16.mxu0 0
        %1333 = vmatpush1.bf16.msra.mxu0 0
        %1334 = vmatprep.subr.bf16.mxu0 0
        %1335 = vmatpush1.bf16.msra.mxu0 0
        %1336 = vmatprep.subr.bf16.mxu0 0
        %1337 = vmatpush1.bf16.msra.mxu0 0
        %1338 = vmatprep.subr.bf16.mxu0 0
        %1339 = vmatpush1.bf16.msra.mxu0 0
        %1340 = vmatprep.subr.bf16.mxu0 0
        %1341 = vmatpush1.bf16.msra.mxu0 0
        %1342 = vmatprep.subr.bf16.mxu0 0
        %1343 = vmatpush1.bf16.msra.mxu0 0
        %1344 = vmatprep.subr.bf16.mxu0 0
        %1345 = vmatpush1.bf16.msra.mxu0 0
        %1346 = vmatprep.subr.bf16.mxu0 0
        %1347 = vmatpush1.bf16.msra.mxu0 0
        %1348 = vmatprep.subr.bf16.mxu0 0
        %1349 = vmatpush1.bf16.msra.mxu0 0
        %1350 = vmatprep.subr.bf16.mxu0 0
        %1351 = vmatpush1.bf16.msra.mxu0 0
        %1352 = vmatprep.subr.bf16.mxu0 0
        %1353 = vmatpush1.bf16.msra.mxu0 0
        %1354 = vmatprep.subr.bf16.mxu0 0
        %1355 = vmatpush1.bf16.msra.mxu0 0
        %1356 = vmatprep.subr.bf16.mxu0 0
        %1357 = vmatpush1.bf16.msra.mxu0 0
        %1358 = vmatprep.mubr.bf16.mxu0 0
        %1359 = vmatmul.mubr.bf16.gmra.mrb[0].mxu0 %v1321
        %v1360 = vpop.f32.mrb[0].mxu0
        %v1361 = vadd.f32 0.0, %v1360
        %v1362 = vpop.f32.mrb[0].mxu0
        %v1363 = vpop.f32.mrb[0].mxu0
        %v1364 = vadd.f32 0.0, %v1363
        %v1365 = vpop.f32.mrb[0].mxu0
        %1366 = vmatprep.mubr.bf16.mxu0 0
        %1367 = vmatmul.mubr.bf16.gmra.mrb[0].mxu0 %v1324
        %v1368 = vpop.f32.mrb[0].mxu0
        %v1369 = vadd.f32 0.0, %v1368
        %v1370 = vpop.f32.mrb[0].mxu0
        %v1371 = vpop.f32.mrb[0].mxu0
        %v1372 = vadd.f32 0.0, %v1371
        %v1373 = vpop.f32.mrb[0].mxu0
        %1374 = vdwg.mxu0
        %v1375 = vadd.bf16 %v1241, %v1243
        %v1376 = vadd.bf16 %v1242, %v1244
        %v1381 = vunpack.c.l.b16 %v445
        %v1382 = vunpack.c.l.b16 %v446
        %v1383 = vunpack.c.l.b16 %v447
        %v1384 = vunpack.c.l.b16 %v448
        %v1385 = vpack.c.b16 %v1382, %v1381
        %v1386 = vpack.c.b16 %v1384, %v1383
        %v1388 = vsel %vm1017, %v1385, 0
        %v1391 = vsel %vm1017, %v1386, 0
        %1393 = vmatprep.subr.bf16.mxu0 0
        %1394 = vmatpush1.bf16.msra.mxu0 %v1375
        %1395 = vmatprep.subr.bf16.mxu0 0
        %1396 = vmatpush1.bf16.msra.mxu0 %v1376
        %1397 = vmatprep.subr.bf16.mxu0 0
        %1398 = vmatpush1.bf16.msra.mxu0 0
        %1399 = vmatprep.subr.bf16.mxu0 0
        %1400 = vmatpush1.bf16.msra.mxu0 0
        %1401 = vmatprep.subr.bf16.mxu0 0
        %1402 = vmatpush1.bf16.msra.mxu0 0
        %1403 = vmatprep.subr.bf16.mxu0 0
        %1404 = vmatpush1.bf16.msra.mxu0 0
        %1405 = vmatprep.subr.bf16.mxu0 0
        %1406 = vmatpush1.bf16.msra.mxu0 0
        %1407 = vmatprep.subr.bf16.mxu0 0
        %1408 = vmatpush1.bf16.msra.mxu0 0
        %1409 = vmatprep.subr.bf16.mxu0 0
        %1410 = vmatpush1.bf16.msra.mxu0 0
        %1411 = vmatprep.subr.bf16.mxu0 0
        %1412 = vmatpush1.bf16.msra.mxu0 0
        %1413 = vmatprep.subr.bf16.mxu0 0
        %1414 = vmatpush1.bf16.msra.mxu0 0
        %1415 = vmatprep.subr.bf16.mxu0 0
        %1416 = vmatpush1.bf16.msra.mxu0 0
        %1417 = vmatprep.subr.bf16.mxu0 0
        %1418 = vmatpush1.bf16.msra.mxu0 0
        %1419 = vmatprep.subr.bf16.mxu0 0
        %1420 = vmatpush1.bf16.msra.mxu0 0
        %1421 = vmatprep.subr.bf16.mxu0 0
        %1422 = vmatpush1.bf16.msra.mxu0 0
        %1423 = vmatprep.subr.bf16.mxu0 0
        %1424 = vmatpush1.bf16.msra.mxu0 0
        %1425 = vmatprep.mubr.bf16.mxu0 0
        %1426 = vmatmul.mubr.bf16.gmra.mrb[0].mxu0 %v1388
        %v1427 = vpop.f32.mrb[0].mxu0
        %v1428 = vadd.f32 0.0, %v1427
        %v1429 = vpop.f32.mrb[0].mxu0
        %v1430 = vpop.f32.mrb[0].mxu0
        %v1431 = vadd.f32 0.0, %v1430
        %v1432 = vpop.f32.mrb[0].mxu0
        %1433 = vmatprep.mubr.bf16.mxu0 0
        %1434 = vmatmul.mubr.bf16.gmra.mrb[0].mxu0 %v1391
        %v1435 = vpop.f32.mrb[0].mxu0
        %v1436 = vadd.f32 0.0, %v1435
        %v1437 = vpop.f32.mrb[0].mxu0
        %v1438 = vpop.f32.mrb[0].mxu0
        %v1439 = vadd.f32 0.0, %v1438
        %v1440 = vpop.f32.mrb[0].mxu0
        %1441 = vdwg.mxu0
        %v1442 = vsub.f32 %v1296, %v1361
        %v1443 = vsub.f32 %v1299, %v1364
        %v1444 = vsub.f32 %v1304, %v1369
        %v1445 = vsub.f32 %v1307, %v1372
        %v1446 = vsub.f32 %v1428, %v1296
        %v1447 = vsub.f32 %v1431, %v1299
        %v1448 = vsub.f32 %v1436, %v1304
        %v1449 = vsub.f32 %v1439, %v1307
        %v1450 = vsub.f32 %v1446, %v1361
        %v1451 = vsub.f32 %v1447, %v1364
        %v1452 = vsub.f32 %v1448, %v1369
        %v1453 = vsub.f32 %v1449, %v1372
        %1454 = vst [vmem:[%s367] sm:$0xff] %v1442
        %1455 = vst [vmem:[%s367 + $0x8] sm:$0xff] %v1443
        %1456 = vst [vmem:[%s367 + $0x10] sm:$0xff] %v1444
        %1457 = vst [vmem:[%s367 + $0x18] sm:$0xff] %v1445
        %1458 = vst [vmem:[%s998] sm:$0xff] %v1450
        %1459 = vst [vmem:[%s998 + $0x8] sm:$0xff] %v1451
        %1460 = vst [vmem:[%s998 + $0x10] sm:$0xff] %v1452
        %1461 = vst [vmem:[%s998 + $0x18] sm:$0xff] %v1453
        %s1462 = scalar_lea.vmem %s367, 32 [#allocation13]
        %v1463 = vld [vmem:[%s1462] sm:$0xff]
        %v1464 = vld [vmem:[%s1462 + $0x8] sm:$0xff]
        %v1465 = vld [vmem:[%s1462 + $0x10] sm:$0xff]
        %v1466 = vld [vmem:[%s1462 + $0x18] sm:$0xff]
        %s1467 = sadd.s32 32, 64
        %s1468 = scalar_lea.vmem %s367, %s1467 [#allocation13]
        %v1469 = vld [vmem:[%s1468] sm:$0xff]
        %v1470 = vld [vmem:[%s1468 + $0x8] sm:$0xff]
        %v1471 = vld [vmem:[%s1468 + $0x10] sm:$0xff]
        %v1472 = vld [vmem:[%s1468 + $0x18] sm:$0xff]
        %v1473 = vpack.c.bf16 %v1464, %v1463
        %v1474 = vpack.c.bf16 %v1466, %v1465
        %v1475 = vpack.c.bf16 %v1470, %v1469
        %v1476 = vpack.c.bf16 %v1472, %v1471
        %1477 = vmatprep.subr.bf16.mxu0 0
        %1478 = vmatpush1.bf16.msra.mxu0 %v1473
        %1479 = vmatprep.subr.bf16.mxu0 0
        %1480 = vmatpush1.bf16.msra.mxu0 %v1474
        %1481 = vmatprep.subr.bf16.mxu0 0
        %1482 = vmatpush1.bf16.msra.mxu0 0
        %1483 = vmatprep.subr.bf16.mxu0 0
        %1484 = vmatpush1.bf16.msra.mxu0 0
        %1485 = vmatprep.subr.bf16.mxu0 0
        %1486 = vmatpush1.bf16.msra.mxu0 0
        %1487 = vmatprep.subr.bf16.mxu0 0
        %1488 = vmatpush1.bf16.msra.mxu0 0
        %1489 = vmatprep.subr.bf16.mxu0 0
        %1490 = vmatpush1.bf16.msra.mxu0 0
        %1491 = vmatprep.subr.bf16.mxu0 0
        %1492 = vmatpush1.bf16.msra.mxu0 0
        %1493 = vmatprep.subr.bf16.mxu0 0
        %1494 = vmatpush1.bf16.msra.mxu0 0
        %1495 = vmatprep.subr.bf16.mxu0 0
        %1496 = vmatpush1.bf16.msra.mxu0 0
        %1497 = vmatprep.subr.bf16.mxu0 0
        %1498 = vmatpush1.bf16.msra.mxu0 0
        %1499 = vmatprep.subr.bf16.mxu0 0
        %1500 = vmatpush1.bf16.msra.mxu0 0
        %1501 = vmatprep.subr.bf16.mxu0 0
        %1502 = vmatpush1.bf16.msra.mxu0 0
        %1503 = vmatprep.subr.bf16.mxu0 0
        %1504 = vmatpush1.bf16.msra.mxu0 0
        %1505 = vmatprep.subr.bf16.mxu0 0
        %1506 = vmatpush1.bf16.msra.mxu0 0
        %1507 = vmatprep.subr.bf16.mxu0 0
        %1508 = vmatpush1.bf16.msra.mxu0 0
        %1509 = vmatprep.mubr.bf16.mxu0 0
        %1510 = vmatmul.mubr.bf16.gmra.mrb[0].mxu0 %v1019
        %v1511 = vpop.f32.mrb[0].mxu0
        %v1512 = vadd.f32 0.0, %v1511
        %v1513 = vpop.f32.mrb[0].mxu0
        %v1514 = vpop.f32.mrb[0].mxu0
        %v1515 = vadd.f32 0.0, %v1514
        %v1516 = vpop.f32.mrb[0].mxu0
        %1517 = vmatprep.mubr.bf16.mxu0 0
        %1518 = vmatmul.mubr.bf16.gmra.mrb[0].mxu0 %v1022
        %v1519 = vpop.f32.mrb[0].mxu0
        %v1520 = vadd.f32 0.0, %v1519
        %v1521 = vpop.f32.mrb[0].mxu0
        %v1522 = vpop.f32.mrb[0].mxu0
        %v1523 = vadd.f32 0.0, %v1522
        %v1524 = vpop.f32.mrb[0].mxu0
        %1525 = vdwg.mxu0
        %1526 = vmatprep.subr.bf16.mxu0 0
        %1527 = vmatpush1.bf16.msra.mxu0 %v1475
        %1528 = vmatprep.subr.bf16.mxu0 0
        %1529 = vmatpush1.bf16.msra.mxu0 %v1476
        %1530 = vmatprep.subr.bf16.mxu0 0
        %1531 = vmatpush1.bf16.msra.mxu0 0
        %1532 = vmatprep.subr.bf16.mxu0 0
        %1533 = vmatpush1.bf16.msra.mxu0 0
        %1534 = vmatprep.subr.bf16.mxu0 0
        %1535 = vmatpush1.bf16.msra.mxu0 0
        %1536 = vmatprep.subr.bf16.mxu0 0
        %1537 = vmatpush1.bf16.msra.mxu0 0
        %1538 = vmatprep.subr.bf16.mxu0 0
        %1539 = vmatpush1.bf16.msra.mxu0 0
        %1540 = vmatprep.subr.bf16.mxu0 0
        %1541 = vmatpush1.bf16.msra.mxu0 0
        %1542 = vmatprep.subr.bf16.mxu0 0
        %1543 = vmatpush1.bf16.msra.mxu0 0
        %1544 = vmatprep.subr.bf16.mxu0 0
        %1545 = vmatpush1.bf16.msra.mxu0 0
        %1546 = vmatprep.subr.bf16.mxu0 0
        %1547 = vmatpush1.bf16.msra.mxu0 0
        %1548 = vmatprep.subr.bf16.mxu0 0
        %1549 = vmatpush1.bf16.msra.mxu0 0
        %1550 = vmatprep.subr.bf16.mxu0 0
        %1551 = vmatpush1.bf16.msra.mxu0 0
        %1552 = vmatprep.subr.bf16.mxu0 0
        %1553 = vmatpush1.bf16.msra.mxu0 0
        %1554 = vmatprep.subr.bf16.mxu0 0
        %1555 = vmatpush1.bf16.msra.mxu0 0
        %1556 = vmatprep.subr.bf16.mxu0 0
        %1557 = vmatpush1.bf16.msra.mxu0 0
        %1558 = vmatprep.mubr.bf16.mxu0 0
        %1559 = vmatmul.mubr.bf16.gmra.mrb[0].mxu0 %v1084
        %v1560 = vpop.f32.mrb[0].mxu0
        %v1561 = vadd.f32 0.0, %v1560
        %v1562 = vpop.f32.mrb[0].mxu0
        %v1563 = vpop.f32.mrb[0].mxu0
        %v1564 = vadd.f32 0.0, %v1563
        %v1565 = vpop.f32.mrb[0].mxu0
        %1566 = vmatprep.mubr.bf16.mxu0 0
        %1567 = vmatmul.mubr.bf16.gmra.mrb[0].mxu0 %v1087
        %v1568 = vpop.f32.mrb[0].mxu0
        %v1569 = vadd.f32 0.0, %v1568
        %v1570 = vpop.f32.mrb[0].mxu0
        %v1571 = vpop.f32.mrb[0].mxu0
        %v1572 = vadd.f32 0.0, %v1571
        %v1573 = vpop.f32.mrb[0].mxu0
        %1574 = vdwg.mxu0
        %v1575 = vadd.bf16 %v1473, %v1475
        %v1576 = vadd.bf16 %v1474, %v1476
        %1577 = vmatprep.subr.bf16.mxu0 0
        %1578 = vmatpush1.bf16.msra.mxu0 %v1575
        %1579 = vmatprep.subr.bf16.mxu0 0
        %1580 = vmatpush1.bf16.msra.mxu0 %v1576
        %1581 = vmatprep.subr.bf16.mxu0 0
        %1582 = vmatpush1.bf16.msra.mxu0 0
        %1583 = vmatprep.subr.bf16.mxu0 0
        %1584 = vmatpush1.bf16.msra.mxu0 0
        %1585 = vmatprep.subr.bf16.mxu0 0
        %1586 = vmatpush1.bf16.msra.mxu0 0
        %1587 = vmatprep.subr.bf16.mxu0 0
        %1588 = vmatpush1.bf16.msra.mxu0 0
        %1589 = vmatprep.subr.bf16.mxu0 0
        %1590 = vmatpush1.bf16.msra.mxu0 0
        %1591 = vmatprep.subr.bf16.mxu0 0
        %1592 = vmatpush1.bf16.msra.mxu0 0
        %1593 = vmatprep.subr.bf16.mxu0 0
        %1594 = vmatpush1.bf16.msra.mxu0 0
        %1595 = vmatprep.subr.bf16.mxu0 0
        %1596 = vmatpush1.bf16.msra.mxu0 0
        %1597 = vmatprep.subr.bf16.mxu0 0
        %1598 = vmatpush1.bf16.msra.mxu0 0
        %1599 = vmatprep.subr.bf16.mxu0 0
        %1600 = vmatpush1.bf16.msra.mxu0 0
        %1601 = vmatprep.subr.bf16.mxu0 0
        %1602 = vmatpush1.bf16.msra.mxu0 0
        %1603 = vmatprep.subr.bf16.mxu0 0
        %1604 = vmatpush1.bf16.msra.mxu0 0
        %1605 = vmatprep.subr.bf16.mxu0 0
        %1606 = vmatpush1.bf16.msra.mxu0 0
        %1607 = vmatprep.subr.bf16.mxu0 0
        %1608 = vmatpush1.bf16.msra.mxu0 0
        %1609 = vmatprep.mubr.bf16.mxu0 0
        %1610 = vmatmul.mubr.bf16.gmra.mrb[0].mxu0 %v1151
        %v1611 = vpop.f32.mrb[0].mxu0
        %v1612 = vadd.f32 0.0, %v1611
        %v1613 = vpop.f32.mrb[0].mxu0
        %v1614 = vpop.f32.mrb[0].mxu0
        %v1615 = vadd.f32 0.0, %v1614
        %v1616 = vpop.f32.mrb[0].mxu0
        %1617 = vmatprep.mubr.bf16.mxu0 0
        %1618 = vmatmul.mubr.bf16.gmra.mrb[0].mxu0 %v1154
        %v1619 = vpop.f32.mrb[0].mxu0
        %v1620 = vadd.f32 0.0, %v1619
        %v1621 = vpop.f32.mrb[0].mxu0
        %v1622 = vpop.f32.mrb[0].mxu0
        %v1623 = vadd.f32 0.0, %v1622
        %v1624 = vpop.f32.mrb[0].mxu0
        %1625 = vdwg.mxu0
        %v1626 = vsub.f32 %v1512, %v1561
        %v1627 = vsub.f32 %v1515, %v1564
        %v1628 = vsub.f32 %v1520, %v1569
        %v1629 = vsub.f32 %v1523, %v1572
        %v1630 = vsub.f32 %v1612, %v1512
        %v1631 = vsub.f32 %v1615, %v1515
        %v1632 = vsub.f32 %v1620, %v1520
        %v1633 = vsub.f32 %v1623, %v1523
        %v1634 = vsub.f32 %v1630, %v1561
        %v1635 = vsub.f32 %v1631, %v1564
        %v1636 = vsub.f32 %v1632, %v1569
        %v1637 = vsub.f32 %v1633, %v1572
        %v1638 = vmul.f32 %v1626, %v503
        %v1639 = vmul.f32 %v1627, %v504
        %v1640 = vmul.f32 %v1628, %v505
        %v1641 = vmul.f32 %v1629, %v506
        %v1642 = vmul.f32 %v1634, %v512
        %v1643 = vmul.f32 %v1635, %v513
        %v1644 = vmul.f32 %v1636, %v514
        %v1645 = vmul.f32 %v1637, %v515
        %v1646 = vsub.f32 %v1638, %v1642
        %v1647 = vsub.f32 %v1639, %v1643
        %v1648 = vsub.f32 %v1640, %v1644
        %v1649 = vsub.f32 %v1641, %v1645
        %v1650 = vmul.f32 %v1626, %v512
        %v1651 = vmul.f32 %v1627, %v513
        %v1652 = vmul.f32 %v1628, %v514
        %v1653 = vmul.f32 %v1629, %v515
        %v1654 = vmul.f32 %v1634, %v503
        %v1655 = vmul.f32 %v1635, %v504
        %v1656 = vmul.f32 %v1636, %v505
        %v1657 = vmul.f32 %v1637, %v506
        %v1658 = vadd.f32 %v1650, %v1654
        %v1659 = vadd.f32 %v1651, %v1655
        %v1660 = vadd.f32 %v1652, %v1656
        %v1661 = vadd.f32 %v1653, %v1657
        %v1662 = vpack.c.bf16 %v1647, %v1646
        %v1663 = vpack.c.bf16 %v1649, %v1648
        %v1664 = vpack.c.bf16 %v1659, %v1658
        %v1665 = vpack.c.bf16 %v1661, %v1660
        %1666 = vmatprep.subr.bf16.mxu0 0
        %1667 = vmatpush1.bf16.msra.mxu0 %v1662
        %1668 = vmatprep.subr.bf16.mxu0 0
        %1669 = vmatpush1.bf16.msra.mxu0 %v1663
        %1670 = vmatprep.subr.bf16.mxu0 0
        %1671 = vmatpush1.bf16.msra.mxu0 0
        %1672 = vmatprep.subr.bf16.mxu0 0
        %1673 = vmatpush1.bf16.msra.mxu0 0
        %1674 = vmatprep.subr.bf16.mxu0 0
        %1675 = vmatpush1.bf16.msra.mxu0 0
        %1676 = vmatprep.subr.bf16.mxu0 0
        %1677 = vmatpush1.bf16.msra.mxu0 0
        %1678 = vmatprep.subr.bf16.mxu0 0
        %1679 = vmatpush1.bf16.msra.mxu0 0
        %1680 = vmatprep.subr.bf16.mxu0 0
        %1681 = vmatpush1.bf16.msra.mxu0 0
        %1682 = vmatprep.subr.bf16.mxu0 0
        %1683 = vmatpush1.bf16.msra.mxu0 0
        %1684 = vmatprep.subr.bf16.mxu0 0
        %1685 = vmatpush1.bf16.msra.mxu0 0
        %1686 = vmatprep.subr.bf16.mxu0 0
        %1687 = vmatpush1.bf16.msra.mxu0 0
        %1688 = vmatprep.subr.bf16.mxu0 0
        %1689 = vmatpush1.bf16.msra.mxu0 0
        %1690 = vmatprep.subr.bf16.mxu0 0
        %1691 = vmatpush1.bf16.msra.mxu0 0
        %1692 = vmatprep.subr.bf16.mxu0 0
        %1693 = vmatpush1.bf16.msra.mxu0 0
        %1694 = vmatprep.subr.bf16.mxu0 0
        %1695 = vmatpush1.bf16.msra.mxu0 0
        %1696 = vmatprep.subr.bf16.mxu0 0
        %1697 = vmatpush1.bf16.msra.mxu0 0
        %1698 = vmatprep.mubr.bf16.mxu0 0
        %1699 = vmatmul.mubr.bf16.gmra.mrb[0].mxu0 %v1256
        %v1700 = vpop.f32.mrb[0].mxu0
        %v1701 = vadd.f32 0.0, %v1700
        %v1702 = vpop.f32.mrb[0].mxu0
        %v1703 = vpop.f32.mrb[0].mxu0
        %v1704 = vadd.f32 0.0, %v1703
        %v1705 = vpop.f32.mrb[0].mxu0
        %1706 = vmatprep.mubr.bf16.mxu0 0
        %1707 = vmatmul.mubr.bf16.gmra.mrb[0].mxu0 %v1259
        %v1708 = vpop.f32.mrb[0].mxu0
        %v1709 = vadd.f32 0.0, %v1708
        %v1710 = vpop.f32.mrb[0].mxu0
        %v1711 = vpop.f32.mrb[0].mxu0
        %v1712 = vadd.f32 0.0, %v1711
        %v1713 = vpop.f32.mrb[0].mxu0
        %1714 = vdwg.mxu0
        %1715 = vmatprep.subr.bf16.mxu0 0
        %1716 = vmatpush1.bf16.msra.mxu0 %v1664
        %1717 = vmatprep.subr.bf16.mxu0 0
        %1718 = vmatpush1.bf16.msra.mxu0 %v1665
        %1719 = vmatprep.subr.bf16.mxu0 0
        %1720 = vmatpush1.bf16.msra.mxu0 0
        %1721 = vmatprep.subr.bf16.mxu0 0
        %1722 = vmatpush1.bf16.msra.mxu0 0
        %1723 = vmatprep.subr.bf16.mxu0 0
        %1724 = vmatpush1.bf16.msra.mxu0 0
        %1725 = vmatprep.subr.bf16.mxu0 0
        %1726 = vmatpush1.bf16.msra.mxu0 0
        %1727 = vmatprep.subr.bf16.mxu0 0
        %1728 = vmatpush1.bf16.msra.mxu0 0
        %1729 = vmatprep.subr.bf16.mxu0 0
        %1730 = vmatpush1.bf16.msra.mxu0 0
        %1731 = vmatprep.subr.bf16.mxu0 0
        %1732 = vmatpush1.bf16.msra.mxu0 0
        %1733 = vmatprep.subr.bf16.mxu0 0
        %1734 = vmatpush1.bf16.msra.mxu0 0
        %1735 = vmatprep.subr.bf16.mxu0 0
        %1736 = vmatpush1.bf16.msra.mxu0 0
        %1737 = vmatprep.subr.bf16.mxu0 0
        %1738 = vmatpush1.bf16.msra.mxu0 0
        %1739 = vmatprep.subr.bf16.mxu0 0
        %1740 = vmatpush1.bf16.msra.mxu0 0
        %1741 = vmatprep.subr.bf16.mxu0 0
        %1742 = vmatpush1.bf16.msra.mxu0 0
        %1743 = vmatprep.subr.bf16.mxu0 0
        %1744 = vmatpush1.bf16.msra.mxu0 0
        %1745 = vmatprep.subr.bf16.mxu0 0
        %1746 = vmatpush1.bf16.msra.mxu0 0
        %1747 = vmatprep.mubr.bf16.mxu0 0
        %1748 = vmatmul.mubr.bf16.gmra.mrb[0].mxu0 %v1321
        %v1749 = vpop.f32.mrb[0].mxu0
        %v1750 = vadd.f32 0.0, %v1749
        %v1751 = vpop.f32.mrb[0].mxu0
        %v1752 = vpop.f32.mrb[0].mxu0
        %v1753 = vadd.f32 0.0, %v1752
        %v1754 = vpop.f32.mrb[0].mxu0
        %1755 = vmatprep.mubr.bf16.mxu0 0
        %1756 = vmatmul.mubr.bf16.gmra.mrb[0].mxu0 %v1324
        %v1757 = vpop.f32.mrb[0].mxu0
        %v1758 = vadd.f32 0.0, %v1757
        %v1759 = vpop.f32.mrb[0].mxu0
        %v1760 = vpop.f32.mrb[0].mxu0
        %v1761 = vadd.f32 0.0, %v1760
        %v1762 = vpop.f32.mrb[0].mxu0
        %1763 = vdwg.mxu0
        %v1764 = vadd.bf16 %v1662, %v1664
        %v1765 = vadd.bf16 %v1663, %v1665
        %1766 = vmatprep.subr.bf16.mxu0 0
        %1767 = vmatpush1.bf16.msra.mxu0 %v1764
        %1768 = vmatprep.subr.bf16.mxu0 0
        %1769 = vmatpush1.bf16.msra.mxu0 %v1765
        %1770 = vmatprep.subr.bf16.mxu0 0
        %1771 = vmatpush1.bf16.msra.mxu0 0
        %1772 = vmatprep.subr.bf16.mxu0 0
        %1773 = vmatpush1.bf16.msra.mxu0 0
        %1774 = vmatprep.subr.bf16.mxu0 0
        %1775 = vmatpush1.bf16.msra.mxu0 0
        %1776 = vmatprep.subr.bf16.mxu0 0
        %1777 = vmatpush1.bf16.msra.mxu0 0
        %1778 = vmatprep.subr.bf16.mxu0 0
        %1779 = vmatpush1.bf16.msra.mxu0 0
        %1780 = vmatprep.subr.bf16.mxu0 0
        %1781 = vmatpush1.bf16.msra.mxu0 0
        %1782 = vmatprep.subr.bf16.mxu0 0
        %1783 = vmatpush1.bf16.msra.mxu0 0
        %1784 = vmatprep.subr.bf16.mxu0 0
        %1785 = vmatpush1.bf16.msra.mxu0 0
        %1786 = vmatprep.subr.bf16.mxu0 0
        %1787 = vmatpush1.bf16.msra.mxu0 0
        %1788 = vmatprep.subr.bf16.mxu0 0
        %1789 = vmatpush1.bf16.msra.mxu0 0
        %1790 = vmatprep.subr.bf16.mxu0 0
        %1791 = vmatpush1.bf16.msra.mxu0 0
        %1792 = vmatprep.subr.bf16.mxu0 0
        %1793 = vmatpush1.bf16.msra.mxu0 0
        %1794 = vmatprep.subr.bf16.mxu0 0
        %1795 = vmatpush1.bf16.msra.mxu0 0
        %1796 = vmatprep.subr.bf16.mxu0 0
        %1797 = vmatpush1.bf16.msra.mxu0 0
        %1798 = vmatprep.mubr.bf16.mxu0 0
        %1799 = vmatmul.mubr.bf16.gmra.mrb[0].mxu0 %v1388
        %v1800 = vpop.f32.mrb[0].mxu0
        %v1801 = vadd.f32 0.0, %v1800
        %v1802 = vpop.f32.mrb[0].mxu0
        %v1803 = vpop.f32.mrb[0].mxu0
        %v1804 = vadd.f32 0.0, %v1803
        %v1805 = vpop.f32.mrb[0].mxu0
        %1806 = vmatprep.mubr.bf16.mxu0 0
        %1807 = vmatmul.mubr.bf16.gmra.mrb[0].mxu0 %v1391
        %v1808 = vpop.f32.mrb[0].mxu0
        %v1809 = vadd.f32 0.0, %v1808
        %v1810 = vpop.f32.mrb[0].mxu0
        %v1811 = vpop.f32.mrb[0].mxu0
        %v1812 = vadd.f32 0.0, %v1811
        %v1813 = vpop.f32.mrb[0].mxu0
        %1814 = vdwg.mxu0
        %v1815 = vsub.f32 %v1701, %v1750
        %v1816 = vsub.f32 %v1704, %v1753
        %v1817 = vsub.f32 %v1709, %v1758
        %v1818 = vsub.f32 %v1712, %v1761
        %v1819 = vsub.f32 %v1801, %v1701
        %v1820 = vsub.f32 %v1804, %v1704
        %v1821 = vsub.f32 %v1809, %v1709
        %v1822 = vsub.f32 %v1812, %v1712
        %v1823 = vsub.f32 %v1819, %v1750
        %v1824 = vsub.f32 %v1820, %v1753
        %v1825 = vsub.f32 %v1821, %v1758
        %v1826 = vsub.f32 %v1822, %v1761
        %1827 = vst [vmem:[%s1462] sm:$0xff] %v1815
        %1828 = vst [vmem:[%s1462 + $0x8] sm:$0xff] %v1816
        %1829 = vst [vmem:[%s1462 + $0x10] sm:$0xff] %v1817
        %1830 = vst [vmem:[%s1462 + $0x18] sm:$0xff] %v1818
        %1831 = vst [vmem:[%s1468] sm:$0xff] %v1823
        %1832 = vst [vmem:[%s1468 + $0x8] sm:$0xff] %v1824
        %1833 = vst [vmem:[%s1468 + $0x10] sm:$0xff] %v1825
        %1834 = vst [vmem:[%s1468 + $0x18] sm:$0xff] %v1826
        %v1835 = vld [vmem:[%s367] sm:$0xff]
        %v1836 = vld [vmem:[%s367 + $0x8] sm:$0xff]
        %v1837 = vld [vmem:[%s367 + $0x10] sm:$0xff]
        %v1838 = vld [vmem:[%s367 + $0x18] sm:$0xff]
        %v1839 = vld [vmem:[%s367 + $0x20] sm:$0xff]
        %v1840 = vld [vmem:[%s367 + $0x28] sm:$0xff]
        %v1841 = vld [vmem:[%s367 + $0x30] sm:$0xff]
        %v1842 = vld [vmem:[%s367 + $0x38] sm:$0xff]
        %v1843 = vld [vmem:[%s984] sm:$0xff]
        %v1844 = vld [vmem:[%s984 + $0x8] sm:$0xff]
        %v1845 = vld [vmem:[%s984 + $0x10] sm:$0xff]
        %v1846 = vld [vmem:[%s984 + $0x18] sm:$0xff]
        %v1847 = vld [vmem:[%s984 + $0x20] sm:$0xff]
        %v1848 = vld [vmem:[%s984 + $0x28] sm:$0xff]
        %v1849 = vld [vmem:[%s984 + $0x30] sm:$0xff]
        %v1850 = vld [vmem:[%s984 + $0x38] sm:$0xff]
        %v1851 = vpack.c.bf16 %v1836, %v1835
        %v1852 = vpack.c.bf16 %v1838, %v1837
        %v1853 = vpack.c.bf16 %v1840, %v1839
        %v1854 = vpack.c.bf16 %v1842, %v1841
        %v1855 = vpack.c.bf16 %v1844, %v1843
        %v1856 = vpack.c.bf16 %v1846, %v1845
        %v1857 = vpack.c.bf16 %v1848, %v1847
        %v1858 = vpack.c.bf16 %v1850, %v1849
        %v1875 = vunpack.c.l.b16 %v449
        %v1876 = vunpack.c.l.b16 %v450
        %v1877 = vunpack.c.l.b16 %v451
        %v1878 = vunpack.c.l.b16 %v452
        %v1879 = vunpack.c.l.b16 %v453
        %v1880 = vunpack.c.l.b16 %v454
        %v1881 = vunpack.c.l.b16 %v455
        %v1882 = vunpack.c.l.b16 %v456
        %v1883 = vunpack.c.l.b16 %v457
        %v1884 = vunpack.c.l.b16 %v458
        %v1885 = vunpack.c.l.b16 %v459
        %v1886 = vunpack.c.l.b16 %v460
        %v1887 = vunpack.c.l.b16 %v461
        %v1888 = vunpack.c.l.b16 %v462
        %v1889 = vunpack.c.l.b16 %v463
        %v1890 = vunpack.c.l.b16 %v464
        %v1891 = vpack.c.b16 %v1876, %v1875
        %v1892 = vpack.c.b16 %v1878, %v1877
        %v1893 = vpack.c.b16 %v1880, %v1879
        %v1894 = vpack.c.b16 %v1882, %v1881
        %v1895 = vpack.c.b16 %v1884, %v1883
        %v1896 = vpack.c.b16 %v1886, %v1885
        %v1897 = vpack.c.b16 %v1888, %v1887
        %v1898 = vpack.c.b16 %v1890, %v1889
        %1907 = vmatprep.subr.bf16.mxu0 0
        %1908 = vmatpush1.bf16.msra.mxu0 %v1891
        %1909 = vmatprep.subr.bf16.mxu0 0
        %1910 = vmatpush1.bf16.msra.mxu0 %v1892
        %1911 = vmatprep.subr.bf16.mxu0 0
        %1912 = vmatpush1.bf16.msra.mxu0 %v1893
        %1913 = vmatprep.subr.bf16.mxu0 0
        %1914 = vmatpush1.bf16.msra.mxu0 %v1894
        %1915 = vmatprep.subr.bf16.mxu0 0
        %1916 = vmatpush1.bf16.msra.mxu0 %v1895
        %1917 = vmatprep.subr.bf16.mxu0 0
        %1918 = vmatpush1.bf16.msra.mxu0 %v1896
        %1919 = vmatprep.subr.bf16.mxu0 0
        %1920 = vmatpush1.bf16.msra.mxu0 %v1897
        %1921 = vmatprep.subr.bf16.mxu0 0
        %1922 = vmatpush1.bf16.msra.mxu0 %v1898
        %1923 = vmatprep.subr.bf16.mxu0 0
        %1924 = vmatpush1.bf16.msra.mxu0 0
        %1925 = vmatprep.subr.bf16.mxu0 0
        %1926 = vmatpush1.bf16.msra.mxu0 0
        %1927 = vmatprep.subr.bf16.mxu0 0
        %1928 = vmatpush1.bf16.msra.mxu0 0
        %1929 = vmatprep.subr.bf16.mxu0 0
        %1930 = vmatpush1.bf16.msra.mxu0 0
        %1931 = vmatprep.subr.bf16.mxu0 0
        %1932 = vmatpush1.bf16.msra.mxu0 0
        %1933 = vmatprep.subr.bf16.mxu0 0
        %1934 = vmatpush1.bf16.msra.mxu0 0
        %1935 = vmatprep.subr.bf16.mxu0 0
        %1936 = vmatpush1.bf16.msra.mxu0 0
        %1937 = vmatprep.subr.bf16.mxu0 0
        %1938 = vmatpush1.bf16.msra.mxu0 0
        %1939 = vmatprep.mubr.bf16.mxu0 0
        %1940 = vmatmul.mubr.bf16.gmra.mrb[0].mxu0 %v1851
        %v1941 = vpop.f32.mrb[0].mxu0
        %v1942 = vadd.f32 0.0, %v1941
        %v1943 = vpop.f32.mrb[0].mxu0
        %v1944 = vpop.f32.mrb[0].mxu0
        %v1945 = vadd.f32 0.0, %v1944
        %v1946 = vpop.f32.mrb[0].mxu0
        %1947 = vmatprep.mubr.bf16.mxu0 0
        %1948 = vmatmul.mubr.bf16.gmra.mrb[0].mxu0 %v1852
        %v1949 = vpop.f32.mrb[0].mxu0
        %v1950 = vadd.f32 0.0, %v1949
        %v1951 = vpop.f32.mrb[0].mxu0
        %v1952 = vpop.f32.mrb[0].mxu0
        %v1953 = vadd.f32 0.0, %v1952
        %v1954 = vpop.f32.mrb[0].mxu0
        %1955 = vmatprep.mubr.bf16.mxu0 0
        %1956 = vmatmul.mubr.bf16.gmra.mrb[0].mxu0 %v1853
        %v1957 = vpop.f32.mrb[0].mxu0
        %v1958 = vadd.f32 0.0, %v1957
        %v1959 = vpop.f32.mrb[0].mxu0
        %v1960 = vpop.f32.mrb[0].mxu0
        %v1961 = vadd.f32 0.0, %v1960
        %v1962 = vpop.f32.mrb[0].mxu0
        %1963 = vmatprep.mubr.bf16.mxu0 0
        %1964 = vmatmul.mubr.bf16.gmra.mrb[0].mxu0 %v1854
        %v1965 = vpop.f32.mrb[0].mxu0
        %v1966 = vadd.f32 0.0, %v1965
        %v1967 = vpop.f32.mrb[0].mxu0
        %v1968 = vpop.f32.mrb[0].mxu0
        %v1969 = vadd.f32 0.0, %v1968
        %v1970 = vpop.f32.mrb[0].mxu0
        %1971 = vdwg.mxu0
        %v1988 = vunpack.c.l.b16 %v466
        %v1989 = vunpack.c.l.b16 %v467
        %v1990 = vunpack.c.l.b16 %v468
        %v1991 = vunpack.c.l.b16 %v469
        %v1992 = vunpack.c.l.b16 %v470
        %v1993 = vunpack.c.l.b16 %v471
        %v1994 = vunpack.c.l.b16 %v472
        %v1995 = vunpack.c.l.b16 %v473
        %v1996 = vunpack.c.l.b16 %v474
        %v1997 = vunpack.c.l.b16 %v475
        %v1998 = vunpack.c.l.b16 %v476
        %v1999 = vunpack.c.l.b16 %v477
        %v2000 = vunpack.c.l.b16 %v478
        %v2001 = vunpack.c.l.b16 %v479
        %v2002 = vunpack.c.l.b16 %v480
        %v2003 = vunpack.c.l.b16 %v481
        %v2004 = vpack.c.b16 %v1989, %v1988
        %v2005 = vpack.c.b16 %v1991, %v1990
        %v2006 = vpack.c.b16 %v1993, %v1992
        %v2007 = vpack.c.b16 %v1995, %v1994
        %v2008 = vpack.c.b16 %v1997, %v1996
        %v2009 = vpack.c.b16 %v1999, %v1998
        %v2010 = vpack.c.b16 %v2001, %v2000
        %v2011 = vpack.c.b16 %v2003, %v2002
        %2020 = vmatprep.subr.bf16.mxu0 0
        %2021 = vmatpush1.bf16.msra.mxu0 %v2004
        %2022 = vmatprep.subr.bf16.mxu0 0
        %2023 = vmatpush1.bf16.msra.mxu0 %v2005
        %2024 = vmatprep.subr.bf16.mxu0 0
        %2025 = vmatpush1.bf16.msra.mxu0 %v2006
        %2026 = vmatprep.subr.bf16.mxu0 0
        %2027 = vmatpush1.bf16.msra.mxu0 %v2007
        %2028 = vmatprep.subr.bf16.mxu0 0
        %2029 = vmatpush1.bf16.msra.mxu0 %v2008
        %2030 = vmatprep.subr.bf16.mxu0 0
        %2031 = vmatpush1.bf16.msra.mxu0 %v2009
        %2032 = vmatprep.subr.bf16.mxu0 0
        %2033 = vmatpush1.bf16.msra.mxu0 %v2010
        %2034 = vmatprep.subr.bf16.mxu0 0
        %2035 = vmatpush1.bf16.msra.mxu0 %v2011
        %2036 = vmatprep.subr.bf16.mxu0 0
        %2037 = vmatpush1.bf16.msra.mxu0 0
        %2038 = vmatprep.subr.bf16.mxu0 0
        %2039 = vmatpush1.bf16.msra.mxu0 0
        %2040 = vmatprep.subr.bf16.mxu0 0
        %2041 = vmatpush1.bf16.msra.mxu0 0
        %2042 = vmatprep.subr.bf16.mxu0 0
        %2043 = vmatpush1.bf16.msra.mxu0 0
        %2044 = vmatprep.subr.bf16.mxu0 0
        %2045 = vmatpush1.bf16.msra.mxu0 0
        %2046 = vmatprep.subr.bf16.mxu0 0
        %2047 = vmatpush1.bf16.msra.mxu0 0
        %2048 = vmatprep.subr.bf16.mxu0 0
        %2049 = vmatpush1.bf16.msra.mxu0 0
        %2050 = vmatprep.subr.bf16.mxu0 0
        %2051 = vmatpush1.bf16.msra.mxu0 0
        %2052 = vmatprep.mubr.bf16.mxu0 0
        %2053 = vmatmul.mubr.bf16.gmra.mrb[0].mxu0 %v1855
        %v2054 = vpop.f32.mrb[0].mxu0
        %v2055 = vadd.f32 0.0, %v2054
        %v2056 = vpop.f32.mrb[0].mxu0
        %v2057 = vpop.f32.mrb[0].mxu0
        %v2058 = vadd.f32 0.0, %v2057
        %v2059 = vpop.f32.mrb[0].mxu0
        %2060 = vmatprep.mubr.bf16.mxu0 0
        %2061 = vmatmul.mubr.bf16.gmra.mrb[0].mxu0 %v1856
        %v2062 = vpop.f32.mrb[0].mxu0
        %v2063 = vadd.f32 0.0, %v2062
        %v2064 = vpop.f32.mrb[0].mxu0
        %v2065 = vpop.f32.mrb[0].mxu0
        %v2066 = vadd.f32 0.0, %v2065
        %v2067 = vpop.f32.mrb[0].mxu0
        %2068 = vmatprep.mubr.bf16.mxu0 0
        %2069 = vmatmul.mubr.bf16.gmra.mrb[0].mxu0 %v1857
        %v2070 = vpop.f32.mrb[0].mxu0
        %v2071 = vadd.f32 0.0, %v2070
        %v2072 = vpop.f32.mrb[0].mxu0
        %v2073 = vpop.f32.mrb[0].mxu0
        %v2074 = vadd.f32 0.0, %v2073
        %v2075 = vpop.f32.mrb[0].mxu0
        %2076 = vmatprep.mubr.bf16.mxu0 0
        %2077 = vmatmul.mubr.bf16.gmra.mrb[0].mxu0 %v1858
        %v2078 = vpop.f32.mrb[0].mxu0
        %v2079 = vadd.f32 0.0, %v2078
        %v2080 = vpop.f32.mrb[0].mxu0
        %v2081 = vpop.f32.mrb[0].mxu0
        %v2082 = vadd.f32 0.0, %v2081
        %v2083 = vpop.f32.mrb[0].mxu0
        %2084 = vdwg.mxu0
        %v2085 = vadd.bf16 %v1851, %v1855
        %v2086 = vadd.bf16 %v1852, %v1856
        %v2087 = vadd.bf16 %v1853, %v1857
        %v2088 = vadd.bf16 %v1854, %v1858
        %v2105 = vunpack.c.l.b16 %v483
        %v2106 = vunpack.c.l.b16 %v484
        %v2107 = vunpack.c.l.b16 %v485
        %v2108 = vunpack.c.l.b16 %v486
        %v2109 = vunpack.c.l.b16 %v487
        %v2110 = vunpack.c.l.b16 %v488
        %v2111 = vunpack.c.l.b16 %v489
        %v2112 = vunpack.c.l.b16 %v490
        %v2113 = vunpack.c.l.b16 %v491
        %v2114 = vunpack.c.l.b16 %v492
        %v2115 = vunpack.c.l.b16 %v493
        %v2116 = vunpack.c.l.b16 %v494
        %v2117 = vunpack.c.l.b16 %v495
        %v2118 = vunpack.c.l.b16 %v496
        %v2119 = vunpack.c.l.b16 %v497
        %v2120 = vunpack.c.l.b16 %v498
        %v2121 = vpack.c.b16 %v2106, %v2105
        %v2122 = vpack.c.b16 %v2108, %v2107
        %v2123 = vpack.c.b16 %v2110, %v2109
        %v2124 = vpack.c.b16 %v2112, %v2111
        %v2125 = vpack.c.b16 %v2114, %v2113
        %v2126 = vpack.c.b16 %v2116, %v2115
        %v2127 = vpack.c.b16 %v2118, %v2117
        %v2128 = vpack.c.b16 %v2120, %v2119
        %2137 = vmatprep.subr.bf16.mxu0 0
        %2138 = vmatpush1.bf16.msra.mxu0 %v2121
        %2139 = vmatprep.subr.bf16.mxu0 0
        %2140 = vmatpush1.bf16.msra.mxu0 %v2122
        %2141 = vmatprep.subr.bf16.mxu0 0
        %2142 = vmatpush1.bf16.msra.mxu0 %v2123
        %2143 = vmatprep.subr.bf16.mxu0 0
        %2144 = vmatpush1.bf16.msra.mxu0 %v2124
        %2145 = vmatprep.subr.bf16.mxu0 0
        %2146 = vmatpush1.bf16.msra.mxu0 %v2125
        %2147 = vmatprep.subr.bf16.mxu0 0
        %2148 = vmatpush1.bf16.msra.mxu0 %v2126
        %2149 = vmatprep.subr.bf16.mxu0 0
        %2150 = vmatpush1.bf16.msra.mxu0 %v2127
        %2151 = vmatprep.subr.bf16.mxu0 0
        %2152 = vmatpush1.bf16.msra.mxu0 %v2128
        %2153 = vmatprep.subr.bf16.mxu0 0
        %2154 = vmatpush1.bf16.msra.mxu0 0
        %2155 = vmatprep.subr.bf16.mxu0 0
        %2156 = vmatpush1.bf16.msra.mxu0 0
        %2157 = vmatprep.subr.bf16.mxu0 0
        %2158 = vmatpush1.bf16.msra.mxu0 0
        %2159 = vmatprep.subr.bf16.mxu0 0
        %2160 = vmatpush1.bf16.msra.mxu0 0
        %2161 = vmatprep.subr.bf16.mxu0 0
        %2162 = vmatpush1.bf16.msra.mxu0 0
        %2163 = vmatprep.subr.bf16.mxu0 0
        %2164 = vmatpush1.bf16.msra.mxu0 0
        %2165 = vmatprep.subr.bf16.mxu0 0
        %2166 = vmatpush1.bf16.msra.mxu0 0
        %2167 = vmatprep.subr.bf16.mxu0 0
        %2168 = vmatpush1.bf16.msra.mxu0 0
        %2169 = vmatprep.mubr.bf16.mxu0 0
        %2170 = vmatmul.mubr.bf16.gmra.mrb[0].mxu0 %v2085
        %v2171 = vpop.f32.mrb[0].mxu0
        %v2172 = vadd.f32 0.0, %v2171
        %v2173 = vpop.f32.mrb[0].mxu0
        %v2174 = vpop.f32.mrb[0].mxu0
        %v2175 = vadd.f32 0.0, %v2174
        %v2176 = vpop.f32.mrb[0].mxu0
        %2177 = vmatprep.mubr.bf16.mxu0 0
        %2178 = vmatmul.mubr.bf16.gmra.mrb[0].mxu0 %v2086
        %v2179 = vpop.f32.mrb[0].mxu0
        %v2180 = vadd.f32 0.0, %v2179
        %v2181 = vpop.f32.mrb[0].mxu0
        %v2182 = vpop.f32.mrb[0].mxu0
        %v2183 = vadd.f32 0.0, %v2182
        %v2184 = vpop.f32.mrb[0].mxu0
        %2185 = vmatprep.mubr.bf16.mxu0 0
        %2186 = vmatmul.mubr.bf16.gmra.mrb[0].mxu0 %v2087
        %v2187 = vpop.f32.mrb[0].mxu0
        %v2188 = vadd.f32 0.0, %v2187
        %v2189 = vpop.f32.mrb[0].mxu0
        %v2190 = vpop.f32.mrb[0].mxu0
        %v2191 = vadd.f32 0.0, %v2190
        %v2192 = vpop.f32.mrb[0].mxu0
        %2193 = vmatprep.mubr.bf16.mxu0 0
        %2194 = vmatmul.mubr.bf16.gmra.mrb[0].mxu0 %v2088
        %v2195 = vpop.f32.mrb[0].mxu0
        %v2196 = vadd.f32 0.0, %v2195
        %v2197 = vpop.f32.mrb[0].mxu0
        %v2198 = vpop.f32.mrb[0].mxu0
        %v2199 = vadd.f32 0.0, %v2198
        %v2200 = vpop.f32.mrb[0].mxu0
        %2201 = vdwg.mxu0
        %v2202 = vsub.f32 %v1942, %v2055
        %v2203 = vsub.f32 %v1945, %v2058
        %v2204 = vsub.f32 %v1950, %v2063
        %v2205 = vsub.f32 %v1953, %v2066
        %v2206 = vsub.f32 %v1958, %v2071
        %v2207 = vsub.f32 %v1961, %v2074
        %v2208 = vsub.f32 %v1966, %v2079
        %v2209 = vsub.f32 %v1969, %v2082
        %v2210 = vsub.f32 %v2172, %v1942
        %v2211 = vsub.f32 %v2175, %v1945
        %v2212 = vsub.f32 %v2180, %v1950
        %v2213 = vsub.f32 %v2183, %v1953
        %v2214 = vsub.f32 %v2188, %v1958
        %v2215 = vsub.f32 %v2191, %v1961
        %v2216 = vsub.f32 %v2196, %v1966
        %v2217 = vsub.f32 %v2199, %v1969
        %v2218 = vsub.f32 %v2210, %v2055
        %v2219 = vsub.f32 %v2211, %v2058
        %v2220 = vsub.f32 %v2212, %v2063
        %v2221 = vsub.f32 %v2213, %v2066
        %v2222 = vsub.f32 %v2214, %v2071
        %v2223 = vsub.f32 %v2215, %v2074
        %v2224 = vsub.f32 %v2216, %v2079
        %v2225 = vsub.f32 %v2217, %v2082
        %2226 = vst [vmem:[%s367] sm:$0xff] %v2202
        %2227 = vst [vmem:[%s367 + $0x8] sm:$0xff] %v2203
        %2228 = vst [vmem:[%s367 + $0x10] sm:$0xff] %v2204
        %2229 = vst [vmem:[%s367 + $0x18] sm:$0xff] %v2205
        %2230 = vst [vmem:[%s367 + $0x20] sm:$0xff] %v2206
        %2231 = vst [vmem:[%s367 + $0x28] sm:$0xff] %v2207
        %2232 = vst [vmem:[%s367 + $0x30] sm:$0xff] %v2208
        %2233 = vst [vmem:[%s367 + $0x38] sm:$0xff] %v2209
        %2234 = vst [vmem:[%s984] sm:$0xff] %v2218
        %2235 = vst [vmem:[%s984 + $0x8] sm:$0xff] %v2219
        %2236 = vst [vmem:[%s984 + $0x10] sm:$0xff] %v2220
        %2237 = vst [vmem:[%s984 + $0x18] sm:$0xff] %v2221
        %2238 = vst [vmem:[%s984 + $0x20] sm:$0xff] %v2222
        %2239 = vst [vmem:[%s984 + $0x28] sm:$0xff] %v2223
        %2240 = vst [vmem:[%s984 + $0x30] sm:$0xff] %v2224
        %2241 = vst [vmem:[%s984 + $0x38] sm:$0xff] %v2225
        %s2242 = sand.u32 %s165, 1
        %s2243 = scalar_lea.sflag [#allocation4], %s2242
        %s2244 = sand.u32 %s165, 1
        %s2245 = smul.addr %s2244, 128
        %s2246 = scalar_lea.vmem [#allocation13], %s2245
        // Predicated region
        $region69: #{tpu_custom_call.1} parent=43 // pred_check
          %p2247 = pneg %p175
        $region70: #{tpu_custom_call.1} parent=43 // pred_check_branch
          %2249 = sbr.rel (%p2247) target = $region72
        $region71: #{tpu_custom_call.1} parent=43 // pred_region
          #allocation17 [shape = 'u32[6]{0}', space=smem, size = 0x18, scoped, tag = 'DMA stride descriptor']
          %s2250 = smul.u32 8, %s26
          %s2252 = ssub.s32 2048, 2048
          %2253 = vsyncadd %s2243, %s2252
          %s2254 = smul.addr %s2250, 128
          %s2255 = scalar_lea.hbm %s6, %s2254
          %s2257 = sshll.u32 1, 14
          %s2258 = sxor.u32 4294967295, %s2257
          %s2261 = sshll.u32 7, 18
          %s2262 = sxor.u32 4294967295, %s2261
          %s2263 = sand.u32 0, %s2262
          %s2265 = sor.u32 %s2263, 0
          %s2267 = sshll.u32 3, 24
          %s2268 = sxor.u32 4294967295, %s2267
          %s2269 = sand.u32 %s2265, %s2268
          %s2271 = sor.u32 %s2269, 0
          %s2272 = sshll.u32 %s2246, 4
          %s2273 = int_to_ptr.vmem [resolvable:$true] %s2272
          %2279 = sst [smem:[#allocation17]] 1024
          %s2280 = scalar_lea.smem [#allocation17], 1
          %2281 = sst [smem:[%s2280]] 4096
          %s2282 = scalar_lea.smem [#allocation17], 2
          %2283 = sst [smem:[%s2282]] 8
          %s2284 = scalar_lea.smem [#allocation17], 3
          %2285 = sst [smem:[%s2284]] 128
          %s2286 = scalar_lea.smem [#allocation17], 4
          %2287 = sst [smem:[%s2286]] 128
          %s2288 = scalar_lea.smem [#allocation17], 5
          %2289 = sst [smem:[%s2288]] 8
          %2291 = dma.general %s2273, 2048, %s2255, %s2243, [#allocation16], [#allocation17], %s2271, 0
        $region72: #{tpu_custom_call.1} parent=43 // pred_fallthru
          _
      $region44: #{tpu_custom_call.1} parent=5 // pred_fallthru
        _
      %p2292 = scmp.le.s32.totalorder 2, %s21
      // Predicated region
      $region73: #{tpu_custom_call.1} parent=5 // pred_check
        %p2293 = pneg %p2292
      $region74: #{tpu_custom_call.1} parent=5 // pred_check_branch
        %2295 = sbr.rel (%p2293) target = $region76
      $region75: #{tpu_custom_call.1} parent=5 // pred_region
        %s2296 = ssub.s32 %s21, 2
        // Predicated region
        $region77: #{tpu_custom_call.1} parent=75 // pred_check
          %p2297 = pneg %p181
        $region78: #{tpu_custom_call.1} parent=75 // pred_check_branch
          %2299 = sbr.rel (%p2297) target = $region80
        $region79: #{tpu_custom_call.1} parent=75 // pred_region
          %s2300 = sand.u32 %s166, 1
          %s2301 = scalar_lea.sflag [#allocation4], %s2300
          %s2302 = sand.u32 %s166, 1
          %s2303 = smul.addr %s2302, 128
          %s2304 = scalar_lea.vmem [#allocation13], %s2303
          %2305 = dma.done %s2301, 2048
        $region80: #{tpu_custom_call.1} parent=75 // pred_fallthru
          _
      $region76: #{tpu_custom_call.1} parent=5 // pred_fallthru
        _
    $region6: #{tpu_custom_call.1} parent=1 // loop_footer
      %s25 = sadd.s32 1, %s21
    $region7: #{tpu_custom_call.1} parent=1 // loop_footer_branch
      %20 = sbr.rel target = $region3
    $region8: #{tpu_custom_call.1} parent=1 // loop_exit
      _
    %2306 = vsyncpa [#allocation3], 1
    %s2307 = scalar_lea.sflag [#allocation3], 1
    %2308 = vsyncpa %s2307, 1
    %2309 = vsyncpa [#allocation6], 1
    %2310 = vsyncpa [#allocation9], 1
    %2311 = vsyncpa [#allocation12], 1
    %2312 = vsyncpa [#allocation4], 1
    %s2313 = scalar_lea.sflag [#allocation4], 1
    %2314 = vsyncpa %s2313, 1

// kernel: tpu_custom_call.1
$region0: #{tpu_custom_call.1}
  #allocation0 [shape = 'u32[]', space=smem, size = 0x4, offset = 0x4, fixed_abs, tag = 'smem constant byte address 0x4 - core index']
  #allocation1 [shape = 'u32[144,128]{1,0:T(1,128)}', space=vmem, size = 0x12000, scoped, tag = 'internal scratch']
  #allocation14 [shape = 's32[]', space=sflag, size = 0x4, offset = 0, fixed_abs, tag = 'sflag constant byte address 0x0 - dummy sync flag']
  #allocation16 [shape = 's32[]', space=sflag, size = 0x4, offset = 0, fixed_abs, tag = 'sflag constant byte address 0x0 - dummy sync flag']
  %s0 = inlined_call_operand.hbm [shape: bf16[2,256,128], index: 0, kind: input, shape index: {}]
  %s1 = inlined_call_operand.hbm [shape: bf16[3,32,32], index: 1, kind: input, shape index: {}]
  %s2 = inlined_call_operand.hbm [shape: bf16[3,128,128], index: 2, kind: input, shape index: {}]
  %s3 = inlined_call_operand.hbm [shape: bf16[2,32,128], index: 3, kind: input, shape index: {}]
  %s4 = inlined_call_operand.hbm [shape: bf16[3,32,32], index: 4, kind: input, shape index: {}]
  %s5 = inlined_call_operand.hbm [shape: bf16[3,128,128], index: 5, kind: input, shape index: {}]
  %s6 = inlined_call_operand.hbm [shape: f32[2,256,128], index: 6, kind: output, shape index: {}]
  %s7 = sld [smem:[#allocation0]]
  $region81: #{tpu_custom_call.1} parent=0
    _
  %s9 = ssub.s32 1, %s7
  %s10 = scalar_select 0, %s9, %s7
  $region1: #{tpu_custom_call.1} parent=0
    #allocation2 [shape = 'u8[65536]{0}', space=vmem, size = 0x10000, scoped, tag = 'input window, operand 0']
    #allocation3 [shape = 's32[2]{0}', space=sflag, size = 0x8, scoped, tag = 'scoped memory for tpu_custom_call.1']
    #allocation4 [shape = 's32[2]{0}', space=sflag, size = 0x8, scoped, tag = 'scoped memory for tpu_custom_call.1']
    #allocation5 [shape = 'u8[24576]{0}', space=vmem, size = 0x6000, scoped, tag = 'input window, operand 1, single buffered']
    #allocation6 [shape = 's32[1]{0}', space=sflag, size = 0x4, scoped, tag = 'scoped memory for tpu_custom_call.1']
    #allocation7 [shape = 'u8[98304]{0}', space=vmem, size = 0x18000, scoped, tag = 'input window, operand 2, single buffered']
    #allocation8 [shape = 'u8[16384]{0}', space=vmem, size = 0x4000, scoped, tag = 'input window, operand 3, single buffered']
    #allocation9 [shape = 's32[1]{0}', space=sflag, size = 0x4, scoped, tag = 'scoped memory for tpu_custom_call.1']
    #allocation10 [shape = 'u8[24576]{0}', space=vmem, size = 0x6000, scoped, tag = 'input window, operand 4, single buffered']
    #allocation11 [shape = 'u8[98304]{0}', space=vmem, size = 0x18000, scoped, tag = 'input window, operand 5, single buffered']
    #allocation12 [shape = 's32[1]{0}', space=sflag, size = 0x4, scoped, tag = 'scoped memory for tpu_custom_call.1']
    #allocation13 [shape = 'u8[131072]{0}', space=vmem, size = 0x20000, scoped, tag = 'output window, operand 0']
    %11 = vsyncpa [#allocation3], 0
    %s12 = scalar_lea.sflag [#allocation3], 1
    %13 = vsyncpa %s12, 0
    %14 = vsyncpa [#allocation6], 0
    %15 = vsyncpa [#allocation9], 0
    %16 = vsyncpa [#allocation12], 0
    %17 = vsyncpa [#allocation4], 0
    %s18 = scalar_lea.sflag [#allocation4], 1
    %19 = vsyncpa %s18, 0
    loop: start=0, step=1, limit=6
    $region2: #{tpu_custom_call.1} parent=1 // loop_pre_header
      _
    $region3: #{tpu_custom_call.1} parent=1 // loop_header
      %s21 = sphi 0, %s25
      %p22 = scmp.ge.s32.totalorder %s21, 6
      %s31 = sphi 0, %s33
      %s34 = sphi 0, %s31
      %s35 = sphi 0, %s34
      %s51 = sphi 0, %s35
      %s55 = sphi 0, %s55
      %s57 = sphi 0, %s55
      %s58 = sphi 0, %s57
      %s72 = sphi 0, %s58
      %s76 = sphi 0, %s76
      %s78 = sphi 0, %s76
      %s79 = sphi 0, %s78
      %s93 = sphi 0, %s79
      %s97 = sphi 0, %s97
      %s99 = sphi 0, %s97
      %s100 = sphi 0, %s99
      %s114 = sphi 0, %s100
      %s118 = sphi 0, %s118
      %s120 = sphi 0, %s118
      %s121 = sphi 0, %s120
      %s135 = sphi 0, %s121
      %s139 = sphi 0, %s139
      %s141 = sphi 0, %s139
      %s142 = sphi 0, %s141
      %s156 = sphi 0, %s142
      %s162 = sphi 0, %s164
      %s165 = sphi 0, %s162
      %s166 = sphi 0, %s165
      %s182 = sphi 0, %s166
    $region4: #{tpu_custom_call.1} parent=1 // loop_header_branch
      %24 = sbr.rel (%p22) target = $region8
    $region5: #{tpu_custom_call.1} parent=1 // loop_body
      %s26 = ssub.s32 %s21, 1
      %s27 = ssub.s32 %s21, 2
      %s28 = sadd.s32 %s21, 1
      %s29 = ssub.s32 %s21, %s28
      %p30 = scmp.eq.s32.totalorder %s29, 0
      %s32 = sadd.s32 %s31, 1
      %s33 = scalar_select %p30, %s31, %s32
      %p36 = pneg %p30
      %p37 = scmp.eq.s32.totalorder %s21, 3
      %p38 = por %p36, %p37
      %p39 = scmp.ne.s32.totalorder %s31, %s34
      %p40 = scmp.eq.s32.totalorder %s21, 0
      %p41 = por %p39, %p40
      %p42 = scmp.ne.s32.totalorder %s31, %s34
      %p43 = scmp.eq.s32.totalorder %s26, 3
      %p44 = por %p42, %p43
      %p45 = scmp.ne.s32.totalorder %s34, %s35
      %p46 = scmp.eq.s32.totalorder %s26, 0
      %p47 = por %p45, %p46
      %p48 = scmp.ne.s32.totalorder %s34, %s35
      %p49 = scmp.eq.s32.totalorder %s27, 3
      %p50 = por %p48, %p49
      %p52 = scmp.ne.s32.totalorder %s35, %s51
      %p53 = scmp.eq.s32.totalorder %s27, 0
      %p54 = por %p52, %p53
      %s56 = sadd.s32 %s55, 1
      %p59 = scmp.eq.s32.totalorder %s21, 3
      %p60 = scmp.ne.s32.totalorder %s55, %s57
      %p61 = scmp.eq.s32.totalorder %s21, 0
      %p62 = por %p60, %p61
      %p63 = scmp.ne.s32.totalorder %s55, %s57
      %p64 = scmp.eq.s32.totalorder %s26, 3
      %p65 = por %p63, %p64
      %p66 = scmp.ne.s32.totalorder %s57, %s58
      %p67 = scmp.eq.s32.totalorder %s26, 0
      %p68 = por %p66, %p67
      %p69 = scmp.ne.s32.totalorder %s57, %s58
      %p70 = scmp.eq.s32.totalorder %s27, 3
      %p71 = por %p69, %p70
      %p73 = scmp.ne.s32.totalorder %s58, %s72
      %p74 = scmp.eq.s32.totalorder %s27, 0
      %p75 = por %p73, %p74
      %s77 = sadd.s32 %s76, 1
      %p80 = scmp.eq.s32.totalorder %s21, 3
      %p81 = scmp.ne.s32.totalorder %s76, %s78
      %p82 = scmp.eq.s32.totalorder %s21, 0
      %p83 = por %p81, %p82
      %p84 = scmp.ne.s32.totalorder %s76, %s78
      %p85 = scmp.eq.s32.totalorder %s26, 3
      %p86 = por %p84, %p85
      %p87 = scmp.ne.s32.totalorder %s78, %s79
      %p88 = scmp.eq.s32.totalorder %s26, 0
      %p89 = por %p87, %p88
      %p90 = scmp.ne.s32.totalorder %s78, %s79
      %p91 = scmp.eq.s32.totalorder %s27, 3
      %p92 = por %p90, %p91
      %p94 = scmp.ne.s32.totalorder %s79, %s93
      %p95 = scmp.eq.s32.totalorder %s27, 0
      %p96 = por %p94, %p95
      %s98 = sadd.s32 %s97, 1
      %p101 = scmp.eq.s32.totalorder %s21, 3
      %p102 = scmp.ne.s32.totalorder %s97, %s99
      %p103 = scmp.eq.s32.totalorder %s21, 0
      %p104 = por %p102, %p103
      %p105 = scmp.ne.s32.totalorder %s97, %s99
      %p106 = scmp.eq.s32.totalorder %s26, 3
      %p107 = por %p105, %p106
      %p108 = scmp.ne.s32.totalorder %s99, %s100
      %p109 = scmp.eq.s32.totalorder %s26, 0
      %p110 = por %p108, %p109
      %p111 = scmp.ne.s32.totalorder %s99, %s100
      %p112 = scmp.eq.s32.totalorder %s27, 3
      %p113 = por %p111, %p112
      %p115 = scmp.ne.s32.totalorder %s100, %s114
      %p116 = scmp.eq.s32.totalorder %s27, 0
      %p117 = por %p115, %p116
      %s119 = sadd.s32 %s118, 1
      %p122 = scmp.eq.s32.totalorder %s21, 3
      %p123 = scmp.ne.s32.totalorder %s118, %s120
      %p124 = scmp.eq.s32.totalorder %s21, 0
      %p125 = por %p123, %p124
      %p126 = scmp.ne.s32.totalorder %s118, %s120
      %p127 = scmp.eq.s32.totalorder %s26, 3
      %p128 = por %p126, %p127
      %p129 = scmp.ne.s32.totalorder %s120, %s121
      %p130 = scmp.eq.s32.totalorder %s26, 0
      %p131 = por %p129, %p130
      %p132 = scmp.ne.s32.totalorder %s120, %s121
      %p133 = scmp.eq.s32.totalorder %s27, 3
      %p134 = por %p132, %p133
      %p136 = scmp.ne.s32.totalorder %s121, %s135
      %p137 = scmp.eq.s32.totalorder %s27, 0
      %p138 = por %p136, %p137
      %s140 = sadd.s32 %s139, 1
      %p143 = scmp.eq.s32.totalorder %s21, 3
      %p144 = scmp.ne.s32.totalorder %s139, %s141
      %p145 = scmp.eq.s32.totalorder %s21, 0
      %p146 = por %p144, %p145
      %p147 = scmp.ne.s32.totalorder %s139, %s141
      %p148 = scmp.eq.s32.totalorder %s26, 3
      %p149 = por %p147, %p148
      %p150 = scmp.ne.s32.totalorder %s141, %s142
      %p151 = scmp.eq.s32.totalorder %s26, 0
      %p152 = por %p150, %p151
      %p153 = scmp.ne.s32.totalorder %s141, %s142
      %p154 = scmp.eq.s32.totalorder %s27, 3
      %p155 = por %p153, %p154
      %p157 = scmp.ne.s32.totalorder %s142, %s156
      %p158 = scmp.eq.s32.totalorder %s27, 0
      %p159 = por %p157, %p158
      %s160 = ssub.s32 %s21, %s28
      %p161 = scmp.eq.s32.totalorder %s160, 0
      %s163 = sadd.s32 %s162, 1
      %s164 = scalar_select %p161, %s162, %s163
      %p167 = pneg %p161
      %p168 = scmp.eq.s32.totalorder %s21, 3
      %p169 = por %p167, %p168
      %p170 = scmp.ne.s32.totalorder %s162, %s165
      %p171 = scmp.eq.s32.totalorder %s21, 0
      %p172 = por %p170, %p171
      %p173 = scmp.ne.s32.totalorder %s162, %s165
      %p174 = scmp.eq.s32.totalorder %s26, 3
      %p175 = por %p173, %p174
      %p176 = scmp.ne.s32.totalorder %s165, %s166
      %p177 = scmp.eq.s32.totalorder %s26, 0
      %p178 = por %p176, %p177
      %p179 = scmp.ne.s32.totalorder %s165, %s166
      %p180 = scmp.eq.s32.totalorder %s27, 3
      %p181 = por %p179, %p180
      %p183 = scmp.ne.s32.totalorder %s166, %s182
      %p184 = scmp.eq.s32.totalorder %s27, 0
      %p185 = por %p183, %p184
      %p186 = scmp.le.s32.totalorder 1, %s21
      %p187 = scmp.lt.s32.totalorder %s21, 5
      %p188 = pnand %p186, %p187
      %p189 = pneg %p188
      // Predicated region
      $region9: #{tpu_custom_call.1} parent=5 // pred_check
        _
      $region10: #{tpu_custom_call.1} parent=5 // pred_check_branch
        %191 = sbr.rel (%p188) target = $region12
      $region11: #{tpu_custom_call.1} parent=5 // pred_region
        %s192 = ssub.s32 %s21, 1
        // Predicated region
        $region13: #{tpu_custom_call.1} parent=11 // pred_check
          %p193 = pneg %p68
        $region14: #{tpu_custom_call.1} parent=11 // pred_check_branch
          %195 = sbr.rel (%p193) target = $region16
        $region15: #{tpu_custom_call.1} parent=11 // pred_region
          %s197 = ssub.s32 768, 768
          %198 = vsyncadd [#allocation6], %s197
          %s199 = sshll.u32 [#allocation5], 4
          %s200 = int_to_ptr.vmem [resolvable:$true] %s199
          %205 = dma.hbm_to_vmem [thread:$0]  %s1, 768, %s200, [#allocation6], 64, 64, 4
        $region16: #{tpu_custom_call.1} parent=11 // pred_fallthru
          _
        // Predicated region
        $region17: #{tpu_custom_call.1} parent=11 // pred_check
          %p206 = pneg %p89
        $region18: #{tpu_custom_call.1} parent=11 // pred_check_branch
          %208 = sbr.rel (%p206) target = $region20
        $region19: #{tpu_custom_call.1} parent=11 // pred_region
          %s210 = ssub.s32 3072, 3072
          %211 = vsyncadd [#allocation6], %s210
          %s212 = sshll.u32 [#allocation7], 4
          %s213 = int_to_ptr.vmem [resolvable:$true] %s212
          %218 = dma.hbm_to_vmem [thread:$0]  %s2, 3072, %s213, [#allocation6], 64, 64, 4
        $region20: #{tpu_custom_call.1} parent=11 // pred_fallthru
          _
        // Predicated region
        $region21: #{tpu_custom_call.1} parent=11 // pred_check
          %p219 = pneg %p110
        $region22: #{tpu_custom_call.1} parent=11 // pred_check_branch
          %221 = sbr.rel (%p219) target = $region24
        $region23: #{tpu_custom_call.1} parent=11 // pred_region
          %s223 = ssub.s32 512, 512
          %224 = vsyncadd [#allocation9], %s223
          %s225 = sshll.u32 [#allocation8], 4
          %s226 = int_to_ptr.vmem [resolvable:$true] %s225
          %231 = dma.hbm_to_vmem [thread:$0]  %s3, 512, %s226, [#allocation9], 64, 64, 4
        $region24: #{tpu_custom_call.1} parent=11 // pred_fallthru
          _
        // Predicated region
        $region25: #{tpu_custom_call.1} parent=11 // pred_check
          %p232 = pneg %p131
        $region26: #{tpu_custom_call.1} parent=11 // pred_check_branch
          %234 = sbr.rel (%p232) target = $region28
        $region27: #{tpu_custom_call.1} parent=11 // pred_region
          %s236 = ssub.s32 768, 768
          %237 = vsyncadd [#allocation9], %s236
          %s238 = sshll.u32 [#allocation10], 4
          %s239 = int_to_ptr.vmem [resolvable:$true] %s238
          %244 = dma.hbm_to_vmem [thread:$0]  %s4, 768, %s239, [#allocation9], 64, 64, 4
        $region28: #{tpu_custom_call.1} parent=11 // pred_fallthru
          _
        // Predicated region
        $region29: #{tpu_custom_call.1} parent=11 // pred_check
          %p245 = pneg %p152
        $region30: #{tpu_custom_call.1} parent=11 // pred_check_branch
          %247 = sbr.rel (%p245) target = $region32
        $region31: #{tpu_custom_call.1} parent=11 // pred_region
          %s249 = ssub.s32 3072, 3072
          %250 = vsyncadd [#allocation12], %s249
          %s251 = sshll.u32 [#allocation11], 4
          %s252 = int_to_ptr.vmem [resolvable:$true] %s251
          %257 = dma.hbm_to_vmem [thread:$0]  %s5, 3072, %s252, [#allocation12], 64, 64, 4
        $region32: #{tpu_custom_call.1} parent=11 // pred_fallthru
          _
      $region12: #{tpu_custom_call.1} parent=5 // pred_fallthru
        _
      %p258 = scmp.lt.s32.totalorder %s21, 4
      // Predicated region
      $region33: #{tpu_custom_call.1} parent=5 // pred_check
        %p259 = pneg %p258
      $region34: #{tpu_custom_call.1} parent=5 // pred_check_branch
        %261 = sbr.rel (%p259) target = $region36
      $region35: #{tpu_custom_call.1} parent=5 // pred_region
        // Predicated region
        $region37: #{tpu_custom_call.1} parent=35 // pred_check
          %p262 = pneg %p41
        $region38: #{tpu_custom_call.1} parent=35 // pred_check_branch
          %264 = sbr.rel (%p262) target = $region40
        $region39: #{tpu_custom_call.1} parent=35 // pred_region
          #allocation15 [shape = 'u32[6]{0}', space=smem, size = 0x18, scoped, tag = 'DMA stride descriptor']
          %s265 = sand.u32 %s31, 1
          %s266 = scalar_lea.sflag [#allocation3], %s265
          %s267 = sand.u32 %s31, 1
          %s268 = smul.addr %s267, 64
          %s269 = scalar_lea.vmem [#allocation2], %s268
          %s270 = smul.u32 8, %s21
          %s272 = ssub.s32 1024, 1024
          %273 = vsyncadd %s266, %s272
          %s274 = smul.addr %s270, 64
          %s275 = scalar_lea.hbm %s0, %s274
          %s277 = sshll.u32 1, 14
          %s278 = sxor.u32 4294967295, %s277
          %s280 = sld [smem:[#allocation0]]
          %s281 = sadd.s32 2, %s280
          %s283 = sshll.u32 7, 26
          %s284 = sxor.u32 4294967295, %s283
          %s285 = sand.u32 0, %s284
          %s286 = sshll.u32 %s281, 26
          %s287 = sor.u32 %s285, %s286
          %s288 = sshll.u32 %s269, 4
          %s289 = int_to_ptr.vmem [resolvable:$true] %s288
          %295 = sst [smem:[#allocation15]] 2048
          %s296 = scalar_lea.smem [#allocation15], 1
          %297 = sst [smem:[%s296]] 512
          %s298 = scalar_lea.smem [#allocation15], 2
          %299 = sst [smem:[%s298]] 8
          %s300 = scalar_lea.smem [#allocation15], 3
          %301 = sst [smem:[%s300]] 64
          %s302 = scalar_lea.smem [#allocation15], 4
          %303 = sst [smem:[%s302]] 64
          %s304 = scalar_lea.smem [#allocation15], 5
          %305 = sst [smem:[%s304]] 4
          %307 = dma.general %s275, 1024, %s289, %s266, [#allocation14], [#allocation15], %s287, 0
        $region40: #{tpu_custom_call.1} parent=35 // pred_fallthru
          _
      $region36: #{tpu_custom_call.1} parent=5 // pred_fallthru
        _
      %p308 = scmp.le.s32.totalorder 1, %s21
      %p309 = scmp.lt.s32.totalorder %s21, 5
      %p310 = pnand %p308, %p309
      %p311 = pneg %p310
      // Predicated region
      $region41: #{tpu_custom_call.1} parent=5 // pred_check
        _
      $region42: #{tpu_custom_call.1} parent=5 // pred_check_branch
        %313 = sbr.rel (%p310) target = $region44
      $region43: #{tpu_custom_call.1} parent=5 // pred_region
        %s314 = ssub.s32 %s21, 1
        %s315 = sand.u32 %s34, 1
        %s316 = scalar_lea.sflag [#allocation3], %s315
        %s317 = sand.u32 %s34, 1
        %s318 = smul.addr %s317, 64
        %s319 = scalar_lea.vmem [#allocation2], %s318
        // Predicated region
        $region45: #{tpu_custom_call.1} parent=43 // pred_check
          %p320 = pneg %p47
        $region46: #{tpu_custom_call.1} parent=43 // pred_check_branch
          %322 = sbr.rel (%p320) target = $region48
        $region47: #{tpu_custom_call.1} parent=43 // pred_region
          %323 = dma.done %s316, 1024
        $region48: #{tpu_custom_call.1} parent=43 // pred_fallthru
          _
        // Predicated region
        $region49: #{tpu_custom_call.1} parent=43 // pred_check
          %p324 = pneg %p68
        $region50: #{tpu_custom_call.1} parent=43 // pred_check_branch
          %326 = sbr.rel (%p324) target = $region52
        $region51: #{tpu_custom_call.1} parent=43 // pred_region
          %327 = dma.done [#allocation6], 768
        $region52: #{tpu_custom_call.1} parent=43 // pred_fallthru
          _
        // Predicated region
        $region53: #{tpu_custom_call.1} parent=43 // pred_check
          %p328 = pneg %p89
        $region54: #{tpu_custom_call.1} parent=43 // pred_check_branch
          %330 = sbr.rel (%p328) target = $region56
        $region55: #{tpu_custom_call.1} parent=43 // pred_region
          %331 = dma.done [#allocation6], 3072
        $region56: #{tpu_custom_call.1} parent=43 // pred_fallthru
          _
        // Predicated region
        $region57: #{tpu_custom_call.1} parent=43 // pred_check
          %p332 = pneg %p110
        $region58: #{tpu_custom_call.1} parent=43 // pred_check_branch
          %334 = sbr.rel (%p332) target = $region60
        $region59: #{tpu_custom_call.1} parent=43 // pred_region
          %335 = dma.done [#allocation9], 512
        $region60: #{tpu_custom_call.1} parent=43 // pred_fallthru
          _
        // Predicated region
        $region61: #{tpu_custom_call.1} parent=43 // pred_check
          %p336 = pneg %p131
        $region62: #{tpu_custom_call.1} parent=43 // pred_check_branch
          %338 = sbr.rel (%p336) target = $region64
        $region63: #{tpu_custom_call.1} parent=43 // pred_region
          %339 = dma.done [#allocation9], 768
        $region64: #{tpu_custom_call.1} parent=43 // pred_fallthru
          _
        // Predicated region
        $region65: #{tpu_custom_call.1} parent=43 // pred_check
          %p340 = pneg %p152
        $region66: #{tpu_custom_call.1} parent=43 // pred_check_branch
          %342 = sbr.rel (%p340) target = $region68
        $region67: #{tpu_custom_call.1} parent=43 // pred_region
          %343 = dma.done [#allocation12], 3072
        $region68: #{tpu_custom_call.1} parent=43 // pred_fallthru
          _
        %s344 = sand.u32 %s34, 1
        %s345 = scalar_lea.sflag [#allocation3], %s344
        %s346 = sand.u32 %s34, 1
        %s347 = smul.addr %s346, 64
        %s348 = scalar_lea.vmem [#allocation2], %s347
        %p349 = pneg %p47
        %p350 = pneg %p44
        %p351 = pneg %p68
        %p352 = pneg %p65
        %p353 = pneg %p89
        %p354 = pneg %p86
        %p355 = pneg %p110
        %p356 = pneg %p107
        %p357 = pneg %p131
        %p358 = pneg %p128
        %p359 = pneg %p152
        %p360 = pneg %p149
        %p361 = pneg %p178
        %p362 = pneg %p175
        %s363 = sand.u32 %s165, 1
        %s364 = scalar_lea.sflag [#allocation4], %s363
        %s365 = sand.u32 %s165, 1
        %s366 = smul.addr %s365, 128
        %s367 = scalar_lea.vmem [#allocation13], %s366
        %s368 = smul.u32 8, %s26
        %s369 = smul.u32 8, %s26
        %v371 = vld [vmem:[#allocation7] sm:$0xf]
        %v372 = vld [vmem:[#allocation7 + $0x4] sm:$0xf]
        %v373 = vld [vmem:[#allocation7 + $0x8] sm:$0xf]
        %v374 = vld [vmem:[#allocation7 + $0xc] sm:$0xf]
        %v375 = vld [vmem:[#allocation7 + $0x10] sm:$0xf]
        %v376 = vld [vmem:[#allocation7 + $0x14] sm:$0xf]
        %v377 = vld [vmem:[#allocation7 + $0x18] sm:$0xf]
        %v378 = vld [vmem:[#allocation7 + $0x1c] sm:$0xf]
        %v379 = vld [vmem:[#allocation7 + $0x20] sm:$0xf]
        %v380 = vld [vmem:[#allocation7 + $0x24] sm:$0xf]
        %v381 = vld [vmem:[#allocation7 + $0x28] sm:$0xf]
        %v382 = vld [vmem:[#allocation7 + $0x2c] sm:$0xf]
        %v383 = vld [vmem:[#allocation7 + $0x30] sm:$0xf]
        %v384 = vld [vmem:[#allocation7 + $0x34] sm:$0xf]
        %v385 = vld [vmem:[#allocation7 + $0x38] sm:$0xf]
        %v386 = vld [vmem:[#allocation7 + $0x3c] sm:$0xf]
        %s387 = scalar_lea.vmem [#allocation7], 64
        %v388 = vld [vmem:[%s387] sm:$0xf]
        %v389 = vld [vmem:[%s387 + $0x4] sm:$0xf]
        %v390 = vld [vmem:[%s387 + $0x8] sm:$0xf]
        %v391 = vld [vmem:[%s387 + $0xc] sm:$0xf]
        %v392 = vld [vmem:[%s387 + $0x10] sm:$0xf]
        %v393 = vld [vmem:[%s387 + $0x14] sm:$0xf]
        %v394 = vld [vmem:[%s387 + $0x18] sm:$0xf]
        %v395 = vld [vmem:[%s387 + $0x1c] sm:$0xf]
        %v396 = vld [vmem:[%s387 + $0x20] sm:$0xf]
        %v397 = vld [vmem:[%s387 + $0x24] sm:$0xf]
        %v398 = vld [vmem:[%s387 + $0x28] sm:$0xf]
        %v399 = vld [vmem:[%s387 + $0x2c] sm:$0xf]
        %v400 = vld [vmem:[%s387 + $0x30] sm:$0xf]
        %v401 = vld [vmem:[%s387 + $0x34] sm:$0xf]
        %v402 = vld [vmem:[%s387 + $0x38] sm:$0xf]
        %v403 = vld [vmem:[%s387 + $0x3c] sm:$0xf]
        %s404 = scalar_lea.vmem [#allocation7], 128
        %v405 = vld [vmem:[%s404] sm:$0xf]
        %v406 = vld [vmem:[%s404 + $0x4] sm:$0xf]
        %v407 = vld [vmem:[%s404 + $0x8] sm:$0xf]
        %v408 = vld [vmem:[%s404 + $0xc] sm:$0xf]
        %v409 = vld [vmem:[%s404 + $0x10] sm:$0xf]
        %v410 = vld [vmem:[%s404 + $0x14] sm:$0xf]
        %v411 = vld [vmem:[%s404 + $0x18] sm:$0xf]
        %v412 = vld [vmem:[%s404 + $0x1c] sm:$0xf]
        %v413 = vld [vmem:[%s404 + $0x20] sm:$0xf]
        %v414 = vld [vmem:[%s404 + $0x24] sm:$0xf]
        %v415 = vld [vmem:[%s404 + $0x28] sm:$0xf]
        %v416 = vld [vmem:[%s404 + $0x2c] sm:$0xf]
        %v417 = vld [vmem:[%s404 + $0x30] sm:$0xf]
        %v418 = vld [vmem:[%s404 + $0x34] sm:$0xf]
        %v419 = vld [vmem:[%s404 + $0x38] sm:$0xf]
        %v420 = vld [vmem:[%s404 + $0x3c] sm:$0xf]
        %v421 = vld [vmem:[#allocation5] sm:$0xf]
        %v422 = vld [vmem:[#allocation5 + $0x4] sm:$0xf]
        %v423 = vld [vmem:[#allocation5 + $0x8] sm:$0xf]
        %v424 = vld [vmem:[#allocation5 + $0xc] sm:$0xf]
        %s425 = scalar_lea.vmem [#allocation5], 16
        %v426 = vld [vmem:[%s425] sm:$0xf]
        %v427 = vld [vmem:[%s425 + $0x4] sm:$0xf]
        %v428 = vld [vmem:[%s425 + $0x8] sm:$0xf]
        %v429 = vld [vmem:[%s425 + $0xc] sm:$0xf]
        %s430 = scalar_lea.vmem [#allocation5], 32
        %v431 = vld [vmem:[%s430] sm:$0xf]
        %v432 = vld [vmem:[%s430 + $0x4] sm:$0xf]
        %v433 = vld [vmem:[%s430 + $0x8] sm:$0xf]
        %v434 = vld [vmem:[%s430 + $0xc] sm:$0xf]
        %v435 = vld [vmem:[#allocation10] sm:$0xf]
        %v436 = vld [vmem:[#allocation10 + $0x4] sm:$0xf]
        %v437 = vld [vmem:[#allocation10 + $0x8] sm:$0xf]
        %v438 = vld [vmem:[#allocation10 + $0xc] sm:$0xf]
        %s439 = scalar_lea.vmem [#allocation10], 16
        %v440 = vld [vmem:[%s439] sm:$0xf]
        %v441 = vld [vmem:[%s439 + $0x4] sm:$0xf]
        %v442 = vld [vmem:[%s439 + $0x8] sm:$0xf]
        %v443 = vld [vmem:[%s439 + $0xc] sm:$0xf]
        %s444 = scalar_lea.vmem [#allocation10], 32
        %v445 = vld [vmem:[%s444] sm:$0xf]
        %v446 = vld [vmem:[%s444 + $0x4] sm:$0xf]
        %v447 = vld [vmem:[%s444 + $0x8] sm:$0xf]
        %v448 = vld [vmem:[%s444 + $0xc] sm:$0xf]
        %v449 = vld [vmem:[#allocation11] sm:$0xf]
        %v450 = vld [vmem:[#allocation11 + $0x4] sm:$0xf]
        %v451 = vld [vmem:[#allocation11 + $0x8] sm:$0xf]
        %v452 = vld [vmem:[#allocation11 + $0xc] sm:$0xf]
        %v453 = vld [vmem:[#allocation11 + $0x10] sm:$0xf]
        %v454 = vld [vmem:[#allocation11 + $0x14] sm:$0xf]
        %v455 = vld [vmem:[#allocation11 + $0x18] sm:$0xf]
        %v456 = vld [vmem:[#allocation11 + $0x1c] sm:$0xf]
        %v457 = vld [vmem:[#allocation11 + $0x20] sm:$0xf]
        %v458 = vld [vmem:[#allocation11 + $0x24] sm:$0xf]
        %v459 = vld [vmem:[#allocation11 + $0x28] sm:$0xf]
        %v460 = vld [vmem:[#allocation11 + $0x2c] sm:$0xf]
        %v461 = vld [vmem:[#allocation11 + $0x30] sm:$0xf]
        %v462 = vld [vmem:[#allocation11 + $0x34] sm:$0xf]
        %v463 = vld [vmem:[#allocation11 + $0x38] sm:$0xf]
        %v464 = vld [vmem:[#allocation11 + $0x3c] sm:$0xf]
        %s465 = scalar_lea.vmem [#allocation11], 64
        %v466 = vld [vmem:[%s465] sm:$0xf]
        %v467 = vld [vmem:[%s465 + $0x4] sm:$0xf]
        %v468 = vld [vmem:[%s465 + $0x8] sm:$0xf]
        %v469 = vld [vmem:[%s465 + $0xc] sm:$0xf]
        %v470 = vld [vmem:[%s465 + $0x10] sm:$0xf]
        %v471 = vld [vmem:[%s465 + $0x14] sm:$0xf]
        %v472 = vld [vmem:[%s465 + $0x18] sm:$0xf]
        %v473 = vld [vmem:[%s465 + $0x1c] sm:$0xf]
        %v474 = vld [vmem:[%s465 + $0x20] sm:$0xf]
        %v475 = vld [vmem:[%s465 + $0x24] sm:$0xf]
        %v476 = vld [vmem:[%s465 + $0x28] sm:$0xf]
        %v477 = vld [vmem:[%s465 + $0x2c] sm:$0xf]
        %v478 = vld [vmem:[%s465 + $0x30] sm:$0xf]
        %v479 = vld [vmem:[%s465 + $0x34] sm:$0xf]
        %v480 = vld [vmem:[%s465 + $0x38] sm:$0xf]
        %v481 = vld [vmem:[%s465 + $0x3c] sm:$0xf]
        %s482 = scalar_lea.vmem [#allocation11], 128
        %v483 = vld [vmem:[%s482] sm:$0xf]
        %v484 = vld [vmem:[%s482 + $0x4] sm:$0xf]
        %v485 = vld [vmem:[%s482 + $0x8] sm:$0xf]
        %v486 = vld [vmem:[%s482 + $0xc] sm:$0xf]
        %v487 = vld [vmem:[%s482 + $0x10] sm:$0xf]
        %v488 = vld [vmem:[%s482 + $0x14] sm:$0xf]
        %v489 = vld [vmem:[%s482 + $0x18] sm:$0xf]
        %v490 = vld [vmem:[%s482 + $0x1c] sm:$0xf]
        %v491 = vld [vmem:[%s482 + $0x20] sm:$0xf]
        %v492 = vld [vmem:[%s482 + $0x24] sm:$0xf]
        %v493 = vld [vmem:[%s482 + $0x28] sm:$0xf]
        %v494 = vld [vmem:[%s482 + $0x2c] sm:$0xf]
        %v495 = vld [vmem:[%s482 + $0x30] sm:$0xf]
        %v496 = vld [vmem:[%s482 + $0x34] sm:$0xf]
        %v497 = vld [vmem:[%s482 + $0x38] sm:$0xf]
        %v498 = vld [vmem:[%s482 + $0x3c] sm:$0xf]
        %v499 = vld [vmem:[#allocation8] sm:$0xf]
        %v500 = vld [vmem:[#allocation8 + $0x4] sm:$0xf]
        %v501 = vld [vmem:[#allocation8 + $0x8] sm:$0xf]
        %v502 = vld [vmem:[#allocation8 + $0xc] sm:$0xf]
        %v503 = vunpack.c.l.bf16 %v499
        %v504 = vunpack.c.l.bf16 %v500
        %v505 = vunpack.c.l.bf16 %v501
        %v506 = vunpack.c.l.bf16 %v502
        %s507 = scalar_lea.vmem [#allocation8], 16
        %v508 = vld [vmem:[%s507] sm:$0xf]
        %v509 = vld [vmem:[%s507 + $0x4] sm:$0xf]
        %v510 = vld [vmem:[%s507 + $0x8] sm:$0xf]
        %v511 = vld [vmem:[%s507 + $0xc] sm:$0xf]
        %v512 = vunpack.c.l.bf16 %v508
        %v513 = vunpack.c.l.bf16 %v509
        %v514 = vunpack.c.l.bf16 %v510
        %v515 = vunpack.c.l.bf16 %v511
        %v516 = vld [vmem:[%s319] sm:$0xf]
        %v517 = vld [vmem:[%s319 + $0x4] sm:$0xf]
        %v518 = vld [vmem:[%s319 + $0x8] sm:$0xf]
        %v519 = vld [vmem:[%s319 + $0xc] sm:$0xf]
        %v520 = vld [vmem:[%s319 + $0x10] sm:$0xf]
        %v521 = vld [vmem:[%s319 + $0x14] sm:$0xf]
        %v522 = vld [vmem:[%s319 + $0x18] sm:$0xf]
        %v523 = vld [vmem:[%s319 + $0x1c] sm:$0xf]
        %s524 = scalar_lea.vmem %s319, 32 [#allocation2]
        %v525 = vld [vmem:[%s524] sm:$0xf]
        %v526 = vld [vmem:[%s524 + $0x4] sm:$0xf]
        %v527 = vld [vmem:[%s524 + $0x8] sm:$0xf]
        %v528 = vld [vmem:[%s524 + $0xc] sm:$0xf]
        %v529 = vld [vmem:[%s524 + $0x10] sm:$0xf]
        %v530 = vld [vmem:[%s524 + $0x14] sm:$0xf]
        %v531 = vld [vmem:[%s524 + $0x18] sm:$0xf]
        %v532 = vld [vmem:[%s524 + $0x1c] sm:$0xf]
        %v541 = vunpack.c.l.b16 %v516
        %v542 = vunpack.c.l.b16 %v517
        %v543 = vunpack.c.l.b16 %v518
        %v544 = vunpack.c.l.b16 %v519
        %v545 = vunpack.c.l.b16 %v520
        %v546 = vunpack.c.l.b16 %v521
        %v547 = vunpack.c.l.b16 %v522
        %v548 = vunpack.c.l.b16 %v523
        %v549 = vpack.c.b16 %v542, %v541
        %v550 = vpack.c.b16 %v544, %v543
        %v551 = vpack.c.b16 %v546, %v545
        %v552 = vpack.c.b16 %v548, %v547
        %v573 = vunpack.c.l.b16 %v371
        %v574 = vunpack.c.l.b16 %v372
        %v575 = vunpack.c.l.b16 %v373
        %v576 = vunpack.c.l.b16 %v374
        %v577 = vunpack.c.l.b16 %v375
        %v578 = vunpack.c.l.b16 %v376
        %v579 = vunpack.c.l.b16 %v377
        %v580 = vunpack.c.l.b16 %v378
        %v581 = vunpack.c.l.b16 %v379
        %v582 = vunpack.c.l.b16 %v380
        %v583 = vunpack.c.l.b16 %v381
        %v584 = vunpack.c.l.b16 %v382
        %v585 = vunpack.c.l.b16 %v383
        %v586 = vunpack.c.l.b16 %v384
        %v587 = vunpack.c.l.b16 %v385
        %v588 = vunpack.c.l.b16 %v386
        %v589 = vpack.c.b16 %v574, %v573
        %v590 = vpack.c.b16 %v576, %v575
        %v591 = vpack.c.b16 %v578, %v577
        %v592 = vpack.c.b16 %v580, %v579
        %v593 = vpack.c.b16 %v582, %v581
        %v594 = vpack.c.b16 %v584, %v583
        %v595 = vpack.c.b16 %v586, %v585
        %v596 = vpack.c.b16 %v588, %v587
        %605 = vmatprep.subr.bf16.mxu0 0
        %606 = vmatpush1.bf16.msra.mxu0 %v589
        %607 = vmatprep.subr.bf16.mxu0 0
        %608 = vmatpush1.bf16.msra.mxu0 %v590
        %609 = vmatprep.subr.bf16.mxu0 0
        %610 = vmatpush1.bf16.msra.mxu0 %v591
        %611 = vmatprep.subr.bf16.mxu0 0
        %612 = vmatpush1.bf16.msra.mxu0 %v592
        %613 = vmatprep.subr.bf16.mxu0 0
        %614 = vmatpush1.bf16.msra.mxu0 %v593
        %615 = vmatprep.subr.bf16.mxu0 0
        %616 = vmatpush1.bf16.msra.mxu0 %v594
        %617 = vmatprep.subr.bf16.mxu0 0
        %618 = vmatpush1.bf16.msra.mxu0 %v595
        %619 = vmatprep.subr.bf16.mxu0 0
        %620 = vmatpush1.bf16.msra.mxu0 %v596
        %621 = vmatprep.subr.bf16.mxu0 0
        %622 = vmatpush1.bf16.msra.mxu0 0
        %623 = vmatprep.subr.bf16.mxu0 0
        %624 = vmatpush1.bf16.msra.mxu0 0
        %625 = vmatprep.subr.bf16.mxu0 0
        %626 = vmatpush1.bf16.msra.mxu0 0
        %627 = vmatprep.subr.bf16.mxu0 0
        %628 = vmatpush1.bf16.msra.mxu0 0
        %629 = vmatprep.subr.bf16.mxu0 0
        %630 = vmatpush1.bf16.msra.mxu0 0
        %631 = vmatprep.subr.bf16.mxu0 0
        %632 = vmatpush1.bf16.msra.mxu0 0
        %633 = vmatprep.subr.bf16.mxu0 0
        %634 = vmatpush1.bf16.msra.mxu0 0
        %635 = vmatprep.subr.bf16.mxu0 0
        %636 = vmatpush1.bf16.msra.mxu0 0
        %637 = vmatprep.mubr.bf16.mxu0 0
        %638 = vmatmul.mubr.bf16.gmra.mrb[0].mxu0 %v549
        %v639 = vpop.f32.mrb[0].mxu0
        %v640 = vadd.f32 0.0, %v639
        %v641 = vpop.f32.mrb[0].mxu0
        %v642 = vpop.f32.mrb[0].mxu0
        %v643 = vadd.f32 0.0, %v642
        %v644 = vpop.f32.mrb[0].mxu0
        %645 = vmatprep.mubr.bf16.mxu0 0
        %646 = vmatmul.mubr.bf16.gmra.mrb[0].mxu0 %v550
        %v647 = vpop.f32.mrb[0].mxu0
        %v648 = vadd.f32 0.0, %v647
        %v649 = vpop.f32.mrb[0].mxu0
        %v650 = vpop.f32.mrb[0].mxu0
        %v651 = vadd.f32 0.0, %v650
        %v652 = vpop.f32.mrb[0].mxu0
        %653 = vmatprep.mubr.bf16.mxu0 0
        %654 = vmatmul.mubr.bf16.gmra.mrb[0].mxu0 %v551
        %v655 = vpop.f32.mrb[0].mxu0
        %v656 = vadd.f32 0.0, %v655
        %v657 = vpop.f32.mrb[0].mxu0
        %v658 = vpop.f32.mrb[0].mxu0
        %v659 = vadd.f32 0.0, %v658
        %v660 = vpop.f32.mrb[0].mxu0
        %661 = vmatprep.mubr.bf16.mxu0 0
        %662 = vmatmul.mubr.bf16.gmra.mrb[0].mxu0 %v552
        %v663 = vpop.f32.mrb[0].mxu0
        %v664 = vadd.f32 0.0, %v663
        %v665 = vpop.f32.mrb[0].mxu0
        %v666 = vpop.f32.mrb[0].mxu0
        %v667 = vadd.f32 0.0, %v666
        %v668 = vpop.f32.mrb[0].mxu0
        %669 = vdwg.mxu0
        %v678 = vunpack.c.l.b16 %v525
        %v679 = vunpack.c.l.b16 %v526
        %v680 = vunpack.c.l.b16 %v527
        %v681 = vunpack.c.l.b16 %v528
        %v682 = vunpack.c.l.b16 %v529
        %v683 = vunpack.c.l.b16 %v530
        %v684 = vunpack.c.l.b16 %v531
        %v685 = vunpack.c.l.b16 %v532
        %v686 = vpack.c.b16 %v679, %v678
        %v687 = vpack.c.b16 %v681, %v680
        %v688 = vpack.c.b16 %v683, %v682
        %v689 = vpack.c.b16 %v685, %v684
        %v710 = vunpack.c.l.b16 %v388
        %v711 = vunpack.c.l.b16 %v389
        %v712 = vunpack.c.l.b16 %v390
        %v713 = vunpack.c.l.b16 %v391
        %v714 = vunpack.c.l.b16 %v392
        %v715 = vunpack.c.l.b16 %v393
        %v716 = vunpack.c.l.b16 %v394
        %v717 = vunpack.c.l.b16 %v395
        %v718 = vunpack.c.l.b16 %v396
        %v719 = vunpack.c.l.b16 %v397
        %v720 = vunpack.c.l.b16 %v398
        %v721 = vunpack.c.l.b16 %v399
        %v722 = vunpack.c.l.b16 %v400
        %v723 = vunpack.c.l.b16 %v401
        %v724 = vunpack.c.l.b16 %v402
        %v725 = vunpack.c.l.b16 %v403
        %v726 = vpack.c.b16 %v711, %v710
        %v727 = vpack.c.b16 %v713, %v712
        %v728 = vpack.c.b16 %v715, %v714
        %v729 = vpack.c.b16 %v717, %v716
        %v730 = vpack.c.b16 %v719, %v718
        %v731 = vpack.c.b16 %v721, %v720
        %v732 = vpack.c.b16 %v723, %v722
        %v733 = vpack.c.b16 %v725, %v724
        %742 = vmatprep.subr.bf16.mxu0 0
        %743 = vmatpush1.bf16.msra.mxu0 %v726
        %744 = vmatprep.subr.bf16.mxu0 0
        %745 = vmatpush1.bf16.msra.mxu0 %v727
        %746 = vmatprep.subr.bf16.mxu0 0
        %747 = vmatpush1.bf16.msra.mxu0 %v728
        %748 = vmatprep.subr.bf16.mxu0 0
        %749 = vmatpush1.bf16.msra.mxu0 %v729
        %750 = vmatprep.subr.bf16.mxu0 0
        %751 = vmatpush1.bf16.msra.mxu0 %v730
        %752 = vmatprep.subr.bf16.mxu0 0
        %753 = vmatpush1.bf16.msra.mxu0 %v731
        %754 = vmatprep.subr.bf16.mxu0 0
        %755 = vmatpush1.bf16.msra.mxu0 %v732
        %756 = vmatprep.subr.bf16.mxu0 0
        %757 = vmatpush1.bf16.msra.mxu0 %v733
        %758 = vmatprep.subr.bf16.mxu0 0
        %759 = vmatpush1.bf16.msra.mxu0 0
        %760 = vmatprep.subr.bf16.mxu0 0
        %761 = vmatpush1.bf16.msra.mxu0 0
        %762 = vmatprep.subr.bf16.mxu0 0
        %763 = vmatpush1.bf16.msra.mxu0 0
        %764 = vmatprep.subr.bf16.mxu0 0
        %765 = vmatpush1.bf16.msra.mxu0 0
        %766 = vmatprep.subr.bf16.mxu0 0
        %767 = vmatpush1.bf16.msra.mxu0 0
        %768 = vmatprep.subr.bf16.mxu0 0
        %769 = vmatpush1.bf16.msra.mxu0 0
        %770 = vmatprep.subr.bf16.mxu0 0
        %771 = vmatpush1.bf16.msra.mxu0 0
        %772 = vmatprep.subr.bf16.mxu0 0
        %773 = vmatpush1.bf16.msra.mxu0 0
        %774 = vmatprep.mubr.bf16.mxu0 0
        %775 = vmatmul.mubr.bf16.gmra.mrb[0].mxu0 %v686
        %v776 = vpop.f32.mrb[0].mxu0
        %v777 = vadd.f32 0.0, %v776
        %v778 = vpop.f32.mrb[0].mxu0
        %v779 = vpop.f32.mrb[0].mxu0
        %v780 = vadd.f32 0.0, %v779
        %v781 = vpop.f32.mrb[0].mxu0
        %782 = vmatprep.mubr.bf16.mxu0 0
        %783 = vmatmul.mubr.bf16.gmra.mrb[0].mxu0 %v687
        %v784 = vpop.f32.mrb[0].mxu0
        %v785 = vadd.f32 0.0, %v784
        %v786 = vpop.f32.mrb[0].mxu0
        %v787 = vpop.f32.mrb[0].mxu0
        %v788 = vadd.f32 0.0, %v787
        %v789 = vpop.f32.mrb[0].mxu0
        %790 = vmatprep.mubr.bf16.mxu0 0
        %791 = vmatmul.mubr.bf16.gmra.mrb[0].mxu0 %v688
        %v792 = vpop.f32.mrb[0].mxu0
        %v793 = vadd.f32 0.0, %v792
        %v794 = vpop.f32.mrb[0].mxu0
        %v795 = vpop.f32.mrb[0].mxu0
        %v796 = vadd.f32 0.0, %v795
        %v797 = vpop.f32.mrb[0].mxu0
        %798 = vmatprep.mubr.bf16.mxu0 0
        %799 = vmatmul.mubr.bf16.gmra.mrb[0].mxu0 %v689
        %v800 = vpop.f32.mrb[0].mxu0
        %v801 = vadd.f32 0.0, %v800
        %v802 = vpop.f32.mrb[0].mxu0
        %v803 = vpop.f32.mrb[0].mxu0
        %v804 = vadd.f32 0.0, %v803
        %v805 = vpop.f32.mrb[0].mxu0
        %806 = vdwg.mxu0
        %v807 = vadd.bf16 %v516, %v525
        %v808 = vadd.bf16 %v517, %v526
        %v809 = vadd.bf16 %v518, %v527
        %v810 = vadd.bf16 %v519, %v528
        %v811 = vadd.bf16 %v520, %v529
        %v812 = vadd.bf16 %v521, %v530
        %v813 = vadd.bf16 %v522, %v531
        %v814 = vadd.bf16 %v523, %v532
        %v823 = vunpack.c.l.b16 %v807
        %v824 = vunpack.c.l.b16 %v808
        %v825 = vunpack.c.l.b16 %v809
        %v826 = vunpack.c.l.b16 %v810
        %v827 = vunpack.c.l.b16 %v811
        %v828 = vunpack.c.l.b16 %v812
        %v829 = vunpack.c.l.b16 %v813
        %v830 = vunpack.c.l.b16 %v814
        %v831 = vpack.c.b16 %v824, %v823
        %v832 = vpack.c.b16 %v826, %v825
        %v833 = vpack.c.b16 %v828, %v827
        %v834 = vpack.c.b16 %v830, %v829
        %v855 = vunpack.c.l.b16 %v405
        %v856 = vunpack.c.l.b16 %v406
        %v857 = vunpack.c.l.b16 %v407
        %v858 = vunpack.c.l.b16 %v408
        %v859 = vunpack.c.l.b16 %v409
        %v860 = vunpack.c.l.b16 %v410
        %v861 = vunpack.c.l.b16 %v411
        %v862 = vunpack.c.l.b16 %v412
        %v863 = vunpack.c.l.b16 %v413
        %v864 = vunpack.c.l.b16 %v414
        %v865 = vunpack.c.l.b16 %v415
        %v866 = vunpack.c.l.b16 %v416
        %v867 = vunpack.c.l.b16 %v417
        %v868 = vunpack.c.l.b16 %v418
        %v869 = vunpack.c.l.b16 %v419
        %v870 = vunpack.c.l.b16 %v420
        %v871 = vpack.c.b16 %v856, %v855
        %v872 = vpack.c.b16 %v858, %v857
        %v873 = vpack.c.b16 %v860, %v859
        %v874 = vpack.c.b16 %v862, %v861
        %v875 = vpack.c.b16 %v864, %v863
        %v876 = vpack.c.b16 %v866, %v865
        %v877 = vpack.c.b16 %v868, %v867
        %v878 = vpack.c.b16 %v870, %v869
        %887 = vmatprep.subr.bf16.mxu0 0
        %888 = vmatpush1.bf16.msra.mxu0 %v871
        %889 = vmatprep.subr.bf16.mxu0 0
        %890 = vmatpush1.bf16.msra.mxu0 %v872
        %891 = vmatprep.subr.bf16.mxu0 0
        %892 = vmatpush1.bf16.msra.mxu0 %v873
        %893 = vmatprep.subr.bf16.mxu0 0
        %894 = vmatpush1.bf16.msra.mxu0 %v874
        %895 = vmatprep.subr.bf16.mxu0 0
        %896 = vmatpush1.bf16.msra.mxu0 %v875
        %897 = vmatprep.subr.bf16.mxu0 0
        %898 = vmatpush1.bf16.msra.mxu0 %v876
        %899 = vmatprep.subr.bf16.mxu0 0
        %900 = vmatpush1.bf16.msra.mxu0 %v877
        %901 = vmatprep.subr.bf16.mxu0 0
        %902 = vmatpush1.bf16.msra.mxu0 %v878
        %903 = vmatprep.subr.bf16.mxu0 0
        %904 = vmatpush1.bf16.msra.mxu0 0
        %905 = vmatprep.subr.bf16.mxu0 0
        %906 = vmatpush1.bf16.msra.mxu0 0
        %907 = vmatprep.subr.bf16.mxu0 0
        %908 = vmatpush1.bf16.msra.mxu0 0
        %909 = vmatprep.subr.bf16.mxu0 0
        %910 = vmatpush1.bf16.msra.mxu0 0
        %911 = vmatprep.subr.bf16.mxu0 0
        %912 = vmatpush1.bf16.msra.mxu0 0
        %913 = vmatprep.subr.bf16.mxu0 0
        %914 = vmatpush1.bf16.msra.mxu0 0
        %915 = vmatprep.subr.bf16.mxu0 0
        %916 = vmatpush1.bf16.msra.mxu0 0
        %917 = vmatprep.subr.bf16.mxu0 0
        %918 = vmatpush1.bf16.msra.mxu0 0
        %919 = vmatprep.mubr.bf16.mxu0 0
        %920 = vmatmul.mubr.bf16.gmra.mrb[0].mxu0 %v831
        %v921 = vpop.f32.mrb[0].mxu0
        %v922 = vadd.f32 0.0, %v921
        %v923 = vpop.f32.mrb[0].mxu0
        %v924 = vpop.f32.mrb[0].mxu0
        %v925 = vadd.f32 0.0, %v924
        %v926 = vpop.f32.mrb[0].mxu0
        %927 = vmatprep.mubr.bf16.mxu0 0
        %928 = vmatmul.mubr.bf16.gmra.mrb[0].mxu0 %v832
        %v929 = vpop.f32.mrb[0].mxu0
        %v930 = vadd.f32 0.0, %v929
        %v931 = vpop.f32.mrb[0].mxu0
        %v932 = vpop.f32.mrb[0].mxu0
        %v933 = vadd.f32 0.0, %v932
        %v934 = vpop.f32.mrb[0].mxu0
        %935 = vmatprep.mubr.bf16.mxu0 0
        %936 = vmatmul.mubr.bf16.gmra.mrb[0].mxu0 %v833
        %v937 = vpop.f32.mrb[0].mxu0
        %v938 = vadd.f32 0.0, %v937
        %v939 = vpop.f32.mrb[0].mxu0
        %v940 = vpop.f32.mrb[0].mxu0
        %v941 = vadd.f32 0.0, %v940
        %v942 = vpop.f32.mrb[0].mxu0
        %943 = vmatprep.mubr.bf16.mxu0 0
        %944 = vmatmul.mubr.bf16.gmra.mrb[0].mxu0 %v834
        %v945 = vpop.f32.mrb[0].mxu0
        %v946 = vadd.f32 0.0, %v945
        %v947 = vpop.f32.mrb[0].mxu0
        %v948 = vpop.f32.mrb[0].mxu0
        %v949 = vadd.f32 0.0, %v948
        %v950 = vpop.f32.mrb[0].mxu0
        %951 = vdwg.mxu0
        %v952 = vsub.f32 %v640, %v777
        %v953 = vsub.f32 %v643, %v780
        %v954 = vsub.f32 %v648, %v785
        %v955 = vsub.f32 %v651, %v788
        %v956 = vsub.f32 %v656, %v793
        %v957 = vsub.f32 %v659, %v796
        %v958 = vsub.f32 %v664, %v801
        %v959 = vsub.f32 %v667, %v804
        %v960 = vsub.f32 %v922, %v640
        %v961 = vsub.f32 %v925, %v643
        %v962 = vsub.f32 %v930, %v648
        %v963 = vsub.f32 %v933, %v651
        %v964 = vsub.f32 %v938, %v656
        %v965 = vsub.f32 %v941, %v659
        %v966 = vsub.f32 %v946, %v664
        %v967 = vsub.f32 %v949, %v667
        %v968 = vsub.f32 %v960, %v777
        %v969 = vsub.f32 %v961, %v780
        %v970 = vsub.f32 %v962, %v785
        %v971 = vsub.f32 %v963, %v788
        %v972 = vsub.f32 %v964, %v793
        %v973 = vsub.f32 %v965, %v796
        %v974 = vsub.f32 %v966, %v801
        %v975 = vsub.f32 %v967, %v804
        %976 = vst [vmem:[%s367] sm:$0xff] %v952
        %977 = vst [vmem:[%s367 + $0x8] sm:$0xff] %v953
        %978 = vst [vmem:[%s367 + $0x10] sm:$0xff] %v954
        %979 = vst [vmem:[%s367 + $0x18] sm:$0xff] %v955
        %980 = vst [vmem:[%s367 + $0x20] sm:$0xff] %v956
        %981 = vst [vmem:[%s367 + $0x28] sm:$0xff] %v957
        %982 = vst [vmem:[%s367 + $0x30] sm:$0xff] %v958
        %983 = vst [vmem:[%s367 + $0x38] sm:$0xff] %v959
        %s984 = scalar_lea.vmem %s367, 64 [#allocation13]
        %985 = vst [vmem:[%s984] sm:$0xff] %v968
        %986 = vst [vmem:[%s984 + $0x8] sm:$0xff] %v969
        %987 = vst [vmem:[%s984 + $0x10] sm:$0xff] %v970
        %988 = vst [vmem:[%s984 + $0x18] sm:$0xff] %v971
        %989 = vst [vmem:[%s984 + $0x20] sm:$0xff] %v972
        %990 = vst [vmem:[%s984 + $0x28] sm:$0xff] %v973
        %991 = vst [vmem:[%s984 + $0x30] sm:$0xff] %v974
        %992 = vst [vmem:[%s984 + $0x38] sm:$0xff] %v975
        %v993 = vld [vmem:[%s367] sm:$0xff]
        %v994 = vld [vmem:[%s367 + $0x8] sm:$0xff]
        %v995 = vld [vmem:[%s367 + $0x10] sm:$0xff]
        %v996 = vld [vmem:[%s367 + $0x18] sm:$0xff]
        %s997 = sadd.s32 0, 64
        %s998 = scalar_lea.vmem %s367, %s997 [#allocation13]
        %v999 = vld [vmem:[%s998] sm:$0xff]
        %v1000 = vld [vmem:[%s998 + $0x8] sm:$0xff]
        %v1001 = vld [vmem:[%s998 + $0x10] sm:$0xff]
        %v1002 = vld [vmem:[%s998 + $0x18] sm:$0xff]
        %v1003 = vpack.c.bf16 %v994, %v993
        %v1004 = vpack.c.bf16 %v996, %v995
        %v1005 = vpack.c.bf16 %v1000, %v999
        %v1006 = vpack.c.bf16 %v1002, %v1001
        %v1011 = vunpack.c.l.b16 %v421
        %v1012 = vunpack.c.l.b16 %v422
        %v1013 = vunpack.c.l.b16 %v423
        %v1014 = vunpack.c.l.b16 %v424
        %v1015 = vpack.c.b16 %v1012, %v1011
        %v1016 = vpack.c.b16 %v1014, %v1013
        %vm1017 = vcmask 261120
        %v1019 = vsel %vm1017, %v1015, 0
        %v1022 = vsel %vm1017, %v1016, 0
        %1024 = vmatprep.subr.bf16.mxu0 0
        %1025 = vmatpush1.bf16.msra.mxu0 %v1003
        %1026 = vmatprep.subr.bf16.mxu0 0
        %1027 = vmatpush1.bf16.msra.mxu0 %v1004
        %1028 = vmatprep.subr.bf16.mxu0 0
        %1029 = vmatpush1.bf16.msra.mxu0 0
        %1030 = vmatprep.subr.bf16.mxu0 0
        %1031 = vmatpush1.bf16.msra.mxu0 0
        %1032 = vmatprep.subr.bf16.mxu0 0
        %1033 = vmatpush1.bf16.msra.mxu0 0
        %1034 = vmatprep.subr.bf16.mxu0 0
        %1035 = vmatpush1.bf16.msra.mxu0 0
        %1036 = vmatprep.subr.bf16.mxu0 0
        %1037 = vmatpush1.bf16.msra.mxu0 0
        %1038 = vmatprep.subr.bf16.mxu0 0
        %1039 = vmatpush1.bf16.msra.mxu0 0
        %1040 = vmatprep.subr.bf16.mxu0 0
        %1041 = vmatpush1.bf16.msra.mxu0 0
        %1042 = vmatprep.subr.bf16.mxu0 0
        %1043 = vmatpush1.bf16.msra.mxu0 0
        %1044 = vmatprep.subr.bf16.mxu0 0
        %1045 = vmatpush1.bf16.msra.mxu0 0
        %1046 = vmatprep.subr.bf16.mxu0 0
        %1047 = vmatpush1.bf16.msra.mxu0 0
        %1048 = vmatprep.subr.bf16.mxu0 0
        %1049 = vmatpush1.bf16.msra.mxu0 0
        %1050 = vmatprep.subr.bf16.mxu0 0
        %1051 = vmatpush1.bf16.msra.mxu0 0
        %1052 = vmatprep.subr.bf16.mxu0 0
        %1053 = vmatpush1.bf16.msra.mxu0 0
        %1054 = vmatprep.subr.bf16.mxu0 0
        %1055 = vmatpush1.bf16.msra.mxu0 0
        %1056 = vmatprep.mubr.bf16.mxu0 0
        %1057 = vmatmul.mubr.bf16.gmra.mrb[0].mxu0 %v1019
        %v1058 = vpop.f32.mrb[0].mxu0
        %v1059 = vadd.f32 0.0, %v1058
        %v1060 = vpop.f32.mrb[0].mxu0
        %v1061 = vpop.f32.mrb[0].mxu0
        %v1062 = vadd.f32 0.0, %v1061
        %v1063 = vpop.f32.mrb[0].mxu0
        %1064 = vmatprep.mubr.bf16.mxu0 0
        %1065 = vmatmul.mubr.bf16.gmra.mrb[0].mxu0 %v1022
        %v1066 = vpop.f32.mrb[0].mxu0
        %v1067 = vadd.f32 0.0, %v1066
        %v1068 = vpop.f32.mrb[0].mxu0
        %v1069 = vpop.f32.mrb[0].mxu0
        %v1070 = vadd.f32 0.0, %v1069
        %v1071 = vpop.f32.mrb[0].mxu0
        %1072 = vdwg.mxu0
        %v1077 = vunpack.c.l.b16 %v426
        %v1078 = vunpack.c.l.b16 %v427
        %v1079 = vunpack.c.l.b16 %v428
        %v1080 = vunpack.c.l.b16 %v429
        %v1081 = vpack.c.b16 %v1078, %v1077
        %v1082 = vpack.c.b16 %v1080, %v1079
        %v1084 = vsel %vm1017, %v1081, 0
        %v1087 = vsel %vm1017, %v1082, 0
        %1089 = vmatprep.subr.bf16.mxu0 0
        %1090 = vmatpush1.bf16.msra.mxu0 %v1005
        %1091 = vmatprep.subr.bf16.mxu0 0
        %1092 = vmatpush1.bf16.msra.mxu0 %v1006
        %1093 = vmatprep.subr.bf16.mxu0 0
        %1094 = vmatpush1.bf16.msra.mxu0 0
        %1095 = vmatprep.subr.bf16.mxu0 0
        %1096 = vmatpush1.bf16.msra.mxu0 0
        %1097 = vmatprep.subr.bf16.mxu0 0
        %1098 = vmatpush1.bf16.msra.mxu0 0
        %1099 = vmatprep.subr.bf16.mxu0 0
        %1100 = vmatpush1.bf16.msra.mxu0 0
        %1101 = vmatprep.subr.bf16.mxu0 0
        %1102 = vmatpush1.bf16.msra.mxu0 0
        %1103 = vmatprep.subr.bf16.mxu0 0
        %1104 = vmatpush1.bf16.msra.mxu0 0
        %1105 = vmatprep.subr.bf16.mxu0 0
        %1106 = vmatpush1.bf16.msra.mxu0 0
        %1107 = vmatprep.subr.bf16.mxu0 0
        %1108 = vmatpush1.bf16.msra.mxu0 0
        %1109 = vmatprep.subr.bf16.mxu0 0
        %1110 = vmatpush1.bf16.msra.mxu0 0
        %1111 = vmatprep.subr.bf16.mxu0 0
        %1112 = vmatpush1.bf16.msra.mxu0 0
        %1113 = vmatprep.subr.bf16.mxu0 0
        %1114 = vmatpush1.bf16.msra.mxu0 0
        %1115 = vmatprep.subr.bf16.mxu0 0
        %1116 = vmatpush1.bf16.msra.mxu0 0
        %1117 = vmatprep.subr.bf16.mxu0 0
        %1118 = vmatpush1.bf16.msra.mxu0 0
        %1119 = vmatprep.subr.bf16.mxu0 0
        %1120 = vmatpush1.bf16.msra.mxu0 0
        %1121 = vmatprep.mubr.bf16.mxu0 0
        %1122 = vmatmul.mubr.bf16.gmra.mrb[0].mxu0 %v1084
        %v1123 = vpop.f32.mrb[0].mxu0
        %v1124 = vadd.f32 0.0, %v1123
        %v1125 = vpop.f32.mrb[0].mxu0
        %v1126 = vpop.f32.mrb[0].mxu0
        %v1127 = vadd.f32 0.0, %v1126
        %v1128 = vpop.f32.mrb[0].mxu0
        %1129 = vmatprep.mubr.bf16.mxu0 0
        %1130 = vmatmul.mubr.bf16.gmra.mrb[0].mxu0 %v1087
        %v1131 = vpop.f32.mrb[0].mxu0
        %v1132 = vadd.f32 0.0, %v1131
        %v1133 = vpop.f32.mrb[0].mxu0
        %v1134 = vpop.f32.mrb[0].mxu0
        %v1135 = vadd.f32 0.0, %v1134
        %v1136 = vpop.f32.mrb[0].mxu0
        %1137 = vdwg.mxu0
        %v1138 = vadd.bf16 %v1003, %v1005
        %v1139 = vadd.bf16 %v1004, %v1006
        %v1144 = vunpack.c.l.b16 %v431
        %v1145 = vunpack.c.l.b16 %v432
        %v1146 = vunpack.c.l.b16 %v433
        %v1147 = vunpack.c.l.b16 %v434
        %v1148 = vpack.c.b16 %v1145, %v1144
        %v1149 = vpack.c.b16 %v1147, %v1146
        %v1151 = vsel %vm1017, %v1148, 0
        %v1154 = vsel %vm1017, %v1149, 0
        %1156 = vmatprep.subr.bf16.mxu0 0
        %1157 = vmatpush1.bf16.msra.mxu0 %v1138
        %1158 = vmatprep.subr.bf16.mxu0 0
        %1159 = vmatpush1.bf16.msra.mxu0 %v1139
        %1160 = vmatprep.subr.bf16.mxu0 0
        %1161 = vmatpush1.bf16.msra.mxu0 0
        %1162 = vmatprep.subr.bf16.mxu0 0
        %1163 = vmatpush1.bf16.msra.mxu0 0
        %1164 = vmatprep.subr.bf16.mxu0 0
        %1165 = vmatpush1.bf16.msra.mxu0 0
        %1166 = vmatprep.subr.bf16.mxu0 0
        %1167 = vmatpush1.bf16.msra.mxu0 0
        %1168 = vmatprep.subr.bf16.mxu0 0
        %1169 = vmatpush1.bf16.msra.mxu0 0
        %1170 = vmatprep.subr.bf16.mxu0 0
        %1171 = vmatpush1.bf16.msra.mxu0 0
        %1172 = vmatprep.subr.bf16.mxu0 0
        %1173 = vmatpush1.bf16.msra.mxu0 0
        %1174 = vmatprep.subr.bf16.mxu0 0
        %1175 = vmatpush1.bf16.msra.mxu0 0
        %1176 = vmatprep.subr.bf16.mxu0 0
        %1177 = vmatpush1.bf16.msra.mxu0 0
        %1178 = vmatprep.subr.bf16.mxu0 0
        %1179 = vmatpush1.bf16.msra.mxu0 0
        %1180 = vmatprep.subr.bf16.mxu0 0
        %1181 = vmatpush1.bf16.msra.mxu0 0
        %1182 = vmatprep.subr.bf16.mxu0 0
        %1183 = vmatpush1.bf16.msra.mxu0 0
        %1184 = vmatprep.subr.bf16.mxu0 0
        %1185 = vmatpush1.bf16.msra.mxu0 0
        %1186 = vmatprep.subr.bf16.mxu0 0
        %1187 = vmatpush1.bf16.msra.mxu0 0
        %1188 = vmatprep.mubr.bf16.mxu0 0
        %1189 = vmatmul.mubr.bf16.gmra.mrb[0].mxu0 %v1151
        %v1190 = vpop.f32.mrb[0].mxu0
        %v1191 = vadd.f32 0.0, %v1190
        %v1192 = vpop.f32.mrb[0].mxu0
        %v1193 = vpop.f32.mrb[0].mxu0
        %v1194 = vadd.f32 0.0, %v1193
        %v1195 = vpop.f32.mrb[0].mxu0
        %1196 = vmatprep.mubr.bf16.mxu0 0
        %1197 = vmatmul.mubr.bf16.gmra.mrb[0].mxu0 %v1154
        %v1198 = vpop.f32.mrb[0].mxu0
        %v1199 = vadd.f32 0.0, %v1198
        %v1200 = vpop.f32.mrb[0].mxu0
        %v1201 = vpop.f32.mrb[0].mxu0
        %v1202 = vadd.f32 0.0, %v1201
        %v1203 = vpop.f32.mrb[0].mxu0
        %1204 = vdwg.mxu0
        %v1205 = vsub.f32 %v1059, %v1124
        %v1206 = vsub.f32 %v1062, %v1127
        %v1207 = vsub.f32 %v1067, %v1132
        %v1208 = vsub.f32 %v1070, %v1135
        %v1209 = vsub.f32 %v1191, %v1059
        %v1210 = vsub.f32 %v1194, %v1062
        %v1211 = vsub.f32 %v1199, %v1067
        %v1212 = vsub.f32 %v1202, %v1070
        %v1213 = vsub.f32 %v1209, %v1124
        %v1214 = vsub.f32 %v1210, %v1127
        %v1215 = vsub.f32 %v1211, %v1132
        %v1216 = vsub.f32 %v1212, %v1135
        %v1217 = vmul.f32 %v1205, %v503
        %v1218 = vmul.f32 %v1206, %v504
        %v1219 = vmul.f32 %v1207, %v505
        %v1220 = vmul.f32 %v1208, %v506
        %v1221 = vmul.f32 %v1213, %v512
        %v1222 = vmul.f32 %v1214, %v513
        %v1223 = vmul.f32 %v1215, %v514
        %v1224 = vmul.f32 %v1216, %v515
        %v1225 = vsub.f32 %v1217, %v1221
        %v1226 = vsub.f32 %v1218, %v1222
        %v1227 = vsub.f32 %v1219, %v1223
        %v1228 = vsub.f32 %v1220, %v1224
        %v1229 = vmul.f32 %v1205, %v512
        %v1230 = vmul.f32 %v1206, %v513
        %v1231 = vmul.f32 %v1207, %v514
        %v1232 = vmul.f32 %v1208, %v515
        %v1233 = vmul.f32 %v1213, %v503
        %v1234 = vmul.f32 %v1214, %v504
        %v1235 = vmul.f32 %v1215, %v505
        %v1236 = vmul.f32 %v1216, %v506
        %v1237 = vadd.f32 %v1229, %v1233
        %v1238 = vadd.f32 %v1230, %v1234
        %v1239 = vadd.f32 %v1231, %v1235
        %v1240 = vadd.f32 %v1232, %v1236
        %v1241 = vpack.c.bf16 %v1226, %v1225
        %v1242 = vpack.c.bf16 %v1228, %v1227
        %v1243 = vpack.c.bf16 %v1238, %v1237
        %v1244 = vpack.c.bf16 %v1240, %v1239
        %v1249 = vunpack.c.l.b16 %v435
        %v1250 = vunpack.c.l.b16 %v436
        %v1251 = vunpack.c.l.b16 %v437
        %v1252 = vunpack.c.l.b16 %v438
        %v1253 = vpack.c.b16 %v1250, %v1249
        %v1254 = vpack.c.b16 %v1252, %v1251
        %v1256 = vsel %vm1017, %v1253, 0
        %v1259 = vsel %vm1017, %v1254, 0
        %1261 = vmatprep.subr.bf16.mxu0 0
        %1262 = vmatpush1.bf16.msra.mxu0 %v1241
        %1263 = vmatprep.subr.bf16.mxu0 0
        %1264 = vmatpush1.bf16.msra.mxu0 %v1242
        %1265 = vmatprep.subr.bf16.mxu0 0
        %1266 = vmatpush1.bf16.msra.mxu0 0
        %1267 = vmatprep.subr.bf16.mxu0 0
        %1268 = vmatpush1.bf16.msra.mxu0 0
        %1269 = vmatprep.subr.bf16.mxu0 0
        %1270 = vmatpush1.bf16.msra.mxu0 0
        %1271 = vmatprep.subr.bf16.mxu0 0
        %1272 = vmatpush1.bf16.msra.mxu0 0
        %1273 = vmatprep.subr.bf16.mxu0 0
        %1274 = vmatpush1.bf16.msra.mxu0 0
        %1275 = vmatprep.subr.bf16.mxu0 0
        %1276 = vmatpush1.bf16.msra.mxu0 0
        %1277 = vmatprep.subr.bf16.mxu0 0
        %1278 = vmatpush1.bf16.msra.mxu0 0
        %1279 = vmatprep.subr.bf16.mxu0 0
        %1280 = vmatpush1.bf16.msra.mxu0 0
        %1281 = vmatprep.subr.bf16.mxu0 0
        %1282 = vmatpush1.bf16.msra.mxu0 0
        %1283 = vmatprep.subr.bf16.mxu0 0
        %1284 = vmatpush1.bf16.msra.mxu0 0
        %1285 = vmatprep.subr.bf16.mxu0 0
        %1286 = vmatpush1.bf16.msra.mxu0 0
        %1287 = vmatprep.subr.bf16.mxu0 0
        %1288 = vmatpush1.bf16.msra.mxu0 0
        %1289 = vmatprep.subr.bf16.mxu0 0
        %1290 = vmatpush1.bf16.msra.mxu0 0
        %1291 = vmatprep.subr.bf16.mxu0 0
        %1292 = vmatpush1.bf16.msra.mxu0 0
        %1293 = vmatprep.mubr.bf16.mxu0 0
        %1294 = vmatmul.mubr.bf16.gmra.mrb[0].mxu0 %v1256
        %v1295 = vpop.f32.mrb[0].mxu0
        %v1296 = vadd.f32 0.0, %v1295
        %v1297 = vpop.f32.mrb[0].mxu0
        %v1298 = vpop.f32.mrb[0].mxu0
        %v1299 = vadd.f32 0.0, %v1298
        %v1300 = vpop.f32.mrb[0].mxu0
        %1301 = vmatprep.mubr.bf16.mxu0 0
        %1302 = vmatmul.mubr.bf16.gmra.mrb[0].mxu0 %v1259
        %v1303 = vpop.f32.mrb[0].mxu0
        %v1304 = vadd.f32 0.0, %v1303
        %v1305 = vpop.f32.mrb[0].mxu0
        %v1306 = vpop.f32.mrb[0].mxu0
        %v1307 = vadd.f32 0.0, %v1306
        %v1308 = vpop.f32.mrb[0].mxu0
        %1309 = vdwg.mxu0
        %v1314 = vunpack.c.l.b16 %v440
        %v1315 = vunpack.c.l.b16 %v441
        %v1316 = vunpack.c.l.b16 %v442
        %v1317 = vunpack.c.l.b16 %v443
        %v1318 = vpack.c.b16 %v1315, %v1314
        %v1319 = vpack.c.b16 %v1317, %v1316
        %v1321 = vsel %vm1017, %v1318, 0
        %v1324 = vsel %vm1017, %v1319, 0
        %1326 = vmatprep.subr.bf16.mxu0 0
        %1327 = vmatpush1.bf16.msra.mxu0 %v1243
        %1328 = vmatprep.subr.bf16.mxu0 0
        %1329 = vmatpush1.bf16.msra.mxu0 %v1244
        %1330 = vmatprep.subr.bf16.mxu0 0
        %1331 = vmatpush1.bf16.msra.mxu0 0
        %1332 = vmatprep.subr.bf16.mxu0 0
        %1333 = vmatpush1.bf16.msra.mxu0 0
        %1334 = vmatprep.subr.bf16.mxu0 0
        %1335 = vmatpush1.bf16.msra.mxu0 0
        %1336 = vmatprep.subr.bf16.mxu0 0
        %1337 = vmatpush1.bf16.msra.mxu0 0
        %1338 = vmatprep.subr.bf16.mxu0 0
        %1339 = vmatpush1.bf16.msra.mxu0 0
        %1340 = vmatprep.subr.bf16.mxu0 0
        %1341 = vmatpush1.bf16.msra.mxu0 0
        %1342 = vmatprep.subr.bf16.mxu0 0
        %1343 = vmatpush1.bf16.msra.mxu0 0
        %1344 = vmatprep.subr.bf16.mxu0 0
        %1345 = vmatpush1.bf16.msra.mxu0 0
        %1346 = vmatprep.subr.bf16.mxu0 0
        %1347 = vmatpush1.bf16.msra.mxu0 0
        %1348 = vmatprep.subr.bf16.mxu0 0
        %1349 = vmatpush1.bf16.msra.mxu0 0
        %1350 = vmatprep.subr.bf16.mxu0 0
        %1351 = vmatpush1.bf16.msra.mxu0 0
        %1352 = vmatprep.subr.bf16.mxu0 0
        %1353 = vmatpush1.bf16.msra.mxu0 0
        %1354 = vmatprep.subr.bf16.mxu0 0
        %1355 = vmatpush1.bf16.msra.mxu0 0
        %1356 = vmatprep.subr.bf16.mxu0 0
        %1357 = vmatpush1.bf16.msra.mxu0 0
        %1358 = vmatprep.mubr.bf16.mxu0 0
        %1359 = vmatmul.mubr.bf16.gmra.mrb[0].mxu0 %v1321
        %v1360 = vpop.f32.mrb[0].mxu0
        %v1361 = vadd.f32 0.0, %v1360
        %v1362 = vpop.f32.mrb[0].mxu0
        %v1363 = vpop.f32.mrb[0].mxu0
        %v1364 = vadd.f32 0.0, %v1363
        %v1365 = vpop.f32.mrb[0].mxu0
        %1366 = vmatprep.mubr.bf16.mxu0 0
        %1367 = vmatmul.mubr.bf16.gmra.mrb[0].mxu0 %v1324
        %v1368 = vpop.f32.mrb[0].mxu0
        %v1369 = vadd.f32 0.0, %v1368
        %v1370 = vpop.f32.mrb[0].mxu0
        %v1371 = vpop.f32.mrb[0].mxu0
        %v1372 = vadd.f32 0.0, %v1371
        %v1373 = vpop.f32.mrb[0].mxu0
        %1374 = vdwg.mxu0
        %v1375 = vadd.bf16 %v1241, %v1243
        %v1376 = vadd.bf16 %v1242, %v1244
        %v1381 = vunpack.c.l.b16 %v445
        %v1382 = vunpack.c.l.b16 %v446
        %v1383 = vunpack.c.l.b16 %v447
        %v1384 = vunpack.c.l.b16 %v448
        %v1385 = vpack.c.b16 %v1382, %v1381
        %v1386 = vpack.c.b16 %v1384, %v1383
        %v1388 = vsel %vm1017, %v1385, 0
        %v1391 = vsel %vm1017, %v1386, 0
        %1393 = vmatprep.subr.bf16.mxu0 0
        %1394 = vmatpush1.bf16.msra.mxu0 %v1375
        %1395 = vmatprep.subr.bf16.mxu0 0
        %1396 = vmatpush1.bf16.msra.mxu0 %v1376
        %1397 = vmatprep.subr.bf16.mxu0 0
        %1398 = vmatpush1.bf16.msra.mxu0 0
        %1399 = vmatprep.subr.bf16.mxu0 0
        %1400 = vmatpush1.bf16.msra.mxu0 0
        %1401 = vmatprep.subr.bf16.mxu0 0
        %1402 = vmatpush1.bf16.msra.mxu0 0
        %1403 = vmatprep.subr.bf16.mxu0 0
        %1404 = vmatpush1.bf16.msra.mxu0 0
        %1405 = vmatprep.subr.bf16.mxu0 0
        %1406 = vmatpush1.bf16.msra.mxu0 0
        %1407 = vmatprep.subr.bf16.mxu0 0
        %1408 = vmatpush1.bf16.msra.mxu0 0
        %1409 = vmatprep.subr.bf16.mxu0 0
        %1410 = vmatpush1.bf16.msra.mxu0 0
        %1411 = vmatprep.subr.bf16.mxu0 0
        %1412 = vmatpush1.bf16.msra.mxu0 0
        %1413 = vmatprep.subr.bf16.mxu0 0
        %1414 = vmatpush1.bf16.msra.mxu0 0
        %1415 = vmatprep.subr.bf16.mxu0 0
        %1416 = vmatpush1.bf16.msra.mxu0 0
        %1417 = vmatprep.subr.bf16.mxu0 0
        %1418 = vmatpush1.bf16.msra.mxu0 0
        %1419 = vmatprep.subr.bf16.mxu0 0
        %1420 = vmatpush1.bf16.msra.mxu0 0
        %1421 = vmatprep.subr.bf16.mxu0 0
        %1422 = vmatpush1.bf16.msra.mxu0 0
        %1423 = vmatprep.subr.bf16.mxu0 0
        %1424 = vmatpush1.bf16.msra.mxu0 0
        %1425 = vmatprep.mubr.bf16.mxu0 0
        %1426 = vmatmul.mubr.bf16.gmra.mrb[0].mxu0 %v1388
        %v1427 = vpop.f32.mrb[0].mxu0
        %v1428 = vadd.f32 0.0, %v1427
        %v1429 = vpop.f32.mrb[0].mxu0
        %v1430 = vpop.f32.mrb[0].mxu0
        %v1431 = vadd.f32 0.0, %v1430
        %v1432 = vpop.f32.mrb[0].mxu0
        %1433 = vmatprep.mubr.bf16.mxu0 0
        %1434 = vmatmul.mubr.bf16.gmra.mrb[0].mxu0 %v1391
        %v1435 = vpop.f32.mrb[0].mxu0
        %v1436 = vadd.f32 0.0, %v1435
        %v1437 = vpop.f32.mrb[0].mxu0
        %v1438 = vpop.f32.mrb[0].mxu0
        %v1439 = vadd.f32 0.0, %v1438
        %v1440 = vpop.f32.mrb[0].mxu0
        %1441 = vdwg.mxu0
        %v1442 = vsub.f32 %v1296, %v1361
        %v1443 = vsub.f32 %v1299, %v1364
        %v1444 = vsub.f32 %v1304, %v1369
        %v1445 = vsub.f32 %v1307, %v1372
        %v1446 = vsub.f32 %v1428, %v1296
        %v1447 = vsub.f32 %v1431, %v1299
        %v1448 = vsub.f32 %v1436, %v1304
        %v1449 = vsub.f32 %v1439, %v1307
        %v1450 = vsub.f32 %v1446, %v1361
        %v1451 = vsub.f32 %v1447, %v1364
        %v1452 = vsub.f32 %v1448, %v1369
        %v1453 = vsub.f32 %v1449, %v1372
        %1454 = vst [vmem:[%s367] sm:$0xff] %v1442
        %1455 = vst [vmem:[%s367 + $0x8] sm:$0xff] %v1443
        %1456 = vst [vmem:[%s367 + $0x10] sm:$0xff] %v1444
        %1457 = vst [vmem:[%s367 + $0x18] sm:$0xff] %v1445
        %1458 = vst [vmem:[%s998] sm:$0xff] %v1450
        %1459 = vst [vmem:[%s998 + $0x8] sm:$0xff] %v1451
        %1460 = vst [vmem:[%s998 + $0x10] sm:$0xff] %v1452
        %1461 = vst [vmem:[%s998 + $0x18] sm:$0xff] %v1453
        %s1462 = scalar_lea.vmem %s367, 32 [#allocation13]
        %v1463 = vld [vmem:[%s1462] sm:$0xff]
        %v1464 = vld [vmem:[%s1462 + $0x8] sm:$0xff]
        %v1465 = vld [vmem:[%s1462 + $0x10] sm:$0xff]
        %v1466 = vld [vmem:[%s1462 + $0x18] sm:$0xff]
        %s1467 = sadd.s32 32, 64
        %s1468 = scalar_lea.vmem %s367, %s1467 [#allocation13]
        %v1469 = vld [vmem:[%s1468] sm:$0xff]
        %v1470 = vld [vmem:[%s1468 + $0x8] sm:$0xff]
        %v1471 = vld [vmem:[%s1468 + $0x10] sm:$0xff]
        %v1472 = vld [vmem:[%s1468 + $0x18] sm:$0xff]
        %v1473 = vpack.c.bf16 %v1464, %v1463
        %v1474 = vpack.c.bf16 %v1466, %v1465
        %v1475 = vpack.c.bf16 %v1470, %v1469
        %v1476 = vpack.c.bf16 %v1472, %v1471
        %1477 = vmatprep.subr.bf16.mxu0 0
        %1478 = vmatpush1.bf16.msra.mxu0 %v1473
        %1479 = vmatprep.subr.bf16.mxu0 0
        %1480 = vmatpush1.bf16.msra.mxu0 %v1474
        %1481 = vmatprep.subr.bf16.mxu0 0
        %1482 = vmatpush1.bf16.msra.mxu0 0
        %1483 = vmatprep.subr.bf16.mxu0 0
        %1484 = vmatpush1.bf16.msra.mxu0 0
        %1485 = vmatprep.subr.bf16.mxu0 0
        %1486 = vmatpush1.bf16.msra.mxu0 0
        %1487 = vmatprep.subr.bf16.mxu0 0
        %1488 = vmatpush1.bf16.msra.mxu0 0
        %1489 = vmatprep.subr.bf16.mxu0 0
        %1490 = vmatpush1.bf16.msra.mxu0 0
        %1491 = vmatprep.subr.bf16.mxu0 0
        %1492 = vmatpush1.bf16.msra.mxu0 0
        %1493 = vmatprep.subr.bf16.mxu0 0
        %1494 = vmatpush1.bf16.msra.mxu0 0
        %1495 = vmatprep.subr.bf16.mxu0 0
        %1496 = vmatpush1.bf16.msra.mxu0 0
        %1497 = vmatprep.subr.bf16.mxu0 0
        %1498 = vmatpush1.bf16.msra.mxu0 0
        %1499 = vmatprep.subr.bf16.mxu0 0
        %1500 = vmatpush1.bf16.msra.mxu0 0
        %1501 = vmatprep.subr.bf16.mxu0 0
        %1502 = vmatpush1.bf16.msra.mxu0 0
        %1503 = vmatprep.subr.bf16.mxu0 0
        %1504 = vmatpush1.bf16.msra.mxu0 0
        %1505 = vmatprep.subr.bf16.mxu0 0
        %1506 = vmatpush1.bf16.msra.mxu0 0
        %1507 = vmatprep.subr.bf16.mxu0 0
        %1508 = vmatpush1.bf16.msra.mxu0 0
        %1509 = vmatprep.mubr.bf16.mxu0 0
        %1510 = vmatmul.mubr.bf16.gmra.mrb[0].mxu0 %v1019
        %v1511 = vpop.f32.mrb[0].mxu0
        %v1512 = vadd.f32 0.0, %v1511
        %v1513 = vpop.f32.mrb[0].mxu0
        %v1514 = vpop.f32.mrb[0].mxu0
        %v1515 = vadd.f32 0.0, %v1514
        %v1516 = vpop.f32.mrb[0].mxu0
        %1517 = vmatprep.mubr.bf16.mxu0 0
        %1518 = vmatmul.mubr.bf16.gmra.mrb[0].mxu0 %v1022
        %v1519 = vpop.f32.mrb[0].mxu0
        %v1520 = vadd.f32 0.0, %v1519
        %v1521 = vpop.f32.mrb[0].mxu0
        %v1522 = vpop.f32.mrb[0].mxu0
        %v1523 = vadd.f32 0.0, %v1522
        %v1524 = vpop.f32.mrb[0].mxu0
        %1525 = vdwg.mxu0
        %1526 = vmatprep.subr.bf16.mxu0 0
        %1527 = vmatpush1.bf16.msra.mxu0 %v1475
        %1528 = vmatprep.subr.bf16.mxu0 0
        %1529 = vmatpush1.bf16.msra.mxu0 %v1476
        %1530 = vmatprep.subr.bf16.mxu0 0
        %1531 = vmatpush1.bf16.msra.mxu0 0
        %1532 = vmatprep.subr.bf16.mxu0 0
        %1533 = vmatpush1.bf16.msra.mxu0 0
        %1534 = vmatprep.subr.bf16.mxu0 0
        %1535 = vmatpush1.bf16.msra.mxu0 0
        %1536 = vmatprep.subr.bf16.mxu0 0
        %1537 = vmatpush1.bf16.msra.mxu0 0
        %1538 = vmatprep.subr.bf16.mxu0 0
        %1539 = vmatpush1.bf16.msra.mxu0 0
        %1540 = vmatprep.subr.bf16.mxu0 0
        %1541 = vmatpush1.bf16.msra.mxu0 0
        %1542 = vmatprep.subr.bf16.mxu0 0
        %1543 = vmatpush1.bf16.msra.mxu0 0
        %1544 = vmatprep.subr.bf16.mxu0 0
        %1545 = vmatpush1.bf16.msra.mxu0 0
        %1546 = vmatprep.subr.bf16.mxu0 0
        %1547 = vmatpush1.bf16.msra.mxu0 0
        %1548 = vmatprep.subr.bf16.mxu0 0
        %1549 = vmatpush1.bf16.msra.mxu0 0
        %1550 = vmatprep.subr.bf16.mxu0 0
        %1551 = vmatpush1.bf16.msra.mxu0 0
        %1552 = vmatprep.subr.bf16.mxu0 0
        %1553 = vmatpush1.bf16.msra.mxu0 0
        %1554 = vmatprep.subr.bf16.mxu0 0
        %1555 = vmatpush1.bf16.msra.mxu0 0
        %1556 = vmatprep.subr.bf16.mxu0 0
        %1557 = vmatpush1.bf16.msra.mxu0 0
        %1558 = vmatprep.mubr.bf16.mxu0 0
        %1559 = vmatmul.mubr.bf16.gmra.mrb[0].mxu0 %v1084
        %v1560 = vpop.f32.mrb[0].mxu0
        %v1561 = vadd.f32 0.0, %v1560
        %v1562 = vpop.f32.mrb[0].mxu0
        %v1563 = vpop.f32.mrb[0].mxu0
        %v1564 = vadd.f32 0.0, %v1563
        %v1565 = vpop.f32.mrb[0].mxu0
        %1566 = vmatprep.mubr.bf16.mxu0 0
        %1567 = vmatmul.mubr.bf16.gmra.mrb[0].mxu0 %v1087
        %v1568 = vpop.f32.mrb[0].mxu0
        %v1569 = vadd.f32 0.0, %v1568
        %v1570 = vpop.f32.mrb[0].mxu0
        %v1571 = vpop.f32.mrb[0].mxu0
        %v1572 = vadd.f32 0.0, %v1571
        %v1573 = vpop.f32.mrb[0].mxu0
        %1574 = vdwg.mxu0
        %v1575 = vadd.bf16 %v1473, %v1475
        %v1576 = vadd.bf16 %v1474, %v1476
        %1577 = vmatprep.subr.bf16.mxu0 0
        %1578 = vmatpush1.bf16.msra.mxu0 %v1575
        %1579 = vmatprep.subr.bf16.mxu0 0
        %1580 = vmatpush1.bf16.msra.mxu0 %v1576
        %1581 = vmatprep.subr.bf16.mxu0 0
        %1582 = vmatpush1.bf16.msra.mxu0 0
        %1583 = vmatprep.subr.bf16.mxu0 0
        %1584 = vmatpush1.bf16.msra.mxu0 0
        %1585 = vmatprep.subr.bf16.mxu0 0
        %1586 = vmatpush1.bf16.msra.mxu0 0
        %1587 = vmatprep.subr.bf16.mxu0 0
        %1588 = vmatpush1.bf16.msra.mxu0 0
        %1589 = vmatprep.subr.bf16.mxu0 0
        %1590 = vmatpush1.bf16.msra.mxu0 0
        %1591 = vmatprep.subr.bf16.mxu0 0
        %1592 = vmatpush1.bf16.msra.mxu0 0
        %1593 = vmatprep.subr.bf16.mxu0 0
        %1594 = vmatpush1.bf16.msra.mxu0 0
        %1595 = vmatprep.subr.bf16.mxu0 0
        %1596 = vmatpush1.bf16.msra.mxu0 0
        %1597 = vmatprep.subr.bf16.mxu0 0
        %1598 = vmatpush1.bf16.msra.mxu0 0
        %1599 = vmatprep.subr.bf16.mxu0 0
        %1600 = vmatpush1.bf16.msra.mxu0 0
        %1601 = vmatprep.subr.bf16.mxu0 0
        %1602 = vmatpush1.bf16.msra.mxu0 0
        %1603 = vmatprep.subr.bf16.mxu0 0
        %1604 = vmatpush1.bf16.msra.mxu0 0
        %1605 = vmatprep.subr.bf16.mxu0 0
        %1606 = vmatpush1.bf16.msra.mxu0 0
        %1607 = vmatprep.subr.bf16.mxu0 0
        %1608 = vmatpush1.bf16.msra.mxu0 0
        %1609 = vmatprep.mubr.bf16.mxu0 0
        %1610 = vmatmul.mubr.bf16.gmra.mrb[0].mxu0 %v1151
        %v1611 = vpop.f32.mrb[0].mxu0
        %v1612 = vadd.f32 0.0, %v1611
        %v1613 = vpop.f32.mrb[0].mxu0
        %v1614 = vpop.f32.mrb[0].mxu0
        %v1615 = vadd.f32 0.0, %v1614
        %v1616 = vpop.f32.mrb[0].mxu0
        %1617 = vmatprep.mubr.bf16.mxu0 0
        %1618 = vmatmul.mubr.bf16.gmra.mrb[0].mxu0 %v1154
        %v1619 = vpop.f32.mrb[0].mxu0
        %v1620 = vadd.f32 0.0, %v1619
        %v1621 = vpop.f32.mrb[0].mxu0
        %v1622 = vpop.f32.mrb[0].mxu0
        %v1623 = vadd.f32 0.0, %v1622
        %v1624 = vpop.f32.mrb[0].mxu0
        %1625 = vdwg.mxu0
        %v1626 = vsub.f32 %v1512, %v1561
        %v1627 = vsub.f32 %v1515, %v1564
        %v1628 = vsub.f32 %v1520, %v1569
        %v1629 = vsub.f32 %v1523, %v1572
        %v1630 = vsub.f32 %v1612, %v1512
        %v1631 = vsub.f32 %v1615, %v1515
        %v1632 = vsub.f32 %v1620, %v1520
        %v1633 = vsub.f32 %v1623, %v1523
        %v1634 = vsub.f32 %v1630, %v1561
        %v1635 = vsub.f32 %v1631, %v1564
        %v1636 = vsub.f32 %v1632, %v1569
        %v1637 = vsub.f32 %v1633, %v1572
        %v1638 = vmul.f32 %v1626, %v503
        %v1639 = vmul.f32 %v1627, %v504
        %v1640 = vmul.f32 %v1628, %v505
        %v1641 = vmul.f32 %v1629, %v506
        %v1642 = vmul.f32 %v1634, %v512
        %v1643 = vmul.f32 %v1635, %v513
        %v1644 = vmul.f32 %v1636, %v514
        %v1645 = vmul.f32 %v1637, %v515
        %v1646 = vsub.f32 %v1638, %v1642
        %v1647 = vsub.f32 %v1639, %v1643
        %v1648 = vsub.f32 %v1640, %v1644
        %v1649 = vsub.f32 %v1641, %v1645
        %v1650 = vmul.f32 %v1626, %v512
        %v1651 = vmul.f32 %v1627, %v513
        %v1652 = vmul.f32 %v1628, %v514
        %v1653 = vmul.f32 %v1629, %v515
        %v1654 = vmul.f32 %v1634, %v503
        %v1655 = vmul.f32 %v1635, %v504
        %v1656 = vmul.f32 %v1636, %v505
        %v1657 = vmul.f32 %v1637, %v506
        %v1658 = vadd.f32 %v1650, %v1654
        %v1659 = vadd.f32 %v1651, %v1655
        %v1660 = vadd.f32 %v1652, %v1656
        %v1661 = vadd.f32 %v1653, %v1657
        %v1662 = vpack.c.bf16 %v1647, %v1646
        %v1663 = vpack.c.bf16 %v1649, %v1648
        %v1664 = vpack.c.bf16 %v1659, %v1658
        %v1665 = vpack.c.bf16 %v1661, %v1660
        %1666 = vmatprep.subr.bf16.mxu0 0
        %1667 = vmatpush1.bf16.msra.mxu0 %v1662
        %1668 = vmatprep.subr.bf16.mxu0 0
        %1669 = vmatpush1.bf16.msra.mxu0 %v1663
        %1670 = vmatprep.subr.bf16.mxu0 0
        %1671 = vmatpush1.bf16.msra.mxu0 0
        %1672 = vmatprep.subr.bf16.mxu0 0
        %1673 = vmatpush1.bf16.msra.mxu0 0
        %1674 = vmatprep.subr.bf16.mxu0 0
        %1675 = vmatpush1.bf16.msra.mxu0 0
        %1676 = vmatprep.subr.bf16.mxu0 0
        %1677 = vmatpush1.bf16.msra.mxu0 0
        %1678 = vmatprep.subr.bf16.mxu0 0
        %1679 = vmatpush1.bf16.msra.mxu0 0
        %1680 = vmatprep.subr.bf16.mxu0 0
        %1681 = vmatpush1.bf16.msra.mxu0 0
        %1682 = vmatprep.subr.bf16.mxu0 0
        %1683 = vmatpush1.bf16.msra.mxu0 0
        %1684 = vmatprep.subr.bf16.mxu0 0
        %1685 = vmatpush1.bf16.msra.mxu0 0
        %1686 = vmatprep.subr.bf16.mxu0 0
        %1687 = vmatpush1.bf16.msra.mxu0 0
        %1688 = vmatprep.subr.bf16.mxu0 0
        %1689 = vmatpush1.bf16.msra.mxu0 0
        %1690 = vmatprep.subr.bf16.mxu0 0
        %1691 = vmatpush1.bf16.msra.mxu0 0
        %1692 = vmatprep.subr.bf16.mxu0 0
        %1693 = vmatpush1.bf16.msra.mxu0 0
        %1694 = vmatprep.subr.bf16.mxu0 0
        %1695 = vmatpush1.bf16.msra.mxu0 0
        %1696 = vmatprep.subr.bf16.mxu0 0
        %1697 = vmatpush1.bf16.msra.mxu0 0
        %1698 = vmatprep.mubr.bf16.mxu0 0
        %1699 = vmatmul.mubr.bf16.gmra.mrb[0].mxu0 %v1256
        %v1700 = vpop.f32.mrb[0].mxu0
        %v1701 = vadd.f32 0.0, %v1700
        %v1702 = vpop.f32.mrb[0].mxu0
        %v1703 = vpop.f32.mrb[0].mxu0
        %v1704 = vadd.f32 0.0, %v1703
        %v1705 = vpop.f32.mrb[0].mxu0
        %1706 = vmatprep.mubr.bf16.mxu0 0
        %1707 = vmatmul.mubr.bf16.gmra.mrb[0].mxu0 %v1259
        %v1708 = vpop.f32.mrb[0].mxu0
        %v1709 = vadd.f32 0.0, %v1708
        %v1710 = vpop.f32.mrb[0].mxu0
        %v1711 = vpop.f32.mrb[0].mxu0
        %v1712 = vadd.f32 0.0, %v1711
        %v1713 = vpop.f32.mrb[0].mxu0
        %1714 = vdwg.mxu0
        %1715 = vmatprep.subr.bf16.mxu0 0
        %1716 = vmatpush1.bf16.msra.mxu0 %v1664
        %1717 = vmatprep.subr.bf16.mxu0 0
        %1718 = vmatpush1.bf16.msra.mxu0 %v1665
        %1719 = vmatprep.subr.bf16.mxu0 0
        %1720 = vmatpush1.bf16.msra.mxu0 0
        %1721 = vmatprep.subr.bf16.mxu0 0
        %1722 = vmatpush1.bf16.msra.mxu0 0
        %1723 = vmatprep.subr.bf16.mxu0 0
        %1724 = vmatpush1.bf16.msra.mxu0 0
        %1725 = vmatprep.subr.bf16.mxu0 0
        %1726 = vmatpush1.bf16.msra.mxu0 0
        %1727 = vmatprep.subr.bf16.mxu0 0
        %1728 = vmatpush1.bf16.msra.mxu0 0
        %1729 = vmatprep.subr.bf16.mxu0 0
        %1730 = vmatpush1.bf16.msra.mxu0 0
        %1731 = vmatprep.subr.bf16.mxu0 0
        %1732 = vmatpush1.bf16.msra.mxu0 0
        %1733 = vmatprep.subr.bf16.mxu0 0
        %1734 = vmatpush1.bf16.msra.mxu0 0
        %1735 = vmatprep.subr.bf16.mxu0 0
        %1736 = vmatpush1.bf16.msra.mxu0 0
        %1737 = vmatprep.subr.bf16.mxu0 0
        %1738 = vmatpush1.bf16.msra.mxu0 0
        %1739 = vmatprep.subr.bf16.mxu0 0
        %1740 = vmatpush1.bf16.msra.mxu0 0
        %1741 = vmatprep.subr.bf16.mxu0 0
        %1742 = vmatpush1.bf16.msra.mxu0 0
        %1743 = vmatprep.subr.bf16.mxu0 0
        %1744 = vmatpush1.bf16.msra.mxu0 0
        %1745 = vmatprep.subr.bf16.mxu0 0
        %1746 = vmatpush1.bf16.msra.mxu0 0
        %1747 = vmatprep.mubr.bf16.mxu0 0
        %1748 = vmatmul.mubr.bf16.gmra.mrb[0].mxu0 %v1321
        %v1749 = vpop.f32.mrb[0].mxu0
        %v1750 = vadd.f32 0.0, %v1749
        %v1751 = vpop.f32.mrb[0].mxu0
        %v1752 = vpop.f32.mrb[0].mxu0
        %v1753 = vadd.f32 0.0, %v1752
        %v1754 = vpop.f32.mrb[0].mxu0
        %1755 = vmatprep.mubr.bf16.mxu0 0
        %1756 = vmatmul.mubr.bf16.gmra.mrb[0].mxu0 %v1324
        %v1757 = vpop.f32.mrb[0].mxu0
        %v1758 = vadd.f32 0.0, %v1757
        %v1759 = vpop.f32.mrb[0].mxu0
        %v1760 = vpop.f32.mrb[0].mxu0
        %v1761 = vadd.f32 0.0, %v1760
        %v1762 = vpop.f32.mrb[0].mxu0
        %1763 = vdwg.mxu0
        %v1764 = vadd.bf16 %v1662, %v1664
        %v1765 = vadd.bf16 %v1663, %v1665
        %1766 = vmatprep.subr.bf16.mxu0 0
        %1767 = vmatpush1.bf16.msra.mxu0 %v1764
        %1768 = vmatprep.subr.bf16.mxu0 0
        %1769 = vmatpush1.bf16.msra.mxu0 %v1765
        %1770 = vmatprep.subr.bf16.mxu0 0
        %1771 = vmatpush1.bf16.msra.mxu0 0
        %1772 = vmatprep.subr.bf16.mxu0 0
        %1773 = vmatpush1.bf16.msra.mxu0 0
        %1774 = vmatprep.subr.bf16.mxu0 0
        %1775 = vmatpush1.bf16.msra.mxu0 0
        %1776 = vmatprep.subr.bf16.mxu0 0
        %1777 = vmatpush1.bf16.msra.mxu0 0
        %1778 = vmatprep.subr.bf16.mxu0 0
        %1779 = vmatpush1.bf16.msra.mxu0 0
        %1780 = vmatprep.subr.bf16.mxu0 0
        %1781 = vmatpush1.bf16.msra.mxu0 0
        %1782 = vmatprep.subr.bf16.mxu0 0
        %1783 = vmatpush1.bf16.msra.mxu0 0
        %1784 = vmatprep.subr.bf16.mxu0 0
        %1785 = vmatpush1.bf16.msra.mxu0 0
        %1786 = vmatprep.subr.bf16.mxu0 0
        %1787 = vmatpush1.bf16.msra.mxu0 0
        %1788 = vmatprep.subr.bf16.mxu0 0
        %1789 = vmatpush1.bf16.msra.mxu0 0
        %1790 = vmatprep.subr.bf16.mxu0 0
        %1791 = vmatpush1.bf16.msra.mxu0 0
        %1792 = vmatprep.subr.bf16.mxu0 0
        %1793 = vmatpush1.bf16.msra.mxu0 0
        %1794 = vmatprep.subr.bf16.mxu0 0
        %1795 = vmatpush1.bf16.msra.mxu0 0
        %1796 = vmatprep.subr.bf16.mxu0 0
        %1797 = vmatpush1.bf16.msra.mxu0 0
        %1798 = vmatprep.mubr.bf16.mxu0 0
        %1799 = vmatmul.mubr.bf16.gmra.mrb[0].mxu0 %v1388
        %v1800 = vpop.f32.mrb[0].mxu0
        %v1801 = vadd.f32 0.0, %v1800
        %v1802 = vpop.f32.mrb[0].mxu0
        %v1803 = vpop.f32.mrb[0].mxu0
        %v1804 = vadd.f32 0.0, %v1803
        %v1805 = vpop.f32.mrb[0].mxu0
        %1806 = vmatprep.mubr.bf16.mxu0 0
        %1807 = vmatmul.mubr.bf16.gmra.mrb[0].mxu0 %v1391
        %v1808 = vpop.f32.mrb[0].mxu0
        %v1809 = vadd.f32 0.0, %v1808
        %v1810 = vpop.f32.mrb[0].mxu0
        %v1811 = vpop.f32.mrb[0].mxu0
        %v1812 = vadd.f32 0.0, %v1811
        %v1813 = vpop.f32.mrb[0].mxu0
        %1814 = vdwg.mxu0
        %v1815 = vsub.f32 %v1701, %v1750
        %v1816 = vsub.f32 %v1704, %v1753
        %v1817 = vsub.f32 %v1709, %v1758
        %v1818 = vsub.f32 %v1712, %v1761
        %v1819 = vsub.f32 %v1801, %v1701
        %v1820 = vsub.f32 %v1804, %v1704
        %v1821 = vsub.f32 %v1809, %v1709
        %v1822 = vsub.f32 %v1812, %v1712
        %v1823 = vsub.f32 %v1819, %v1750
        %v1824 = vsub.f32 %v1820, %v1753
        %v1825 = vsub.f32 %v1821, %v1758
        %v1826 = vsub.f32 %v1822, %v1761
        %1827 = vst [vmem:[%s1462] sm:$0xff] %v1815
        %1828 = vst [vmem:[%s1462 + $0x8] sm:$0xff] %v1816
        %1829 = vst [vmem:[%s1462 + $0x10] sm:$0xff] %v1817
        %1830 = vst [vmem:[%s1462 + $0x18] sm:$0xff] %v1818
        %1831 = vst [vmem:[%s1468] sm:$0xff] %v1823
        %1832 = vst [vmem:[%s1468 + $0x8] sm:$0xff] %v1824
        %1833 = vst [vmem:[%s1468 + $0x10] sm:$0xff] %v1825
        %1834 = vst [vmem:[%s1468 + $0x18] sm:$0xff] %v1826
        %v1835 = vld [vmem:[%s367] sm:$0xff]
        %v1836 = vld [vmem:[%s367 + $0x8] sm:$0xff]
        %v1837 = vld [vmem:[%s367 + $0x10] sm:$0xff]
        %v1838 = vld [vmem:[%s367 + $0x18] sm:$0xff]
        %v1839 = vld [vmem:[%s367 + $0x20] sm:$0xff]
        %v1840 = vld [vmem:[%s367 + $0x28] sm:$0xff]
        %v1841 = vld [vmem:[%s367 + $0x30] sm:$0xff]
        %v1842 = vld [vmem:[%s367 + $0x38] sm:$0xff]
        %v1843 = vld [vmem:[%s984] sm:$0xff]
        %v1844 = vld [vmem:[%s984 + $0x8] sm:$0xff]
        %v1845 = vld [vmem:[%s984 + $0x10] sm:$0xff]
        %v1846 = vld [vmem:[%s984 + $0x18] sm:$0xff]
        %v1847 = vld [vmem:[%s984 + $0x20] sm:$0xff]
        %v1848 = vld [vmem:[%s984 + $0x28] sm:$0xff]
        %v1849 = vld [vmem:[%s984 + $0x30] sm:$0xff]
        %v1850 = vld [vmem:[%s984 + $0x38] sm:$0xff]
        %v1851 = vpack.c.bf16 %v1836, %v1835
        %v1852 = vpack.c.bf16 %v1838, %v1837
        %v1853 = vpack.c.bf16 %v1840, %v1839
        %v1854 = vpack.c.bf16 %v1842, %v1841
        %v1855 = vpack.c.bf16 %v1844, %v1843
        %v1856 = vpack.c.bf16 %v1846, %v1845
        %v1857 = vpack.c.bf16 %v1848, %v1847
        %v1858 = vpack.c.bf16 %v1850, %v1849
        %v1875 = vunpack.c.l.b16 %v449
        %v1876 = vunpack.c.l.b16 %v450
        %v1877 = vunpack.c.l.b16 %v451
        %v1878 = vunpack.c.l.b16 %v452
        %v1879 = vunpack.c.l.b16 %v453
        %v1880 = vunpack.c.l.b16 %v454
        %v1881 = vunpack.c.l.b16 %v455
        %v1882 = vunpack.c.l.b16 %v456
        %v1883 = vunpack.c.l.b16 %v457
        %v1884 = vunpack.c.l.b16 %v458
        %v1885 = vunpack.c.l.b16 %v459
        %v1886 = vunpack.c.l.b16 %v460
        %v1887 = vunpack.c.l.b16 %v461
        %v1888 = vunpack.c.l.b16 %v462
        %v1889 = vunpack.c.l.b16 %v463
        %v1890 = vunpack.c.l.b16 %v464
        %v1891 = vpack.c.b16 %v1876, %v1875
        %v1892 = vpack.c.b16 %v1878, %v1877
        %v1893 = vpack.c.b16 %v1880, %v1879
        %v1894 = vpack.c.b16 %v1882, %v1881
        %v1895 = vpack.c.b16 %v1884, %v1883
        %v1896 = vpack.c.b16 %v1886, %v1885
        %v1897 = vpack.c.b16 %v1888, %v1887
        %v1898 = vpack.c.b16 %v1890, %v1889
        %1907 = vmatprep.subr.bf16.mxu0 0
        %1908 = vmatpush1.bf16.msra.mxu0 %v1891
        %1909 = vmatprep.subr.bf16.mxu0 0
        %1910 = vmatpush1.bf16.msra.mxu0 %v1892
        %1911 = vmatprep.subr.bf16.mxu0 0
        %1912 = vmatpush1.bf16.msra.mxu0 %v1893
        %1913 = vmatprep.subr.bf16.mxu0 0
        %1914 = vmatpush1.bf16.msra.mxu0 %v1894
        %1915 = vmatprep.subr.bf16.mxu0 0
        %1916 = vmatpush1.bf16.msra.mxu0 %v1895
        %1917 = vmatprep.subr.bf16.mxu0 0
        %1918 = vmatpush1.bf16.msra.mxu0 %v1896
        %1919 = vmatprep.subr.bf16.mxu0 0
        %1920 = vmatpush1.bf16.msra.mxu0 %v1897
        %1921 = vmatprep.subr.bf16.mxu0 0
        %1922 = vmatpush1.bf16.msra.mxu0 %v1898
        %1923 = vmatprep.subr.bf16.mxu0 0
        %1924 = vmatpush1.bf16.msra.mxu0 0
        %1925 = vmatprep.subr.bf16.mxu0 0
        %1926 = vmatpush1.bf16.msra.mxu0 0
        %1927 = vmatprep.subr.bf16.mxu0 0
        %1928 = vmatpush1.bf16.msra.mxu0 0
        %1929 = vmatprep.subr.bf16.mxu0 0
        %1930 = vmatpush1.bf16.msra.mxu0 0
        %1931 = vmatprep.subr.bf16.mxu0 0
        %1932 = vmatpush1.bf16.msra.mxu0 0
        %1933 = vmatprep.subr.bf16.mxu0 0
        %1934 = vmatpush1.bf16.msra.mxu0 0
        %1935 = vmatprep.subr.bf16.mxu0 0
        %1936 = vmatpush1.bf16.msra.mxu0 0
        %1937 = vmatprep.subr.bf16.mxu0 0
        %1938 = vmatpush1.bf16.msra.mxu0 0
        %1939 = vmatprep.mubr.bf16.mxu0 0
        %1940 = vmatmul.mubr.bf16.gmra.mrb[0].mxu0 %v1851
        %v1941 = vpop.f32.mrb[0].mxu0
        %v1942 = vadd.f32 0.0, %v1941
        %v1943 = vpop.f32.mrb[0].mxu0
        %v1944 = vpop.f32.mrb[0].mxu0
        %v1945 = vadd.f32 0.0, %v1944
        %v1946 = vpop.f32.mrb[0].mxu0
        %1947 = vmatprep.mubr.bf16.mxu0 0
        %1948 = vmatmul.mubr.bf16.gmra.mrb[0].mxu0 %v1852
        %v1949 = vpop.f32.mrb[0].mxu0
        %v1950 = vadd.f32 0.0, %v1949
        %v1951 = vpop.f32.mrb[0].mxu0
        %v1952 = vpop.f32.mrb[0].mxu0
        %v1953 = vadd.f32 0.0, %v1952
        %v1954 = vpop.f32.mrb[0].mxu0
        %1955 = vmatprep.mubr.bf16.mxu0 0
        %1956 = vmatmul.mubr.bf16.gmra.mrb[0].mxu0 %v1853
        %v1957 = vpop.f32.mrb[0].mxu0
        %v1958 = vadd.f32 0.0, %v1957
        %v1959 = vpop.f32.mrb[0].mxu0
        %v1960 = vpop.f32.mrb[0].mxu0
        %v1961 = vadd.f32 0.0, %v1960
        %v1962 = vpop.f32.mrb[0].mxu0
        %1963 = vmatprep.mubr.bf16.mxu0 0
        %1964 = vmatmul.mubr.bf16.gmra.mrb[0].mxu0 %v1854
        %v1965 = vpop.f32.mrb[0].mxu0
        %v1966 = vadd.f32 0.0, %v1965
        %v1967 = vpop.f32.mrb[0].mxu0
        %v1968 = vpop.f32.mrb[0].mxu0
        %v1969 = vadd.f32 0.0, %v1968
        %v1970 = vpop.f32.mrb[0].mxu0
        %1971 = vdwg.mxu0
        %v1988 = vunpack.c.l.b16 %v466
        %v1989 = vunpack.c.l.b16 %v467
        %v1990 = vunpack.c.l.b16 %v468
        %v1991 = vunpack.c.l.b16 %v469
        %v1992 = vunpack.c.l.b16 %v470
        %v1993 = vunpack.c.l.b16 %v471
        %v1994 = vunpack.c.l.b16 %v472
        %v1995 = vunpack.c.l.b16 %v473
        %v1996 = vunpack.c.l.b16 %v474
        %v1997 = vunpack.c.l.b16 %v475
        %v1998 = vunpack.c.l.b16 %v476
        %v1999 = vunpack.c.l.b16 %v477
        %v2000 = vunpack.c.l.b16 %v478
        %v2001 = vunpack.c.l.b16 %v479
        %v2002 = vunpack.c.l.b16 %v480
        %v2003 = vunpack.c.l.b16 %v481
        %v2004 = vpack.c.b16 %v1989, %v1988
        %v2005 = vpack.c.b16 %v1991, %v1990
        %v2006 = vpack.c.b16 %v1993, %v1992
        %v2007 = vpack.c.b16 %v1995, %v1994
        %v2008 = vpack.c.b16 %v1997, %v1996
        %v2009 = vpack.c.b16 %v1999, %v1998
        %v2010 = vpack.c.b16 %v2001, %v2000
        %v2011 = vpack.c.b16 %v2003, %v2002
        %2020 = vmatprep.subr.bf16.mxu0 0
        %2021 = vmatpush1.bf16.msra.mxu0 %v2004
        %2022 = vmatprep.subr.bf16.mxu0 0
        %2023 = vmatpush1.bf16.msra.mxu0 %v2005
        %2024 = vmatprep.subr.bf16.mxu0 0
        %2025 = vmatpush1.bf16.msra.mxu0 %v2006
        %2026 = vmatprep.subr.bf16.mxu0 0
        %2027 = vmatpush1.bf16.msra.mxu0 %v2007
        %2028 = vmatprep.subr.bf16.mxu0 0
        %2029 = vmatpush1.bf16.msra.mxu0 %v2008
        %2030 = vmatprep.subr.bf16.mxu0 0
        %2031 = vmatpush1.bf16.msra.mxu0 %v2009
        %2032 = vmatprep.subr.bf16.mxu0 0
        %2033 = vmatpush1.bf16.msra.mxu0 %v2010
        %2034 = vmatprep.subr.bf16.mxu0 0
        %2035 = vmatpush1.bf16.msra.mxu0 %v2011
        %2036 = vmatprep.subr.bf16.mxu0 0
        %2037 = vmatpush1.bf16.msra.mxu0 0
        %2038 = vmatprep.subr.bf16.mxu0 0
        %2039 = vmatpush1.bf16.msra.mxu0 0
        %2040 = vmatprep.subr.bf16.mxu0 0
        %2041 = vmatpush1.bf16.msra.mxu0 0
        %2042 = vmatprep.subr.bf16.mxu0 0
        %2043 = vmatpush1.bf16.msra.mxu0 0
        %2044 = vmatprep.subr.bf16.mxu0 0
        %2045 = vmatpush1.bf16.msra.mxu0 0
        %2046 = vmatprep.subr.bf16.mxu0 0
        %2047 = vmatpush1.bf16.msra.mxu0 0
        %2048 = vmatprep.subr.bf16.mxu0 0
        %2049 = vmatpush1.bf16.msra.mxu0 0
        %2050 = vmatprep.subr.bf16.mxu0 0
        %2051 = vmatpush1.bf16.msra.mxu0 0
        %2052 = vmatprep.mubr.bf16.mxu0 0
        %2053 = vmatmul.mubr.bf16.gmra.mrb[0].mxu0 %v1855
        %v2054 = vpop.f32.mrb[0].mxu0
        %v2055 = vadd.f32 0.0, %v2054
        %v2056 = vpop.f32.mrb[0].mxu0
        %v2057 = vpop.f32.mrb[0].mxu0
        %v2058 = vadd.f32 0.0, %v2057
        %v2059 = vpop.f32.mrb[0].mxu0
        %2060 = vmatprep.mubr.bf16.mxu0 0
        %2061 = vmatmul.mubr.bf16.gmra.mrb[0].mxu0 %v1856
        %v2062 = vpop.f32.mrb[0].mxu0
        %v2063 = vadd.f32 0.0, %v2062
        %v2064 = vpop.f32.mrb[0].mxu0
        %v2065 = vpop.f32.mrb[0].mxu0
        %v2066 = vadd.f32 0.0, %v2065
        %v2067 = vpop.f32.mrb[0].mxu0
        %2068 = vmatprep.mubr.bf16.mxu0 0
        %2069 = vmatmul.mubr.bf16.gmra.mrb[0].mxu0 %v1857
        %v2070 = vpop.f32.mrb[0].mxu0
        %v2071 = vadd.f32 0.0, %v2070
        %v2072 = vpop.f32.mrb[0].mxu0
        %v2073 = vpop.f32.mrb[0].mxu0
        %v2074 = vadd.f32 0.0, %v2073
        %v2075 = vpop.f32.mrb[0].mxu0
        %2076 = vmatprep.mubr.bf16.mxu0 0
        %2077 = vmatmul.mubr.bf16.gmra.mrb[0].mxu0 %v1858
        %v2078 = vpop.f32.mrb[0].mxu0
        %v2079 = vadd.f32 0.0, %v2078
        %v2080 = vpop.f32.mrb[0].mxu0
        %v2081 = vpop.f32.mrb[0].mxu0
        %v2082 = vadd.f32 0.0, %v2081
        %v2083 = vpop.f32.mrb[0].mxu0
        %2084 = vdwg.mxu0
        %v2085 = vadd.bf16 %v1851, %v1855
        %v2086 = vadd.bf16 %v1852, %v1856
        %v2087 = vadd.bf16 %v1853, %v1857
        %v2088 = vadd.bf16 %v1854, %v1858
        %v2105 = vunpack.c.l.b16 %v483
        %v2106 = vunpack.c.l.b16 %v484
        %v2107 = vunpack.c.l.b16 %v485
        %v2108 = vunpack.c.l.b16 %v486
        %v2109 = vunpack.c.l.b16 %v487
        %v2110 = vunpack.c.l.b16 %v488
        %v2111 = vunpack.c.l.b16 %v489
        %v2112 = vunpack.c.l.b16 %v490
        %v2113 = vunpack.c.l.b16 %v491
        %v2114 = vunpack.c.l.b16 %v492
        %v2115 = vunpack.c.l.b16 %v493
        %v2116 = vunpack.c.l.b16 %v494
        %v2117 = vunpack.c.l.b16 %v495
        %v2118 = vunpack.c.l.b16 %v496
        %v2119 = vunpack.c.l.b16 %v497
        %v2120 = vunpack.c.l.b16 %v498
        %v2121 = vpack.c.b16 %v2106, %v2105
        %v2122 = vpack.c.b16 %v2108, %v2107
        %v2123 = vpack.c.b16 %v2110, %v2109
        %v2124 = vpack.c.b16 %v2112, %v2111
        %v2125 = vpack.c.b16 %v2114, %v2113
        %v2126 = vpack.c.b16 %v2116, %v2115
        %v2127 = vpack.c.b16 %v2118, %v2117
        %v2128 = vpack.c.b16 %v2120, %v2119
        %2137 = vmatprep.subr.bf16.mxu0 0
        %2138 = vmatpush1.bf16.msra.mxu0 %v2121
        %2139 = vmatprep.subr.bf16.mxu0 0
        %2140 = vmatpush1.bf16.msra.mxu0 %v2122
        %2141 = vmatprep.subr.bf16.mxu0 0
        %2142 = vmatpush1.bf16.msra.mxu0 %v2123
        %2143 = vmatprep.subr.bf16.mxu0 0
        %2144 = vmatpush1.bf16.msra.mxu0 %v2124
        %2145 = vmatprep.subr.bf16.mxu0 0
        %2146 = vmatpush1.bf16.msra.mxu0 %v2125
        %2147 = vmatprep.subr.bf16.mxu0 0
        %2148 = vmatpush1.bf16.msra.mxu0 %v2126
        %2149 = vmatprep.subr.bf16.mxu0 0
        %2150 = vmatpush1.bf16.msra.mxu0 %v2127
        %2151 = vmatprep.subr.bf16.mxu0 0
        %2152 = vmatpush1.bf16.msra.mxu0 %v2128
        %2153 = vmatprep.subr.bf16.mxu0 0
        %2154 = vmatpush1.bf16.msra.mxu0 0
        %2155 = vmatprep.subr.bf16.mxu0 0
        %2156 = vmatpush1.bf16.msra.mxu0 0
        %2157 = vmatprep.subr.bf16.mxu0 0
        %2158 = vmatpush1.bf16.msra.mxu0 0
        %2159 = vmatprep.subr.bf16.mxu0 0
        %2160 = vmatpush1.bf16.msra.mxu0 0
        %2161 = vmatprep.subr.bf16.mxu0 0
        %2162 = vmatpush1.bf16.msra.mxu0 0
        %2163 = vmatprep.subr.bf16.mxu0 0
        %2164 = vmatpush1.bf16.msra.mxu0 0
        %2165 = vmatprep.subr.bf16.mxu0 0
        %2166 = vmatpush1.bf16.msra.mxu0 0
        %2167 = vmatprep.subr.bf16.mxu0 0
        %2168 = vmatpush1.bf16.msra.mxu0 0
        %2169 = vmatprep.mubr.bf16.mxu0 0
        %2170 = vmatmul.mubr.bf16.gmra.mrb[0].mxu0 %v2085
        %v2171 = vpop.f32.mrb[0].mxu0
        %v2172 = vadd.f32 0.0, %v2171
        %v2173 = vpop.f32.mrb[0].mxu0
        %v2174 = vpop.f32.mrb[0].mxu0
        %v2175 = vadd.f32 0.0, %v2174
        %v2176 = vpop.f32.mrb[0].mxu0
        %2177 = vmatprep.mubr.bf16.mxu0 0
        %2178 = vmatmul.mubr.bf16.gmra.mrb[0].mxu0 %v2086
        %v2179 = vpop.f32.mrb[0].mxu0
        %v2180 = vadd.f32 0.0, %v2179
        %v2181 = vpop.f32.mrb[0].mxu0
        %v2182 = vpop.f32.mrb[0].mxu0
        %v2183 = vadd.f32 0.0, %v2182
        %v2184 = vpop.f32.mrb[0].mxu0
        %2185 = vmatprep.mubr.bf16.mxu0 0
        %2186 = vmatmul.mubr.bf16.gmra.mrb[0].mxu0 %v2087
        %v2187 = vpop.f32.mrb[0].mxu0
        %v2188 = vadd.f32 0.0, %v2187
        %v2189 = vpop.f32.mrb[0].mxu0
        %v2190 = vpop.f32.mrb[0].mxu0
        %v2191 = vadd.f32 0.0, %v2190
        %v2192 = vpop.f32.mrb[0].mxu0
        %2193 = vmatprep.mubr.bf16.mxu0 0
        %2194 = vmatmul.mubr.bf16.gmra.mrb[0].mxu0 %v2088
        %v2195 = vpop.f32.mrb[0].mxu0
        %v2196 = vadd.f32 0.0, %v2195
        %v2197 = vpop.f32.mrb[0].mxu0
        %v2198 = vpop.f32.mrb[0].mxu0
        %v2199 = vadd.f32 0.0, %v2198
        %v2200 = vpop.f32.mrb[0].mxu0
        %2201 = vdwg.mxu0
        %v2202 = vsub.f32 %v1942, %v2055
        %v2203 = vsub.f32 %v1945, %v2058
        %v2204 = vsub.f32 %v1950, %v2063
        %v2205 = vsub.f32 %v1953, %v2066
        %v2206 = vsub.f32 %v1958, %v2071
        %v2207 = vsub.f32 %v1961, %v2074
        %v2208 = vsub.f32 %v1966, %v2079
        %v2209 = vsub.f32 %v1969, %v2082
        %v2210 = vsub.f32 %v2172, %v1942
        %v2211 = vsub.f32 %v2175, %v1945
        %v2212 = vsub.f32 %v2180, %v1950
        %v2213 = vsub.f32 %v2183, %v1953
        %v2214 = vsub.f32 %v2188, %v1958
        %v2215 = vsub.f32 %v2191, %v1961
        %v2216 = vsub.f32 %v2196, %v1966
        %v2217 = vsub.f32 %v2199, %v1969
        %v2218 = vsub.f32 %v2210, %v2055
        %v2219 = vsub.f32 %v2211, %v2058
        %v2220 = vsub.f32 %v2212, %v2063
        %v2221 = vsub.f32 %v2213, %v2066
        %v2222 = vsub.f32 %v2214, %v2071
        %v2223 = vsub.f32 %v2215, %v2074
        %v2224 = vsub.f32 %v2216, %v2079
        %v2225 = vsub.f32 %v2217, %v2082
        %2226 = vst [vmem:[%s367] sm:$0xff] %v2202
        %2227 = vst [vmem:[%s367 + $0x8] sm:$0xff] %v2203
        %2228 = vst [vmem:[%s367 + $0x10] sm:$0xff] %v2204
        %2229 = vst [vmem:[%s367 + $0x18] sm:$0xff] %v2205
        %2230 = vst [vmem:[%s367 + $0x20] sm:$0xff] %v2206
        %2231 = vst [vmem:[%s367 + $0x28] sm:$0xff] %v2207
        %2232 = vst [vmem:[%s367 + $0x30] sm:$0xff] %v2208
        %2233 = vst [vmem:[%s367 + $0x38] sm:$0xff] %v2209
        %2234 = vst [vmem:[%s984] sm:$0xff] %v2218
        %2235 = vst [vmem:[%s984 + $0x8] sm:$0xff] %v2219
        %2236 = vst [vmem:[%s984 + $0x10] sm:$0xff] %v2220
        %2237 = vst [vmem:[%s984 + $0x18] sm:$0xff] %v2221
        %2238 = vst [vmem:[%s984 + $0x20] sm:$0xff] %v2222
        %2239 = vst [vmem:[%s984 + $0x28] sm:$0xff] %v2223
        %2240 = vst [vmem:[%s984 + $0x30] sm:$0xff] %v2224
        %2241 = vst [vmem:[%s984 + $0x38] sm:$0xff] %v2225
        %s2242 = sand.u32 %s165, 1
        %s2243 = scalar_lea.sflag [#allocation4], %s2242
        %s2244 = sand.u32 %s165, 1
        %s2245 = smul.addr %s2244, 128
        %s2246 = scalar_lea.vmem [#allocation13], %s2245
        // Predicated region
        $region69: #{tpu_custom_call.1} parent=43 // pred_check
          %p2247 = pneg %p175
        $region70: #{tpu_custom_call.1} parent=43 // pred_check_branch
          %2249 = sbr.rel (%p2247) target = $region72
        $region71: #{tpu_custom_call.1} parent=43 // pred_region
          #allocation17 [shape = 'u32[6]{0}', space=smem, size = 0x18, scoped, tag = 'DMA stride descriptor']
          %s2250 = smul.u32 8, %s26
          %s2252 = ssub.s32 2048, 2048
          %2253 = vsyncadd %s2243, %s2252
          %s2254 = smul.addr %s2250, 128
          %s2255 = scalar_lea.hbm %s6, %s2254
          %s2257 = sshll.u32 1, 14
          %s2258 = sxor.u32 4294967295, %s2257
          %s2261 = sshll.u32 7, 18
          %s2262 = sxor.u32 4294967295, %s2261
          %s2263 = sand.u32 0, %s2262
          %s2265 = sor.u32 %s2263, 0
          %s2267 = sshll.u32 3, 24
          %s2268 = sxor.u32 4294967295, %s2267
          %s2269 = sand.u32 %s2265, %s2268
          %s2271 = sor.u32 %s2269, 0
          %s2272 = sshll.u32 %s2246, 4
          %s2273 = int_to_ptr.vmem [resolvable:$true] %s2272
          %2279 = sst [smem:[#allocation17]] 1024
          %s2280 = scalar_lea.smem [#allocation17], 1
          %2281 = sst [smem:[%s2280]] 4096
          %s2282 = scalar_lea.smem [#allocation17], 2
          %2283 = sst [smem:[%s2282]] 8
          %s2284 = scalar_lea.smem [#allocation17], 3
          %2285 = sst [smem:[%s2284]] 128
          %s2286 = scalar_lea.smem [#allocation17], 4
          %2287 = sst [smem:[%s2286]] 128
          %s2288 = scalar_lea.smem [#allocation17], 5
          %2289 = sst [smem:[%s2288]] 8
          %2291 = dma.general %s2273, 2048, %s2255, %s2243, [#allocation16], [#allocation17], %s2271, 0
        $region72: #{tpu_custom_call.1} parent=43 // pred_fallthru
          _
      $region44: #{tpu_custom_call.1} parent=5 // pred_fallthru
        _
      %p2292 = scmp.le.s32.totalorder 2, %s21
      // Predicated region
      $region73: #{tpu_custom_call.1} parent=5 // pred_check
        %p2293 = pneg %p2292
      $region74: #{tpu_custom_call.1} parent=5 // pred_check_branch
        %2295 = sbr.rel (%p2293) target = $region76
      $region75: #{tpu_custom_call.1} parent=5 // pred_region
        %s2296 = ssub.s32 %s21, 2
        // Predicated region
        $region77: #{tpu_custom_call.1} parent=75 // pred_check
          %p2297 = pneg %p181
        $region78: #{tpu_custom_call.1} parent=75 // pred_check_branch
          %2299 = sbr.rel (%p2297) target = $region80
        $region79: #{tpu_custom_call.1} parent=75 // pred_region
          %s2300 = sand.u32 %s166, 1
          %s2301 = scalar_lea.sflag [#allocation4], %s2300
          %s2302 = sand.u32 %s166, 1
          %s2303 = smul.addr %s2302, 128
          %s2304 = scalar_lea.vmem [#allocation13], %s2303
          %2305 = dma.done %s2301, 2048
        $region80: #{tpu_custom_call.1} parent=75 // pred_fallthru
          _
      $region76: #{tpu_custom_call.1} parent=5 // pred_fallthru
        _
    $region6: #{tpu_custom_call.1} parent=1 // loop_footer
      %s25 = sadd.s32 1, %s21
    $region7: #{tpu_custom_call.1} parent=1 // loop_footer_branch
      %20 = sbr.rel target = $region3
    $region8: #{tpu_custom_call.1} parent=1 // loop_exit
      _
    %2306 = vsyncpa [#allocation3], 1
    %s2307 = scalar_lea.sflag [#allocation3], 1
    %2308 = vsyncpa %s2307, 1
    %2309 = vsyncpa [#allocation6], 1
    %2310 = vsyncpa [#allocation9], 1
    %2311 = vsyncpa [#allocation12], 1
    %2312 = vsyncpa [#allocation4], 1
    %s2313 = scalar_lea.sflag [#allocation4], 1
    %2314 = vsyncpa %s2313, 1

</llo_original>
